<compile_context>
chip_gen: v5e
topology: v5e:2x2
jax: 0.10.0
libtpu: 0.0.40
codegen_flags: <defaults>
</compile_context>

<pallas_src>
import functools
import math

import jax
import jax.numpy as jnp
from jax.experimental import pallas as pl
from jax.experimental.pallas import tpu as pltpu

EPS = 1e-5  # PyTorch LayerNorm default eps


def _layer_norm(x, g, b):
    mu = jnp.mean(x, axis=-1, keepdims=True)
    var = jnp.mean(jnp.square(x - mu), axis=-1, keepdims=True)
    return (x - mu) * jax.lax.rsqrt(var + EPS) * g + b


def _expert_fused_kernel(
        x_in_ref,
        ln1_g, ln1_b,
        wq, bq, wk, bk, wv, bv,
        wo, bo,
        gh, ga, gb,
        an_g, an_b,
        ln2_g, ln2_b,
        w1, b1, w2, b2,
        gw_fin, gb_fin, tag,
        o_ref,
        x_scr,
        *, nhead):
    """All Expert layers + final gate for one batch tile; grid axis 1 = layer."""
    l = pl.program_id(1)
    n_layers = pl.num_programs(1)

    # Load the input activations into the resident scratch at the first layer.
    @pl.when(l == 0)
    def _():
        x_scr[...] = x_in_ref[...]

    Bt, S, E = x_scr.shape
    hd = E // nhead
    scale = 1.0 / math.sqrt(hd)

    # Work on a 2-D (Bt*S, E) view for all dense matmuls (cheap leading-dim merge).
    x2 = x_scr[...].reshape(Bt * S, E)

    # ---- GatedAttention(norm1(x)) ----
    h2 = _layer_norm(x2, ln1_g[0], ln1_b[0])

    # Pre-split, pre-transposed projections: plain x @ W, no '.T', no weight slicing.
    # (On v6e/v7x: cast h2 / weights to bf16 here, keep preferred_element_type=f32,
    #  if the accuracy budget allows.)
    q2 = jnp.dot(h2, wq[0], preferred_element_type=jnp.float32) + bq[0]
    k2 = jnp.dot(h2, wk[0], preferred_element_type=jnp.float32) + bk[0]
    v2 = jnp.dot(h2, wv[0], preferred_element_type=jnp.float32) + bv[0]
    q = q2.reshape(Bt, S, E)
    k = k2.reshape(Bt, S, E)
    v = v2.reshape(Bt, S, E)

    # Per-head attention, batched over the batch tile; heads concatenated once
    # and folded back through a single (Bt*S,E)@(E,E) output projection.
    head_outs = []
    for hi in range(nhead):
        sl = slice(hi * hd, (hi + 1) * hd)
        qh = q[:, :, sl] * scale
        kh = k[:, :, sl]
        vh = v[:, :, sl]
        s = jnp.einsum('bqd,bkd->bqk', qh, kh,
                       preferred_element_type=jnp.float32)        # (Bt,S,S)
        s = s - jnp.max(s, axis=-1, keepdims=True)
        p = jnp.exp(s)
        p = p * pl.reciprocal(jnp.sum(p, axis=-1, keepdims=True), approx=True)
        head_outs.append(jnp.einsum('bqk,bkd->bqd', p, vh,
                                    preferred_element_type=jnp.float32))
    attn_cat2 = jnp.concatenate(head_outs, axis=-1).reshape(Bt * S, E)

    attn2 = jnp.dot(attn_cat2, wo[0], preferred_element_type=jnp.float32) + bo[0]

    # sigmoid(gate(cat([h, attn_out], -1))) * attn_out, with the concat folded
    # into two matmuls against the pre-split / pre-transposed gate-weight halves.
    gate_pre = (jnp.dot(h2, gh[0], preferred_element_type=jnp.float32)
                + jnp.dot(attn2, ga[0], preferred_element_type=jnp.float32)
                + gb[0])
    gated = jax.nn.sigmoid(gate_pre) * attn2
    x2 = x2 + _layer_norm(h2 + gated, an_g[0], an_b[0])   # dropout = identity (eval)

    # ---- FFN(norm2(x)) ----
    h2b = _layer_norm(x2, ln2_g[0], ln2_b[0])
    f = jnp.dot(h2b, w1[0], preferred_element_type=jnp.float32) + b1[0]
    # TODO(synk): torch nn.GELU() is exact (erf); tanh approximation used for
    # robust Mosaic lowering (difference is ~1e-3 absolute, within budget).
    f = jax.nn.gelu(f, approximate=True)
    f = jnp.dot(f, w2[0], preferred_element_type=jnp.float32) + b2[0]
    x2 = x2 + f

    x_scr[...] = x2.reshape(Bt, S, E)

    # ---- final gating + specialization tag, fused into the last layer step ----
    @pl.when(l == n_layers - 1)
    def _():
        xf = x_scr[...]
        mean = jnp.mean(xf, axis=1, keepdims=True)                    # (Bt,1,E)
        gv = jax.nn.sigmoid(
            jnp.sum(mean * gw_fin[...], axis=-1, keepdims=True) + gb_fin[...])
        o_ref[...] = gv * xf + (1.0 - gv) * x_in_ref[...] + tag[...]


_WEIGHT_ORDER = ('ln1_g', 'ln1_b', 'wq', 'bq', 'wk', 'bk', 'wv', 'bv',
                 'wo', 'bo', 'gh', 'ga', 'gb', 'an_g', 'an_b',
                 'ln2_g', 'ln2_b', 'w1', 'b1', 'w2', 'b2')


def _pack_params(layer_params, E):
    """Split Wq/Wk/Wv and the gate halves, transpose everything to `x @ W`
    layout, and stack along a leading layer axis (streamed one layer per step)."""
    def stack(fn):
        return jnp.stack([fn(p) for p in layer_params], axis=0)

    return dict(
        ln1_g=stack(lambda p: p['ln1_g']),                 # (L,1,E)
        ln1_b=stack(lambda p: p['ln1_b']),
        wq=stack(lambda p: p['in_w'][:E].T),               # (L,E,E)
        bq=stack(lambda p: p['in_b'][:, :E]),              # (L,1,E)
        wk=stack(lambda p: p['in_w'][E:2 * E].T),
        bk=stack(lambda p: p['in_b'][:, E:2 * E]),
        wv=stack(lambda p: p['in_w'][2 * E:].T),
        bv=stack(lambda p: p['in_b'][:, 2 * E:]),
        wo=stack(lambda p: p['out_w'].T),
        bo=stack(lambda p: p['out_b']),
        gh=stack(lambda p: p['gate_w'][:, :E].T),          # (L,E,E)
        ga=stack(lambda p: p['gate_w'][:, E:].T),          # (L,E,E)
        gb=stack(lambda p: p['gate_b']),
        an_g=stack(lambda p: p['an_g']),
        an_b=stack(lambda p: p['an_b']),
        ln2_g=stack(lambda p: p['ln2_g']),
        ln2_b=stack(lambda p: p['ln2_b']),
        w1=stack(lambda p: p['w1'].T),                     # (L,E,dim_ff)
        b1=stack(lambda p: p['b1']),
        w2=stack(lambda p: p['w2'].T),                     # (L,dim_ff,E)
        b2=stack(lambda p: p['b2']),
    )


def expert_forward(x, layer_params, gate_w, gate_b, tag, nhead, block_b=None):
    B, S, E = x.shape
    L = len(layer_params)
    assert E % nhead == 0, "embed_dim must be divisible by nhead"
    bt = B if block_b is None else block_b
    assert B % bt == 0

    packed = _pack_params(layer_params, E)
    weights = [packed[k] for k in _WEIGHT_ORDER]

    def layer_weight_spec(w):
        nd = w.ndim
        return pl.BlockSpec((1,) + w.shape[1:],
                            lambda b, l, _nd=nd: (l,) + (0,) * (_nd - 1))

    def const_spec(w):
        nd = w.ndim
        return pl.BlockSpec(w.shape, lambda b, l, _nd=nd: (0,) * _nd)

    in_specs = ([pl.BlockSpec((bt, S, E), lambda b, l: (b, 0, 0))]
                + [layer_weight_spec(w) for w in weights]
                + [const_spec(gate_w), const_spec(gate_b), const_spec(tag)])

    return pl.pallas_call(
        functools.partial(_expert_fused_kernel, nhead=nhead),
        out_shape=jax.ShapeDtypeStruct((B, S, E), jnp.float32),
        grid=(B // bt, L),
        in_specs=in_specs,
        out_specs=pl.BlockSpec((bt, S, E), lambda b, l: (b, 0, 0)),
        scratch_shapes=[pltpu.VMEM((bt, S, E), jnp.float32)],
        compiler_params=pltpu.CompilerParams(
            dimension_semantics=("parallel", "arbitrary"),
            # explicit budget (fits v7x's 64 MiB physical VMEM with headroom)
            vmem_limit_bytes=48 * 1024 * 1024,
        ),
    )(x, *weights, gate_w, gate_b, tag)


# --------------------- pure-JAX reference (for correctness) ---------------------

def _ref_forward(x, layer_params, gate_w, gate_b, tag, nhead):
    x_input = x
    B, S, E = x.shape
    hd = E // nhead
    for p in layer_params:
        h = _layer_norm(x, p['ln1_g'][0], p['ln1_b'][0])
        qkv = h @ p['in_w'].T + p['in_b'][0]
        q, k, v = qkv[..., :E], qkv[..., E:2 * E], qkv[..., 2 * E:]
        qh = q.reshape(B, S, nhead, hd).transpose(0, 2, 1, 3) / math.sqrt(hd)
        kh = k.reshape(B, S, nhead, hd).transpose(0, 2, 1, 3)
        vh = v.reshape(B, S, nhead, hd).transpose(0, 2, 1, 3)
        sc = jnp.einsum('bhqd,bhkd->bhqk', qh, kh)
        pr = jax.nn.softmax(sc, axis=-1)
        oh = jnp.einsum('bhqk,bhkd->bhqd', pr, vh)
        attn_out = oh.transpose(0, 2, 1, 3).reshape(B, S, E) @ p['out_w'].T + p['out_b'][0]
        gate_pre = jnp.concatenate([h, attn_out], -1) @ p['gate_w'].T + p['gate_b'][0]
        gated = jax.nn.sigmoid(gate_pre) * attn_out
        x = x + _layer_norm(h + gated, p['an_g'][0], p['an_b'][0])
        h2 = _layer_norm(x, p['ln2_g'][0], p['ln2_b'][0])
        f = jax.nn.gelu(h2 @ p['w1'].T + p['b1'][0], approximate=True)
        x = x + f @ p['w2'].T + p['b2'][0]
    gate_val = jax.nn.sigmoid(jnp.mean(x, axis=1, keepdims=True) @ gate_w.T + gate_b[0])
    return gate_val * x + (1.0 - gate_val) * x_input + tag[None]


# --------------------------- parameter init ---------------------------

def init_params(key, E, nhead, dim_ff, num_layers):
    layers = []
    for _ in range(num_layers):
        key, k0, k1, k2, k3, k4 = jax.random.split(key, 6)
        layers.append(dict(
            ln1_g=jnp.ones((1, E), jnp.float32), ln1_b=jnp.zeros((1, E), jnp.float32),
            in_w=(jax.random.normal(k0, (3 * E, E)) * 0.02).astype(jnp.float32),
            in_b=jnp.zeros((1, 3 * E), jnp.float32),
            out_w=(jax.random.normal(k1, (E, E)) * 0.02).astype(jnp.float32),
            out_b=jnp.zeros((1, E), jnp.float32),
            gate_w=(jax.random.normal(k2, (E, 2 * E)) * 0.02).astype(jnp.float32),
            gate_b=jnp.zeros((1, E), jnp.float32),
            an_g=jnp.ones((1, E), jnp.float32), an_b=jnp.zeros((1, E), jnp.float32),
            ln2_g=jnp.ones((1, E), jnp.float32), ln2_b=jnp.zeros((1, E), jnp.float32),
            w1=(jax.random.normal(k3, (dim_ff, E)) * 0.02).astype(jnp.float32),
            b1=jnp.zeros((1, dim_ff), jnp.float32),
            w2=(jax.random.normal(k4, (E, dim_ff)) * 0.02).astype(jnp.float32),
            b2=jnp.zeros((1, E), jnp.float32),
        ))
    key, kt, kg = jax.random.split(key, 3)
    tag = (jax.random.normal(kt, (1, E)) * 0.01).astype(jnp.float32)
    gate_w = (jax.random.normal(kg, (1, E)) * 0.02).astype(jnp.float32)
    gate_b = jnp.zeros((1, 1), jnp.float32)
    return layers, gate_w, gate_b, tag


if __name__ == "__main__":
    B, S, E = 2, 8, 32
    NHEAD, DIM_FF, NUM_LAYERS = 4, 64, 4

    key = jax.random.PRNGKey(0)
    key, kx = jax.random.split(key)
    x = jax.random.normal(kx, (B, S, E), jnp.float32)

    layer_params, gate_w, gate_b, tag = init_params(key, E, NHEAD, DIM_FF, NUM_LAYERS)

    out = expert_forward(x, layer_params, gate_w, gate_b, tag, NHEAD)
    out = jax.block_until_ready(out)

    ref = jax.block_until_ready(_ref_forward(x, layer_params, gate_w, gate_b, tag, NHEAD))
    assert out.shape == (B, S, E)
    assert jnp.allclose(out, ref, rtol=2e-3, atol=2e-3), float(jnp.max(jnp.abs(out - ref)))

    print("KERNEL_OK")
</pallas_src>

<mosaic_0001>
module attributes {stable_mosaic.version = 11 : i64} {
  func.func @_expert_fused_kernel(%arg0: i32, %arg1: i32, %arg2: memref<2x8x32xf32, #tpu.memory_space<vmem>>, %arg3: memref<1x1x32xf32, #tpu.memory_space<vmem>>, %arg4: memref<1x1x32xf32, #tpu.memory_space<vmem>>, %arg5: memref<1x32x32xf32, #tpu.memory_space<vmem>>, %arg6: memref<1x1x32xf32, #tpu.memory_space<vmem>>, %arg7: memref<1x32x32xf32, #tpu.memory_space<vmem>>, %arg8: memref<1x1x32xf32, #tpu.memory_space<vmem>>, %arg9: memref<1x32x32xf32, #tpu.memory_space<vmem>>, %arg10: memref<1x1x32xf32, #tpu.memory_space<vmem>>, %arg11: memref<1x32x32xf32, #tpu.memory_space<vmem>>, %arg12: memref<1x1x32xf32, #tpu.memory_space<vmem>>, %arg13: memref<1x32x32xf32, #tpu.memory_space<vmem>>, %arg14: memref<1x32x32xf32, #tpu.memory_space<vmem>>, %arg15: memref<1x1x32xf32, #tpu.memory_space<vmem>>, %arg16: memref<1x1x32xf32, #tpu.memory_space<vmem>>, %arg17: memref<1x1x32xf32, #tpu.memory_space<vmem>>, %arg18: memref<1x1x32xf32, #tpu.memory_space<vmem>>, %arg19: memref<1x1x32xf32, #tpu.memory_space<vmem>>, %arg20: memref<1x32x64xf32, #tpu.memory_space<vmem>>, %arg21: memref<1x1x64xf32, #tpu.memory_space<vmem>>, %arg22: memref<1x64x32xf32, #tpu.memory_space<vmem>>, %arg23: memref<1x1x32xf32, #tpu.memory_space<vmem>>, %arg24: memref<1x32xf32, #tpu.memory_space<vmem>>, %arg25: memref<1x1xf32, #tpu.memory_space<vmem>>, %arg26: memref<1x32xf32, #tpu.memory_space<vmem>>, %arg27: memref<2x8x32xf32, #tpu.memory_space<vmem>>, %arg28: memref<2x8x32xf32, #tpu.memory_space<vmem>>) attributes {dimension_semantics = [#tpu.dimension_semantics<parallel>, #tpu.dimension_semantics<arbitrary>], iteration_bounds = array<i64: 1, 4>, scalar_prefetch = 0 : i64, scratch_operands = 1 : i64, tpu.core_type = #tpu.core_type<tc>, window_params = [{transform_indices = @transform_0, window_bounds = array<i64: 2, 8, 32>}, {transform_indices = @transform_1, window_bounds = array<i64: 1, 1, 32>}, {transform_indices = @transform_2, window_bounds = array<i64: 1, 1, 32>}, {transform_indices = @transform_3, window_bounds = array<i64: 1, 32, 32>}, {transform_indices = @transform_4, window_bounds = array<i64: 1, 1, 32>}, {transform_indices = @transform_5, window_bounds = array<i64: 1, 32, 32>}, {transform_indices = @transform_6, window_bounds = array<i64: 1, 1, 32>}, {transform_indices = @transform_7, window_bounds = array<i64: 1, 32, 32>}, {transform_indices = @transform_8, window_bounds = array<i64: 1, 1, 32>}, {transform_indices = @transform_9, window_bounds = array<i64: 1, 32, 32>}, {transform_indices = @transform_10, window_bounds = array<i64: 1, 1, 32>}, {transform_indices = @transform_11, window_bounds = array<i64: 1, 32, 32>}, {transform_indices = @transform_12, window_bounds = array<i64: 1, 32, 32>}, {transform_indices = @transform_13, window_bounds = array<i64: 1, 1, 32>}, {transform_indices = @transform_14, window_bounds = array<i64: 1, 1, 32>}, {transform_indices = @transform_15, window_bounds = array<i64: 1, 1, 32>}, {transform_indices = @transform_16, window_bounds = array<i64: 1, 1, 32>}, {transform_indices = @transform_17, window_bounds = array<i64: 1, 1, 32>}, {transform_indices = @transform_18, window_bounds = array<i64: 1, 32, 64>}, {transform_indices = @transform_19, window_bounds = array<i64: 1, 1, 64>}, {transform_indices = @transform_20, window_bounds = array<i64: 1, 64, 32>}, {transform_indices = @transform_21, window_bounds = array<i64: 1, 1, 32>}, {pipeline_mode = #tpu.pipeline_mode<synchronous>, transform_indices = @transform_22, window_bounds = array<i64: 1, 32>}, {pipeline_mode = #tpu.pipeline_mode<synchronous>, transform_indices = @transform_23, window_bounds = array<i64: 1, 1>}, {pipeline_mode = #tpu.pipeline_mode<synchronous>, transform_indices = @transform_24, window_bounds = array<i64: 1, 32>}, {transform_indices = @transform_25, window_bounds = array<i64: 2, 8, 32>}]} {
    %c0_i32 = arith.constant 0 : i32
    %0 = arith.cmpi eq, %arg1, %c0_i32 : i32
    %1 = arith.extui %0 : i1 to i32
    %c0_i32_0 = arith.constant 0 : i32
    %2 = arith.cmpi ne, %1, %c0_i32_0 : i32
    scf.if %2 {
      %c0_117 = arith.constant 0 : index
      %c0_118 = arith.constant 0 : index
      %c0_119 = arith.constant 0 : index
      %236 = vector.load %arg2[%c0_117, %c0_118, %c0_119] : memref<2x8x32xf32, #tpu.memory_space<vmem>>, vector<2x8x32xf32>
      %c0_120 = arith.constant 0 : index
      %c0_121 = arith.constant 0 : index
      %c0_122 = arith.constant 0 : index
      %237 = vector.load %arg28[%c0_120, %c0_121, %c0_122] : memref<2x8x32xf32, #tpu.memory_space<vmem>>, vector<2x8x32xf32>
      tpu.vector_store %arg28[%c0_120, %c0_121, %c0_122], %236 {strides = array<i32>} : memref<2x8x32xf32, #tpu.memory_space<vmem>>, vector<2x8x32xf32>,
    } else {
    }
    %c0 = arith.constant 0 : index
    %c0_1 = arith.constant 0 : index
    %c0_2 = arith.constant 0 : index
    %3 = vector.load %arg28[%c0, %c0_1, %c0_2] : memref<2x8x32xf32, #tpu.memory_space<vmem>>, vector<2x8x32xf32>
    %4 = vector.shape_cast %3 : vector<2x8x32xf32> to vector<16x32xf32>
    %c0_3 = arith.constant 0 : index
    %c0_4 = arith.constant 0 : index
    %c0_5 = arith.constant 0 : index
    %5 = vector.load %arg3[%c0_3, %c0_4, %c0_5] : memref<1x1x32xf32, #tpu.memory_space<vmem>>, vector<1x1x32xf32>
    %6 = vector.shape_cast %5 : vector<1x1x32xf32> to vector<1x32xf32>
    %c0_6 = arith.constant 0 : index
    %c0_7 = arith.constant 0 : index
    %c0_8 = arith.constant 0 : index
    %7 = vector.load %arg4[%c0_6, %c0_7, %c0_8] : memref<1x1x32xf32, #tpu.memory_space<vmem>>, vector<1x1x32xf32>
    %8 = vector.shape_cast %7 : vector<1x1x32xf32> to vector<1x32xf32>
    %cst = arith.constant dense<0.000000e+00> : vector<16xf32>
    %9 = vector.multi_reduction <add>, %4, %cst [1] : vector<16x32xf32> to vector<16xf32>
    %10 = vector.shape_cast %9 : vector<16xf32> to vector<16x1xf32>
    %cst_9 = arith.constant 3.200000e+01 : f32
    %11 = vector.broadcast %cst_9 : f32 to vector<16x1xf32>
    %12 = arith.divf %10, %11 : vector<16x1xf32>
    %13 = vector.broadcast %12 : vector<16x1xf32> to vector<16x32xf32>
    %14 = arith.subf %4, %13 : vector<16x32xf32>
    %15 = arith.mulf %14, %14 : vector<16x32xf32>
    %cst_10 = arith.constant dense<0.000000e+00> : vector<16xf32>
    %16 = vector.multi_reduction <add>, %15, %cst_10 [1] : vector<16x32xf32> to vector<16xf32>
    %17 = vector.shape_cast %16 : vector<16xf32> to vector<16x1xf32>
    %cst_11 = arith.constant 3.200000e+01 : f32
    %18 = vector.broadcast %cst_11 : f32 to vector<16x1xf32>
    %19 = arith.divf %17, %18 : vector<16x1xf32>
    %20 = vector.broadcast %12 : vector<16x1xf32> to vector<16x32xf32>
    %21 = arith.subf %4, %20 : vector<16x32xf32>
    %cst_12 = arith.constant 9.99999974E-6 : f32
    %22 = vector.broadcast %cst_12 : f32 to vector<16x1xf32>
    %23 = arith.addf %19, %22 : vector<16x1xf32>
    %24 = math.rsqrt %23 : vector<16x1xf32>
    %25 = vector.broadcast %24 : vector<16x1xf32> to vector<16x32xf32>
    %26 = arith.mulf %21, %25 : vector<16x32xf32>
    %27 = vector.broadcast %6 : vector<1x32xf32> to vector<16x32xf32>
    %28 = arith.mulf %26, %27 : vector<16x32xf32>
    %29 = vector.broadcast %8 : vector<1x32xf32> to vector<16x32xf32>
    %30 = arith.addf %28, %29 : vector<16x32xf32>
    %c0_13 = arith.constant 0 : index
    %c0_14 = arith.constant 0 : index
    %c0_15 = arith.constant 0 : index
    %31 = vector.load %arg5[%c0_13, %c0_14, %c0_15] : memref<1x32x32xf32, #tpu.memory_space<vmem>>, vector<1x32x32xf32>
    %32 = vector.shape_cast %31 : vector<1x32x32xf32> to vector<32x32xf32>
    %cst_16 = arith.constant dense<0.000000e+00> : vector<16x32xf32>
    %33 = tpu.matmul %30, %32, %cst_16 {dimension_numbers = #tpu.dot_dimension_numbers<[1], [0], [0], [1], [0, 0, 1, 1], [], []>} : vector<16x32xf32>, vector<32x32xf32>, vector<16x32xf32> -> vector<16x32xf32>
    %c0_17 = arith.constant 0 : index
    %c0_18 = arith.constant 0 : index
    %c0_19 = arith.constant 0 : index
    %34 = vector.load %arg6[%c0_17, %c0_18, %c0_19] : memref<1x1x32xf32, #tpu.memory_space<vmem>>, vector<1x1x32xf32>
    %35 = vector.shape_cast %34 : vector<1x1x32xf32> to vector<1x32xf32>
    %36 = vector.broadcast %35 : vector<1x32xf32> to vector<16x32xf32>
    %37 = arith.addf %33, %36 : vector<16x32xf32>
    %c0_20 = arith.constant 0 : index
    %c0_21 = arith.constant 0 : index
    %c0_22 = arith.constant 0 : index
    %38 = vector.load %arg7[%c0_20, %c0_21, %c0_22] : memref<1x32x32xf32, #tpu.memory_space<vmem>>, vector<1x32x32xf32>
    %39 = vector.shape_cast %38 : vector<1x32x32xf32> to vector<32x32xf32>
    %cst_23 = arith.constant dense<0.000000e+00> : vector<16x32xf32>
    %40 = tpu.matmul %30, %39, %cst_23 {dimension_numbers = #tpu.dot_dimension_numbers<[1], [0], [0], [1], [0, 0, 1, 1], [], []>} : vector<16x32xf32>, vector<32x32xf32>, vector<16x32xf32> -> vector<16x32xf32>
    %c0_24 = arith.constant 0 : index
    %c0_25 = arith.constant 0 : index
    %c0_26 = arith.constant 0 : index
    %41 = vector.load %arg8[%c0_24, %c0_25, %c0_26] : memref<1x1x32xf32, #tpu.memory_space<vmem>>, vector<1x1x32xf32>
    %42 = vector.shape_cast %41 : vector<1x1x32xf32> to vector<1x32xf32>
    %43 = vector.broadcast %42 : vector<1x32xf32> to vector<16x32xf32>
    %44 = arith.addf %40, %43 : vector<16x32xf32>
    %c0_27 = arith.constant 0 : index
    %c0_28 = arith.constant 0 : index
    %c0_29 = arith.constant 0 : index
    %45 = vector.load %arg9[%c0_27, %c0_28, %c0_29] : memref<1x32x32xf32, #tpu.memory_space<vmem>>, vector<1x32x32xf32>
    %46 = vector.shape_cast %45 : vector<1x32x32xf32> to vector<32x32xf32>
    %cst_30 = arith.constant dense<0.000000e+00> : vector<16x32xf32>
    %47 = tpu.matmul %30, %46, %cst_30 {dimension_numbers = #tpu.dot_dimension_numbers<[1], [0], [0], [1], [0, 0, 1, 1], [], []>} : vector<16x32xf32>, vector<32x32xf32>, vector<16x32xf32> -> vector<16x32xf32>
    %c0_31 = arith.constant 0 : index
    %c0_32 = arith.constant 0 : index
    %c0_33 = arith.constant 0 : index
    %48 = vector.load %arg10[%c0_31, %c0_32, %c0_33] : memref<1x1x32xf32, #tpu.memory_space<vmem>>, vector<1x1x32xf32>
    %49 = vector.shape_cast %48 : vector<1x1x32xf32> to vector<1x32xf32>
    %50 = vector.broadcast %49 : vector<1x32xf32> to vector<16x32xf32>
    %51 = arith.addf %47, %50 : vector<16x32xf32>
    %52 = vector.shape_cast %37 : vector<16x32xf32> to vector<2x8x32xf32>
    %53 = vector.shape_cast %44 : vector<16x32xf32> to vector<2x8x32xf32>
    %54 = vector.shape_cast %51 : vector<16x32xf32> to vector<2x8x32xf32>
    %55 = vector.extract_strided_slice %52 {offsets = [0, 0, 0], sizes = [2, 8, 8], strides = [1, 1, 1]} : vector<2x8x32xf32> to vector<2x8x8xf32>
    %cst_34 = arith.constant 0.353553385 : f32
    %56 = vector.broadcast %cst_34 : f32 to vector<2x8x8xf32>
    %57 = arith.mulf %55, %56 : vector<2x8x8xf32>
    %58 = vector.extract_strided_slice %53 {offsets = [0, 0, 0], sizes = [2, 8, 8], strides = [1, 1, 1]} : vector<2x8x32xf32> to vector<2x8x8xf32>
    %59 = vector.extract_strided_slice %54 {offsets = [0, 0, 0], sizes = [2, 8, 8], strides = [1, 1, 1]} : vector<2x8x32xf32> to vector<2x8x8xf32>
    "tpu.trace_start"() <{level = 10 : i32, message = "bqd,bkd->bqk"}> : () -> ()
    %cst_35 = arith.constant dense<0.000000e+00> : vector<2x8x8xf32>
    %60 = tpu.matmul %57, %58, %cst_35 {dimension_numbers = #tpu.dot_dimension_numbers<[2], [2], [1], [1], [0, 0, 0, 1, 1, 1], [0], [0]>} : vector<2x8x8xf32>, vector<2x8x8xf32>, vector<2x8x8xf32> -> vector<2x8x8xf32>
    "tpu.trace_stop"() : () -> ()
    %cst_36 = arith.constant dense<0xFF800000> : vector<2x8xf32>
    %61 = vector.multi_reduction <maximumf>, %60, %cst_36 [2] : vector<2x8x8xf32> to vector<2x8xf32>
    %62 = vector.shape_cast %61 : vector<2x8xf32> to vector<2x8x1xf32>
    %63 = vector.broadcast %62 : vector<2x8x1xf32> to vector<2x8x8xf32>
    %64 = arith.subf %60, %63 : vector<2x8x8xf32>
    %65 = math.exp %64 : vector<2x8x8xf32>
    %cst_37 = arith.constant dense<0.000000e+00> : vector<2x8xf32>
    %66 = vector.multi_reduction <add>, %65, %cst_37 [2] : vector<2x8x8xf32> to vector<2x8xf32>
    %67 = vector.shape_cast %66 : vector<2x8xf32> to vector<2x8x1xf32>
    %68 = tpu.reciprocal %67 {approx = true} : vector<2x8x1xf32> -> vector<2x8x1xf32>
    %69 = vector.broadcast %68 : vector<2x8x1xf32> to vector<2x8x8xf32>
    %70 = arith.mulf %65, %69 : vector<2x8x8xf32>
    "tpu.trace_start"() <{level = 10 : i32, message = "bqk,bkd->bqd"}> : () -> ()
    %cst_38 = arith.constant dense<0.000000e+00> : vector<2x8x8xf32>
    %71 = tpu.matmul %70, %59, %cst_38 {dimension_numbers = #tpu.dot_dimension_numbers<[2], [1], [1], [2], [0, 0, 0, 1, 1, 2], [0], [0]>} : vector<2x8x8xf32>, vector<2x8x8xf32>, vector<2x8x8xf32> -> vector<2x8x8xf32>
    "tpu.trace_stop"() : () -> ()
    %72 = vector.extract_strided_slice %52 {offsets = [0, 0, 8], sizes = [2, 8, 8], strides = [1, 1, 1]} : vector<2x8x32xf32> to vector<2x8x8xf32>
    %cst_39 = arith.constant 0.353553385 : f32
    %73 = vector.broadcast %cst_39 : f32 to vector<2x8x8xf32>
    %74 = arith.mulf %72, %73 : vector<2x8x8xf32>
    %75 = vector.extract_strided_slice %53 {offsets = [0, 0, 8], sizes = [2, 8, 8], strides = [1, 1, 1]} : vector<2x8x32xf32> to vector<2x8x8xf32>
    %76 = vector.extract_strided_slice %54 {offsets = [0, 0, 8], sizes = [2, 8, 8], strides = [1, 1, 1]} : vector<2x8x32xf32> to vector<2x8x8xf32>
    "tpu.trace_start"() <{level = 10 : i32, message = "bqd,bkd->bqk"}> : () -> ()
    %cst_40 = arith.constant dense<0.000000e+00> : vector<2x8x8xf32>
    %77 = tpu.matmul %74, %75, %cst_40 {dimension_numbers = #tpu.dot_dimension_numbers<[2], [2], [1], [1], [0, 0, 0, 1, 1, 1], [0], [0]>} : vector<2x8x8xf32>, vector<2x8x8xf32>, vector<2x8x8xf32> -> vector<2x8x8xf32>
    "tpu.trace_stop"() : () -> ()
    %cst_41 = arith.constant dense<0xFF800000> : vector<2x8xf32>
    %78 = vector.multi_reduction <maximumf>, %77, %cst_41 [2] : vector<2x8x8xf32> to vector<2x8xf32>
    %79 = vector.shape_cast %78 : vector<2x8xf32> to vector<2x8x1xf32>
    %80 = vector.broadcast %79 : vector<2x8x1xf32> to vector<2x8x8xf32>
    %81 = arith.subf %77, %80 : vector<2x8x8xf32>
    %82 = math.exp %81 : vector<2x8x8xf32>
    %cst_42 = arith.constant dense<0.000000e+00> : vector<2x8xf32>
    %83 = vector.multi_reduction <add>, %82, %cst_42 [2] : vector<2x8x8xf32> to vector<2x8xf32>
    %84 = vector.shape_cast %83 : vector<2x8xf32> to vector<2x8x1xf32>
    %85 = tpu.reciprocal %84 {approx = true} : vector<2x8x1xf32> -> vector<2x8x1xf32>
    %86 = vector.broadcast %85 : vector<2x8x1xf32> to vector<2x8x8xf32>
    %87 = arith.mulf %82, %86 : vector<2x8x8xf32>
    "tpu.trace_start"() <{level = 10 : i32, message = "bqk,bkd->bqd"}> : () -> ()
    %cst_43 = arith.constant dense<0.000000e+00> : vector<2x8x8xf32>
    %88 = tpu.matmul %87, %76, %cst_43 {dimension_numbers = #tpu.dot_dimension_numbers<[2], [1], [1], [2], [0, 0, 0, 1, 1, 2], [0], [0]>} : vector<2x8x8xf32>, vector<2x8x8xf32>, vector<2x8x8xf32> -> vector<2x8x8xf32>
    "tpu.trace_stop"() : () -> ()
    %89 = vector.extract_strided_slice %52 {offsets = [0, 0, 16], sizes = [2, 8, 8], strides = [1, 1, 1]} : vector<2x8x32xf32> to vector<2x8x8xf32>
    %cst_44 = arith.constant 0.353553385 : f32
    %90 = vector.broadcast %cst_44 : f32 to vector<2x8x8xf32>
    %91 = arith.mulf %89, %90 : vector<2x8x8xf32>
    %92 = vector.extract_strided_slice %53 {offsets = [0, 0, 16], sizes = [2, 8, 8], strides = [1, 1, 1]} : vector<2x8x32xf32> to vector<2x8x8xf32>
    %93 = vector.extract_strided_slice %54 {offsets = [0, 0, 16], sizes = [2, 8, 8], strides = [1, 1, 1]} : vector<2x8x32xf32> to vector<2x8x8xf32>
    "tpu.trace_start"() <{level = 10 : i32, message = "bqd,bkd->bqk"}> : () -> ()
    %cst_45 = arith.constant dense<0.000000e+00> : vector<2x8x8xf32>
    %94 = tpu.matmul %91, %92, %cst_45 {dimension_numbers = #tpu.dot_dimension_numbers<[2], [2], [1], [1], [0, 0, 0, 1, 1, 1], [0], [0]>} : vector<2x8x8xf32>, vector<2x8x8xf32>, vector<2x8x8xf32> -> vector<2x8x8xf32>
    "tpu.trace_stop"() : () -> ()
    %cst_46 = arith.constant dense<0xFF800000> : vector<2x8xf32>
    %95 = vector.multi_reduction <maximumf>, %94, %cst_46 [2] : vector<2x8x8xf32> to vector<2x8xf32>
    %96 = vector.shape_cast %95 : vector<2x8xf32> to vector<2x8x1xf32>
    %97 = vector.broadcast %96 : vector<2x8x1xf32> to vector<2x8x8xf32>
    %98 = arith.subf %94, %97 : vector<2x8x8xf32>
    %99 = math.exp %98 : vector<2x8x8xf32>
    %cst_47 = arith.constant dense<0.000000e+00> : vector<2x8xf32>
    %100 = vector.multi_reduction <add>, %99, %cst_47 [2] : vector<2x8x8xf32> to vector<2x8xf32>
    %101 = vector.shape_cast %100 : vector<2x8xf32> to vector<2x8x1xf32>
    %102 = tpu.reciprocal %101 {approx = true} : vector<2x8x1xf32> -> vector<2x8x1xf32>
    %103 = vector.broadcast %102 : vector<2x8x1xf32> to vector<2x8x8xf32>
    %104 = arith.mulf %99, %103 : vector<2x8x8xf32>
    "tpu.trace_start"() <{level = 10 : i32, message = "bqk,bkd->bqd"}> : () -> ()
    %cst_48 = arith.constant dense<0.000000e+00> : vector<2x8x8xf32>
    %105 = tpu.matmul %104, %93, %cst_48 {dimension_numbers = #tpu.dot_dimension_numbers<[2], [1], [1], [2], [0, 0, 0, 1, 1, 2], [0], [0]>} : vector<2x8x8xf32>, vector<2x8x8xf32>, vector<2x8x8xf32> -> vector<2x8x8xf32>
    "tpu.trace_stop"() : () -> ()
    %106 = vector.extract_strided_slice %52 {offsets = [0, 0, 24], sizes = [2, 8, 8], strides = [1, 1, 1]} : vector<2x8x32xf32> to vector<2x8x8xf32>
    %cst_49 = arith.constant 0.353553385 : f32
    %107 = vector.broadcast %cst_49 : f32 to vector<2x8x8xf32>
    %108 = arith.mulf %106, %107 : vector<2x8x8xf32>
    %109 = vector.extract_strided_slice %53 {offsets = [0, 0, 24], sizes = [2, 8, 8], strides = [1, 1, 1]} : vector<2x8x32xf32> to vector<2x8x8xf32>
    %110 = vector.extract_strided_slice %54 {offsets = [0, 0, 24], sizes = [2, 8, 8], strides = [1, 1, 1]} : vector<2x8x32xf32> to vector<2x8x8xf32>
    "tpu.trace_start"() <{level = 10 : i32, message = "bqd,bkd->bqk"}> : () -> ()
    %cst_50 = arith.constant dense<0.000000e+00> : vector<2x8x8xf32>
    %111 = tpu.matmul %108, %109, %cst_50 {dimension_numbers = #tpu.dot_dimension_numbers<[2], [2], [1], [1], [0, 0, 0, 1, 1, 1], [0], [0]>} : vector<2x8x8xf32>, vector<2x8x8xf32>, vector<2x8x8xf32> -> vector<2x8x8xf32>
    "tpu.trace_stop"() : () -> ()
    %cst_51 = arith.constant dense<0xFF800000> : vector<2x8xf32>
    %112 = vector.multi_reduction <maximumf>, %111, %cst_51 [2] : vector<2x8x8xf32> to vector<2x8xf32>
    %113 = vector.shape_cast %112 : vector<2x8xf32> to vector<2x8x1xf32>
    %114 = vector.broadcast %113 : vector<2x8x1xf32> to vector<2x8x8xf32>
    %115 = arith.subf %111, %114 : vector<2x8x8xf32>
    %116 = math.exp %115 : vector<2x8x8xf32>
    %cst_52 = arith.constant dense<0.000000e+00> : vector<2x8xf32>
    %117 = vector.multi_reduction <add>, %116, %cst_52 [2] : vector<2x8x8xf32> to vector<2x8xf32>
    %118 = vector.shape_cast %117 : vector<2x8xf32> to vector<2x8x1xf32>
    %119 = tpu.reciprocal %118 {approx = true} : vector<2x8x1xf32> -> vector<2x8x1xf32>
    %120 = vector.broadcast %119 : vector<2x8x1xf32> to vector<2x8x8xf32>
    %121 = arith.mulf %116, %120 : vector<2x8x8xf32>
    "tpu.trace_start"() <{level = 10 : i32, message = "bqk,bkd->bqd"}> : () -> ()
    %cst_53 = arith.constant dense<0.000000e+00> : vector<2x8x8xf32>
    %122 = tpu.matmul %121, %110, %cst_53 {dimension_numbers = #tpu.dot_dimension_numbers<[2], [1], [1], [2], [0, 0, 0, 1, 1, 2], [0], [0]>} : vector<2x8x8xf32>, vector<2x8x8xf32>, vector<2x8x8xf32> -> vector<2x8x8xf32>
    "tpu.trace_stop"() : () -> ()
    %123 = tpu.concatenate %71, %88, %105, %122 in 2 : vector<2x8x8xf32>, vector<2x8x8xf32>, vector<2x8x8xf32>, vector<2x8x8xf32> -> vector<2x8x32xf32>
    %124 = vector.shape_cast %123 : vector<2x8x32xf32> to vector<16x32xf32>
    %c0_54 = arith.constant 0 : index
    %c0_55 = arith.constant 0 : index
    %c0_56 = arith.constant 0 : index
    %125 = vector.load %arg11[%c0_54, %c0_55, %c0_56] : memref<1x32x32xf32, #tpu.memory_space<vmem>>, vector<1x32x32xf32>
    %126 = vector.shape_cast %125 : vector<1x32x32xf32> to vector<32x32xf32>
    %cst_57 = arith.constant dense<0.000000e+00> : vector<16x32xf32>
    %127 = tpu.matmul %124, %126, %cst_57 {dimension_numbers = #tpu.dot_dimension_numbers<[1], [0], [0], [1], [0, 0, 1, 1], [], []>} : vector<16x32xf32>, vector<32x32xf32>, vector<16x32xf32> -> vector<16x32xf32>
    %c0_58 = arith.constant 0 : index
    %c0_59 = arith.constant 0 : index
    %c0_60 = arith.constant 0 : index
    %128 = vector.load %arg12[%c0_58, %c0_59, %c0_60] : memref<1x1x32xf32, #tpu.memory_space<vmem>>, vector<1x1x32xf32>
    %129 = vector.shape_cast %128 : vector<1x1x32xf32> to vector<1x32xf32>
    %130 = vector.broadcast %129 : vector<1x32xf32> to vector<16x32xf32>
    %131 = arith.addf %127, %130 : vector<16x32xf32>
    %c0_61 = arith.constant 0 : index
    %c0_62 = arith.constant 0 : index
    %c0_63 = arith.constant 0 : index
    %132 = vector.load %arg13[%c0_61, %c0_62, %c0_63] : memref<1x32x32xf32, #tpu.memory_space<vmem>>, vector<1x32x32xf32>
    %133 = vector.shape_cast %132 : vector<1x32x32xf32> to vector<32x32xf32>
    %cst_64 = arith.constant dense<0.000000e+00> : vector<16x32xf32>
    %134 = tpu.matmul %30, %133, %cst_64 {dimension_numbers = #tpu.dot_dimension_numbers<[1], [0], [0], [1], [0, 0, 1, 1], [], []>} : vector<16x32xf32>, vector<32x32xf32>, vector<16x32xf32> -> vector<16x32xf32>
    %c0_65 = arith.constant 0 : index
    %c0_66 = arith.constant 0 : index
    %c0_67 = arith.constant 0 : index
    %135 = vector.load %arg14[%c0_65, %c0_66, %c0_67] : memref<1x32x32xf32, #tpu.memory_space<vmem>>, vector<1x32x32xf32>
    %136 = vector.shape_cast %135 : vector<1x32x32xf32> to vector<32x32xf32>
    %cst_68 = arith.constant dense<0.000000e+00> : vector<16x32xf32>
    %137 = tpu.matmul %131, %136, %cst_68 {dimension_numbers = #tpu.dot_dimension_numbers<[1], [0], [0], [1], [0, 0, 1, 1], [], []>} : vector<16x32xf32>, vector<32x32xf32>, vector<16x32xf32> -> vector<16x32xf32>
    %138 = arith.addf %134, %137 : vector<16x32xf32>
    %c0_69 = arith.constant 0 : index
    %c0_70 = arith.constant 0 : index
    %c0_71 = arith.constant 0 : index
    %139 = vector.load %arg15[%c0_69, %c0_70, %c0_71] : memref<1x1x32xf32, #tpu.memory_space<vmem>>, vector<1x1x32xf32>
    %140 = vector.shape_cast %139 : vector<1x1x32xf32> to vector<1x32xf32>
    %141 = vector.broadcast %140 : vector<1x32xf32> to vector<16x32xf32>
    %142 = arith.addf %138, %141 : vector<16x32xf32>
    %143 = arith.negf %142 : vector<16x32xf32>
    %144 = math.exp %143 : vector<16x32xf32>
    %cst_72 = arith.constant 1.000000e+00 : f32
    %145 = vector.broadcast %cst_72 : f32 to vector<16x32xf32>
    %146 = arith.addf %145, %144 : vector<16x32xf32>
    %147 = arith.divf %145, %146 : vector<16x32xf32>
    %148 = arith.mulf %147, %131 : vector<16x32xf32>
    %149 = arith.addf %30, %148 : vector<16x32xf32>
    %c0_73 = arith.constant 0 : index
    %c0_74 = arith.constant 0 : index
    %c0_75 = arith.constant 0 : index
    %150 = vector.load %arg16[%c0_73, %c0_74, %c0_75] : memref<1x1x32xf32, #tpu.memory_space<vmem>>, vector<1x1x32xf32>
    %151 = vector.shape_cast %150 : vector<1x1x32xf32> to vector<1x32xf32>
    %c0_76 = arith.constant 0 : index
    %c0_77 = arith.constant 0 : index
    %c0_78 = arith.constant 0 : index
    %152 = vector.load %arg17[%c0_76, %c0_77, %c0_78] : memref<1x1x32xf32, #tpu.memory_space<vmem>>, vector<1x1x32xf32>
    %153 = vector.shape_cast %152 : vector<1x1x32xf32> to vector<1x32xf32>
    %cst_79 = arith.constant dense<0.000000e+00> : vector<16xf32>
    %154 = vector.multi_reduction <add>, %149, %cst_79 [1] : vector<16x32xf32> to vector<16xf32>
    %155 = vector.shape_cast %154 : vector<16xf32> to vector<16x1xf32>
    %cst_80 = arith.constant 3.200000e+01 : f32
    %156 = vector.broadcast %cst_80 : f32 to vector<16x1xf32>
    %157 = arith.divf %155, %156 : vector<16x1xf32>
    %158 = vector.broadcast %157 : vector<16x1xf32> to vector<16x32xf32>
    %159 = arith.subf %149, %158 : vector<16x32xf32>
    %160 = arith.mulf %159, %159 : vector<16x32xf32>
    %cst_81 = arith.constant dense<0.000000e+00> : vector<16xf32>
    %161 = vector.multi_reduction <add>, %160, %cst_81 [1] : vector<16x32xf32> to vector<16xf32>
    %162 = vector.shape_cast %161 : vector<16xf32> to vector<16x1xf32>
    %cst_82 = arith.constant 3.200000e+01 : f32
    %163 = vector.broadcast %cst_82 : f32 to vector<16x1xf32>
    %164 = arith.divf %162, %163 : vector<16x1xf32>
    %165 = vector.broadcast %157 : vector<16x1xf32> to vector<16x32xf32>
    %166 = arith.subf %149, %165 : vector<16x32xf32>
    %cst_83 = arith.constant 9.99999974E-6 : f32
    %167 = vector.broadcast %cst_83 : f32 to vector<16x1xf32>
    %168 = arith.addf %164, %167 : vector<16x1xf32>
    %169 = math.rsqrt %168 : vector<16x1xf32>
    %170 = vector.broadcast %169 : vector<16x1xf32> to vector<16x32xf32>
    %171 = arith.mulf %166, %170 : vector<16x32xf32>
    %172 = vector.broadcast %151 : vector<1x32xf32> to vector<16x32xf32>
    %173 = arith.mulf %171, %172 : vector<16x32xf32>
    %174 = vector.broadcast %153 : vector<1x32xf32> to vector<16x32xf32>
    %175 = arith.addf %173, %174 : vector<16x32xf32>
    %176 = arith.addf %4, %175 : vector<16x32xf32>
    %c0_84 = arith.constant 0 : index
    %c0_85 = arith.constant 0 : index
    %c0_86 = arith.constant 0 : index
    %177 = vector.load %arg18[%c0_84, %c0_85, %c0_86] : memref<1x1x32xf32, #tpu.memory_space<vmem>>, vector<1x1x32xf32>
    %178 = vector.shape_cast %177 : vector<1x1x32xf32> to vector<1x32xf32>
    %c0_87 = arith.constant 0 : index
    %c0_88 = arith.constant 0 : index
    %c0_89 = arith.constant 0 : index
    %179 = vector.load %arg19[%c0_87, %c0_88, %c0_89] : memref<1x1x32xf32, #tpu.memory_space<vmem>>, vector<1x1x32xf32>
    %180 = vector.shape_cast %179 : vector<1x1x32xf32> to vector<1x32xf32>
    %cst_90 = arith.constant dense<0.000000e+00> : vector<16xf32>
    %181 = vector.multi_reduction <add>, %176, %cst_90 [1] : vector<16x32xf32> to vector<16xf32>
    %182 = vector.shape_cast %181 : vector<16xf32> to vector<16x1xf32>
    %cst_91 = arith.constant 3.200000e+01 : f32
    %183 = vector.broadcast %cst_91 : f32 to vector<16x1xf32>
    %184 = arith.divf %182, %183 : vector<16x1xf32>
    %185 = vector.broadcast %184 : vector<16x1xf32> to vector<16x32xf32>
    %186 = arith.subf %176, %185 : vector<16x32xf32>
    %187 = arith.mulf %186, %186 : vector<16x32xf32>
    %cst_92 = arith.constant dense<0.000000e+00> : vector<16xf32>
    %188 = vector.multi_reduction <add>, %187, %cst_92 [1] : vector<16x32xf32> to vector<16xf32>
    %189 = vector.shape_cast %188 : vector<16xf32> to vector<16x1xf32>
    %cst_93 = arith.constant 3.200000e+01 : f32
    %190 = vector.broadcast %cst_93 : f32 to vector<16x1xf32>
    %191 = arith.divf %189, %190 : vector<16x1xf32>
    %192 = vector.broadcast %184 : vector<16x1xf32> to vector<16x32xf32>
    %193 = arith.subf %176, %192 : vector<16x32xf32>
    %cst_94 = arith.constant 9.99999974E-6 : f32
    %194 = vector.broadcast %cst_94 : f32 to vector<16x1xf32>
    %195 = arith.addf %191, %194 : vector<16x1xf32>
    %196 = math.rsqrt %195 : vector<16x1xf32>
    %197 = vector.broadcast %196 : vector<16x1xf32> to vector<16x32xf32>
    %198 = arith.mulf %193, %197 : vector<16x32xf32>
    %199 = vector.broadcast %178 : vector<1x32xf32> to vector<16x32xf32>
    %200 = arith.mulf %198, %199 : vector<16x32xf32>
    %201 = vector.broadcast %180 : vector<1x32xf32> to vector<16x32xf32>
    %202 = arith.addf %200, %201 : vector<16x32xf32>
    %c0_95 = arith.constant 0 : index
    %c0_96 = arith.constant 0 : index
    %c0_97 = arith.constant 0 : index
    %203 = vector.load %arg20[%c0_95, %c0_96, %c0_97] : memref<1x32x64xf32, #tpu.memory_space<vmem>>, vector<1x32x64xf32>
    %204 = vector.shape_cast %203 : vector<1x32x64xf32> to vector<32x64xf32>
    %cst_98 = arith.constant dense<0.000000e+00> : vector<16x64xf32>
    %205 = tpu.matmul %202, %204, %cst_98 {dimension_numbers = #tpu.dot_dimension_numbers<[1], [0], [0], [1], [0, 0, 1, 1], [], []>} : vector<16x32xf32>, vector<32x64xf32>, vector<16x64xf32> -> vector<16x64xf32>
    %c0_99 = arith.constant 0 : index
    %c0_100 = arith.constant 0 : index
    %c0_101 = arith.constant 0 : index
    %206 = vector.load %arg21[%c0_99, %c0_100, %c0_101] : memref<1x1x64xf32, #tpu.memory_space<vmem>>, vector<1x1x64xf32>
    %207 = vector.shape_cast %206 : vector<1x1x64xf32> to vector<1x64xf32>
    %208 = vector.broadcast %207 : vector<1x64xf32> to vector<16x64xf32>
    %209 = arith.addf %205, %208 : vector<16x64xf32>
    %210 = arith.mulf %209, %209 : vector<16x64xf32>
    %211 = arith.mulf %209, %210 : vector<16x64xf32>
    %cst_102 = arith.constant 4.471500e-02 : f32
    %212 = vector.broadcast %cst_102 : f32 to vector<16x64xf32>
    %213 = arith.mulf %212, %211 : vector<16x64xf32>
    %214 = arith.addf %209, %213 : vector<16x64xf32>
    %cst_103 = arith.constant 0.797884583 : f32
    %215 = vector.broadcast %cst_103 : f32 to vector<16x64xf32>
    %216 = arith.mulf %215, %214 : vector<16x64xf32>
    %217 = math.tanh %216 : vector<16x64xf32>
    %cst_104 = arith.constant 1.000000e+00 : f32
    %218 = vector.broadcast %cst_104 : f32 to vector<16x64xf32>
    %219 = arith.addf %218, %217 : vector<16x64xf32>
    %cst_105 = arith.constant 5.000000e-01 : f32
    %220 = vector.broadcast %cst_105 : f32 to vector<16x64xf32>
    %221 = arith.mulf %220, %219 : vector<16x64xf32>
    %222 = arith.mulf %209, %221 : vector<16x64xf32>
    %c0_106 = arith.constant 0 : index
    %c0_107 = arith.constant 0 : index
    %c0_108 = arith.constant 0 : index
    %223 = vector.load %arg22[%c0_106, %c0_107, %c0_108] : memref<1x64x32xf32, #tpu.memory_space<vmem>>, vector<1x64x32xf32>
    %224 = vector.shape_cast %223 : vector<1x64x32xf32> to vector<64x32xf32>
    %cst_109 = arith.constant dense<0.000000e+00> : vector<16x32xf32>
    %225 = tpu.matmul %222, %224, %cst_109 {dimension_numbers = #tpu.dot_dimension_numbers<[1], [0], [0], [1], [0, 0, 1, 1], [], []>} : vector<16x64xf32>, vector<64x32xf32>, vector<16x32xf32> -> vector<16x32xf32>
    %c0_110 = arith.constant 0 : index
    %c0_111 = arith.constant 0 : index
    %c0_112 = arith.constant 0 : index
    %226 = vector.load %arg23[%c0_110, %c0_111, %c0_112] : memref<1x1x32xf32, #tpu.memory_space<vmem>>, vector<1x1x32xf32>
    %227 = vector.shape_cast %226 : vector<1x1x32xf32> to vector<1x32xf32>
    %228 = vector.broadcast %227 : vector<1x32xf32> to vector<16x32xf32>
    %229 = arith.addf %225, %228 : vector<16x32xf32>
    %230 = arith.addf %176, %229 : vector<16x32xf32>
    %231 = vector.shape_cast %230 : vector<16x32xf32> to vector<2x8x32xf32>
    %c0_113 = arith.constant 0 : index
    %c0_114 = arith.constant 0 : index
    %c0_115 = arith.constant 0 : index
    %232 = vector.load %arg28[%c0_113, %c0_114, %c0_115] : memref<2x8x32xf32, #tpu.memory_space<vmem>>, vector<2x8x32xf32>
    tpu.vector_store %arg28[%c0_113, %c0_114, %c0_115], %231 {strides = array<i32>} : memref<2x8x32xf32, #tpu.memory_space<vmem>>, vector<2x8x32xf32>,
    %c3_i32 = arith.constant 3 : i32
    %233 = arith.cmpi eq, %arg1, %c3_i32 : i32
    %234 = arith.extui %233 : i1 to i32
    %c0_i32_116 = arith.constant 0 : i32
    %235 = arith.cmpi ne, %234, %c0_i32_116 : i32
    scf.if %235 {
      %c0_117 = arith.constant 0 : index
      %c0_118 = arith.constant 0 : index
      %c0_119 = arith.constant 0 : index
      %236 = vector.load %arg28[%c0_117, %c0_118, %c0_119] : memref<2x8x32xf32, #tpu.memory_space<vmem>>, vector<2x8x32xf32>
      %cst_120 = arith.constant dense<0.000000e+00> : vector<2x32xf32>
      %237 = vector.multi_reduction <add>, %236, %cst_120 [1] : vector<2x8x32xf32> to vector<2x32xf32>
      %238 = vector.shape_cast %237 : vector<2x32xf32> to vector<2x1x32xf32>
      %cst_121 = arith.constant 8.000000e+00 : f32
      %239 = vector.broadcast %cst_121 : f32 to vector<2x1x32xf32>
      %240 = arith.divf %238, %239 : vector<2x1x32xf32>
      %c0_122 = arith.constant 0 : index
      %c0_123 = arith.constant 0 : index
      %241 = vector.load %arg24[%c0_122, %c0_123] : memref<1x32xf32, #tpu.memory_space<vmem>>, vector<1x32xf32>
      %242 = vector.shape_cast %241 : vector<1x32xf32> to vector<1x1x32xf32>
      %243 = vector.broadcast %242 : vector<1x1x32xf32> to vector<2x1x32xf32>
      %244 = arith.mulf %240, %243 : vector<2x1x32xf32>
      %cst_124 = arith.constant dense<0.000000e+00> : vector<2x1xf32>
      %245 = vector.multi_reduction <add>, %244, %cst_124 [2] : vector<2x1x32xf32> to vector<2x1xf32>
      %246 = vector.shape_cast %245 : vector<2x1xf32> to vector<2x1x1xf32>
      %c0_125 = arith.constant 0 : index
      %c0_126 = arith.constant 0 : index
      %247 = vector.load %arg25[%c0_125, %c0_126] : memref<1x1xf32, #tpu.memory_space<vmem>>, vector<1x1xf32>
      %248 = vector.shape_cast %247 : vector<1x1xf32> to vector<1x1x1xf32>
      %249 = vector.broadcast %248 : vector<1x1x1xf32> to vector<2x1x1xf32>
      %250 = arith.addf %246, %249 : vector<2x1x1xf32>
      %251 = arith.negf %250 : vector<2x1x1xf32>
      %252 = math.exp %251 : vector<2x1x1xf32>
      %cst_127 = arith.constant 1.000000e+00 : f32
      %253 = vector.broadcast %cst_127 : f32 to vector<2x1x1xf32>
      %254 = arith.addf %253, %252 : vector<2x1x1xf32>
      %255 = arith.divf %253, %254 : vector<2x1x1xf32>
      %256 = vector.broadcast %255 : vector<2x1x1xf32> to vector<2x8x32xf32>
      %257 = arith.mulf %256, %236 : vector<2x8x32xf32>
      %cst_128 = arith.constant 1.000000e+00 : f32
      %258 = vector.broadcast %cst_128 : f32 to vector<2x1x1xf32>
      %259 = arith.subf %258, %255 : vector<2x1x1xf32>
      %c0_129 = arith.constant 0 : index
      %c0_130 = arith.constant 0 : index
      %c0_131 = arith.constant 0 : index
      %260 = vector.load %arg2[%c0_129, %c0_130, %c0_131] : memref<2x8x32xf32, #tpu.memory_space<vmem>>, vector<2x8x32xf32>
      %261 = vector.broadcast %259 : vector<2x1x1xf32> to vector<2x8x32xf32>
      %262 = arith.mulf %261, %260 : vector<2x8x32xf32>
      %263 = arith.addf %257, %262 : vector<2x8x32xf32>
      %c0_132 = arith.constant 0 : index
      %c0_133 = arith.constant 0 : index
      %264 = vector.load %arg26[%c0_132, %c0_133] : memref<1x32xf32, #tpu.memory_space<vmem>>, vector<1x32xf32>
      %265 = vector.shape_cast %264 : vector<1x32xf32> to vector<1x1x32xf32>
      %266 = vector.broadcast %265 : vector<1x1x32xf32> to vector<2x8x32xf32>
      %267 = arith.addf %263, %266 : vector<2x8x32xf32>
      %c0_134 = arith.constant 0 : index
      %c0_135 = arith.constant 0 : index
      %c0_136 = arith.constant 0 : index
      %268 = vector.load %arg27[%c0_134, %c0_135, %c0_136] : memref<2x8x32xf32, #tpu.memory_space<vmem>>, vector<2x8x32xf32>
      tpu.vector_store %arg27[%c0_134, %c0_135, %c0_136], %267 {strides = array<i32>} : memref<2x8x32xf32, #tpu.memory_space<vmem>>, vector<2x8x32xf32>,
    } else {
    }
    return
  }
  func.func @transform_0(%arg0: i32, %arg1: i32) -> (i32, i32, i32) {
    %c0_i32 = arith.constant 0 : i32
    %c0_i32_0 = arith.constant 0 : i32
    %c0_i32_1 = arith.constant 0 : i32
    return %arg0, %c0_i32, %c0_i32_0 : i32, i32, i32
  }
  func.func @transform_1(%arg0: i32, %arg1: i32) -> (i32, i32, i32) {
    %c0_i32 = arith.constant 0 : i32
    %c0_i32_0 = arith.constant 0 : i32
    %c0_i32_1 = arith.constant 0 : i32
    return %arg1, %c0_i32, %c0_i32_0 : i32, i32, i32
  }
  func.func @transform_2(%arg0: i32, %arg1: i32) -> (i32, i32, i32) {
    %c0_i32 = arith.constant 0 : i32
    %c0_i32_0 = arith.constant 0 : i32
    %c0_i32_1 = arith.constant 0 : i32
    return %arg1, %c0_i32, %c0_i32_0 : i32, i32, i32
  }
  func.func @transform_3(%arg0: i32, %arg1: i32) -> (i32, i32, i32) {
    %c0_i32 = arith.constant 0 : i32
    %c0_i32_0 = arith.constant 0 : i32
    %c0_i32_1 = arith.constant 0 : i32
    return %arg1, %c0_i32, %c0_i32_0 : i32, i32, i32
  }
  func.func @transform_4(%arg0: i32, %arg1: i32) -> (i32, i32, i32) {
    %c0_i32 = arith.constant 0 : i32
    %c0_i32_0 = arith.constant 0 : i32
    %c0_i32_1 = arith.constant 0 : i32
    return %arg1, %c0_i32, %c0_i32_0 : i32, i32, i32
  }
  func.func @transform_5(%arg0: i32, %arg1: i32) -> (i32, i32, i32) {
    %c0_i32 = arith.constant 0 : i32
    %c0_i32_0 = arith.constant 0 : i32
    %c0_i32_1 = arith.constant 0 : i32
    return %arg1, %c0_i32, %c0_i32_0 : i32, i32, i32
  }
  func.func @transform_6(%arg0: i32, %arg1: i32) -> (i32, i32, i32) {
    %c0_i32 = arith.constant 0 : i32
    %c0_i32_0 = arith.constant 0 : i32
    %c0_i32_1 = arith.constant 0 : i32
    return %arg1, %c0_i32, %c0_i32_0 : i32, i32, i32
  }
  func.func @transform_7(%arg0: i32, %arg1: i32) -> (i32, i32, i32) {
    %c0_i32 = arith.constant 0 : i32
    %c0_i32_0 = arith.constant 0 : i32
    %c0_i32_1 = arith.constant 0 : i32
    return %arg1, %c0_i32, %c0_i32_0 : i32, i32, i32
  }
  func.func @transform_8(%arg0: i32, %arg1: i32) -> (i32, i32, i32) {
    %c0_i32 = arith.constant 0 : i32
    %c0_i32_0 = arith.constant 0 : i32
    %c0_i32_1 = arith.constant 0 : i32
    return %arg1, %c0_i32, %c0_i32_0 : i32, i32, i32
  }
  func.func @transform_9(%arg0: i32, %arg1: i32) -> (i32, i32, i32) {
    %c0_i32 = arith.constant 0 : i32
    %c0_i32_0 = arith.constant 0 : i32
    %c0_i32_1 = arith.constant 0 : i32
    return %arg1, %c0_i32, %c0_i32_0 : i32, i32, i32
  }
  func.func @transform_10(%arg0: i32, %arg1: i32) -> (i32, i32, i32) {
    %c0_i32 = arith.constant 0 : i32
    %c0_i32_0 = arith.constant 0 : i32
    %c0_i32_1 = arith.constant 0 : i32
    return %arg1, %c0_i32, %c0_i32_0 : i32, i32, i32
  }
  func.func @transform_11(%arg0: i32, %arg1: i32) -> (i32, i32, i32) {
    %c0_i32 = arith.constant 0 : i32
    %c0_i32_0 = arith.constant 0 : i32
    %c0_i32_1 = arith.constant 0 : i32
    return %arg1, %c0_i32, %c0_i32_0 : i32, i32, i32
  }
  func.func @transform_12(%arg0: i32, %arg1: i32) -> (i32, i32, i32) {
    %c0_i32 = arith.constant 0 : i32
    %c0_i32_0 = arith.constant 0 : i32
    %c0_i32_1 = arith.constant 0 : i32
    return %arg1, %c0_i32, %c0_i32_0 : i32, i32, i32
  }
  func.func @transform_13(%arg0: i32, %arg1: i32) -> (i32, i32, i32) {
    %c0_i32 = arith.constant 0 : i32
    %c0_i32_0 = arith.constant 0 : i32
    %c0_i32_1 = arith.constant 0 : i32
    return %arg1, %c0_i32, %c0_i32_0 : i32, i32, i32
  }
  func.func @transform_14(%arg0: i32, %arg1: i32) -> (i32, i32, i32) {
    %c0_i32 = arith.constant 0 : i32
    %c0_i32_0 = arith.constant 0 : i32
    %c0_i32_1 = arith.constant 0 : i32
    return %arg1, %c0_i32, %c0_i32_0 : i32, i32, i32
  }
  func.func @transform_15(%arg0: i32, %arg1: i32) -> (i32, i32, i32) {
    %c0_i32 = arith.constant 0 : i32
    %c0_i32_0 = arith.constant 0 : i32
    %c0_i32_1 = arith.constant 0 : i32
    return %arg1, %c0_i32, %c0_i32_0 : i32, i32, i32
  }
  func.func @transform_16(%arg0: i32, %arg1: i32) -> (i32, i32, i32) {
    %c0_i32 = arith.constant 0 : i32
    %c0_i32_0 = arith.constant 0 : i32
    %c0_i32_1 = arith.constant 0 : i32
    return %arg1, %c0_i32, %c0_i32_0 : i32, i32, i32
  }
  func.func @transform_17(%arg0: i32, %arg1: i32) -> (i32, i32, i32) {
    %c0_i32 = arith.constant 0 : i32
    %c0_i32_0 = arith.constant 0 : i32
    %c0_i32_1 = arith.constant 0 : i32
    return %arg1, %c0_i32, %c0_i32_0 : i32, i32, i32
  }
  func.func @transform_18(%arg0: i32, %arg1: i32) -> (i32, i32, i32) {
    %c0_i32 = arith.constant 0 : i32
    %c0_i32_0 = arith.constant 0 : i32
    %c0_i32_1 = arith.constant 0 : i32
    return %arg1, %c0_i32, %c0_i32_0 : i32, i32, i32
  }
  func.func @transform_19(%arg0: i32, %arg1: i32) -> (i32, i32, i32) {
    %c0_i32 = arith.constant 0 : i32
    %c0_i32_0 = arith.constant 0 : i32
    %c0_i32_1 = arith.constant 0 : i32
    return %arg1, %c0_i32, %c0_i32_0 : i32, i32, i32
  }
  func.func @transform_20(%arg0: i32, %arg1: i32) -> (i32, i32, i32) {
    %c0_i32 = arith.constant 0 : i32
    %c0_i32_0 = arith.constant 0 : i32
    %c0_i32_1 = arith.constant 0 : i32
    return %arg1, %c0_i32, %c0_i32_0 : i32, i32, i32
  }
  func.func @transform_21(%arg0: i32, %arg1: i32) -> (i32, i32, i32) {
    %c0_i32 = arith.constant 0 : i32
    %c0_i32_0 = arith.constant 0 : i32
    %c0_i32_1 = arith.constant 0 : i32
    return %arg1, %c0_i32, %c0_i32_0 : i32, i32, i32
  }
  func.func @transform_22(%arg0: i32, %arg1: i32) -> (i32, i32) {
    %c0_i32 = arith.constant 0 : i32
    %c0_i32_0 = arith.constant 0 : i32
    %c0_i32_1 = arith.constant 0 : i32
    return %c0_i32, %c0_i32_0 : i32, i32
  }
  func.func @transform_23(%arg0: i32, %arg1: i32) -> (i32, i32) {
    %c0_i32 = arith.constant 0 : i32
    %c0_i32_0 = arith.constant 0 : i32
    %c0_i32_1 = arith.constant 0 : i32
    return %c0_i32, %c0_i32_0 : i32, i32
  }
  func.func @transform_24(%arg0: i32, %arg1: i32) -> (i32, i32) {
    %c0_i32 = arith.constant 0 : i32
    %c0_i32_0 = arith.constant 0 : i32
    %c0_i32_1 = arith.constant 0 : i32
    return %c0_i32, %c0_i32_0 : i32, i32
  }
  func.func @transform_25(%arg0: i32, %arg1: i32) -> (i32, i32, i32) {
    %c0_i32 = arith.constant 0 : i32
    %c0_i32_0 = arith.constant 0 : i32
    %c0_i32_1 = arith.constant 0 : i32
    return %arg0, %c0_i32, %c0_i32_0 : i32, i32, i32
  }
}

</mosaic_0001>

<llo_original>
// kernel: tpu_custom_call.1
$region0: #{tpu_custom_call.1}
  #allocation0 [shape = 'u32[]', space=smem, size = 0x4, offset = 0x4, fixed_abs, tag = 'smem constant byte address 0x4 - core index']
  #allocation1 [shape = 'u32[72,128]{1,0:T(1,128)}', space=vmem, size = 0x9000, scoped, tag = 'internal scratch']
  #allocation2 [shape = 'f32[2,8,32]{2,1,0:T(8,128)}', space=vmem, size = 0x2000, scoped, tag = 'scratch operand']
  #allocation3 [shape = 'f32[1,1]{1,0:T(1,128)S(1)}', space=vmem, size = 0x200, scoped, tag = 'scoped memory for tpu_custom_call.1']
  %s0 = inlined_call_operand.hbm [shape: f32[2,8,32], index: 0, kind: input, shape index: {}]
  %s1 = inlined_call_operand.hbm [shape: f32[4,1,32], index: 1, kind: input, shape index: {}]
  %s2 = inlined_call_operand.hbm [shape: f32[4,1,32], index: 2, kind: input, shape index: {}]
  %s3 = inlined_call_operand.vmem [shape: f32[4,32,32], index: 3, kind: input, shape index: {}]
  %s4 = inlined_call_operand.hbm [shape: f32[4,1,32], index: 4, kind: input, shape index: {}]
  %s5 = inlined_call_operand.vmem [shape: f32[4,32,32], index: 5, kind: input, shape index: {}]
  %s6 = inlined_call_operand.hbm [shape: f32[4,1,32], index: 6, kind: input, shape index: {}]
  %s7 = inlined_call_operand.vmem [shape: f32[4,32,32], index: 7, kind: input, shape index: {}]
  %s8 = inlined_call_operand.vmem [shape: f32[4,1,32], index: 8, kind: input, shape index: {}]
  %s9 = inlined_call_operand.hbm [shape: f32[4,32,32], index: 9, kind: input, shape index: {}]
  %s10 = inlined_call_operand.vmem [shape: f32[4,1,32], index: 10, kind: input, shape index: {}]
  %s11 = inlined_call_operand.hbm [shape: f32[4,32,32], index: 11, kind: input, shape index: {}]
  %s12 = inlined_call_operand.hbm [shape: f32[4,32,32], index: 12, kind: input, shape index: {}]
  %s13 = inlined_call_operand.vmem [shape: f32[4,1,32], index: 13, kind: input, shape index: {}]
  %s14 = inlined_call_operand.hbm [shape: f32[4,1,32], index: 14, kind: input, shape index: {}]
  %s15 = inlined_call_operand.hbm [shape: f32[4,1,32], index: 15, kind: input, shape index: {}]
  %s16 = inlined_call_operand.hbm [shape: f32[4,1,32], index: 16, kind: input, shape index: {}]
  %s17 = inlined_call_operand.hbm [shape: f32[4,1,32], index: 17, kind: input, shape index: {}]
  %s18 = inlined_call_operand.hbm [shape: f32[4,32,64], index: 18, kind: input, shape index: {}]
  %s19 = inlined_call_operand.vmem [shape: f32[4,1,64], index: 19, kind: input, shape index: {}]
  %s20 = inlined_call_operand.vmem [shape: f32[4,64,32], index: 20, kind: input, shape index: {}]
  %s21 = inlined_call_operand.hbm [shape: f32[4,1,32], index: 21, kind: input, shape index: {}]
  %s22 = inlined_call_operand.vmem [shape: f32[1,32], index: 22, kind: input, shape index: {}]
  %s23 = inlined_call_operand.<no memory space> [shape: f32[1,1], index: 23, kind: input, shape index: {}]
  %s24 = inlined_call_operand.vmem [shape: f32[1,32], index: 24, kind: input, shape index: {}]
  %s25 = inlined_call_operand.hbm [shape: f32[2,8,32], index: 25, kind: output, shape index: {}]
  %s26 = sld [smem:[#allocation0]]
  $region197: #{tpu_custom_call.1} parent=0
    _
  %s28 = ssub.s32 1, %s26
  %s29 = scalar_select 0, %s28, %s26
  %v30 = vstv %s23
  %31 = vst [vmem:[#allocation3] sm:$0x1] %v30
  $region1: #{tpu_custom_call.1} parent=0
    #allocation4 [shape = 'u8[8192]{0}', space=vmem, size = 0x2000, scoped, tag = 'input window, operand 0, single buffered']
    #allocation5 [shape = 's32[2]{0}', space=sflag, size = 0x8, scoped, tag = 'scoped memory for tpu_custom_call.1']
    #allocation6 [shape = 's32[2]{0}', space=sflag, size = 0x8, scoped, tag = 'scoped memory for tpu_custom_call.1']
    #allocation7 [shape = 'u8[1024]{0}', space=vmem, size = 0x400, scoped, tag = 'input window, operand 1']
    #allocation8 [shape = 's32[2]{0}', space=sflag, size = 0x8, scoped, tag = 'scoped memory for tpu_custom_call.1']
    #allocation9 [shape = 'u8[1024]{0}', space=vmem, size = 0x400, scoped, tag = 'input window, operand 2']
    #allocation10 [shape = 'u8[1024]{0}', space=vmem, size = 0x400, scoped, tag = 'input window, operand 4']
    #allocation11 [shape = 's32[2]{0}', space=sflag, size = 0x8, scoped, tag = 'scoped memory for tpu_custom_call.1']
    #allocation12 [shape = 'u8[1024]{0}', space=vmem, size = 0x400, scoped, tag = 'input window, operand 6']
    #allocation13 [shape = 'u8[32768]{0}', space=vmem, size = 0x8000, scoped, tag = 'input window, operand 9']
    #allocation14 [shape = 's32[2]{0}', space=sflag, size = 0x8, scoped, tag = 'scoped memory for tpu_custom_call.1']
    #allocation15 [shape = 'u8[32768]{0}', space=vmem, size = 0x8000, scoped, tag = 'input window, operand 11']
    #allocation16 [shape = 'u8[32768]{0}', space=vmem, size = 0x8000, scoped, tag = 'input window, operand 12']
    #allocation17 [shape = 's32[2]{0}', space=sflag, size = 0x8, scoped, tag = 'scoped memory for tpu_custom_call.1']
    #allocation18 [shape = 'u8[1024]{0}', space=vmem, size = 0x400, scoped, tag = 'input window, operand 14']
    #allocation19 [shape = 'u8[1024]{0}', space=vmem, size = 0x400, scoped, tag = 'input window, operand 15']
    #allocation20 [shape = 's32[2]{0}', space=sflag, size = 0x8, scoped, tag = 'scoped memory for tpu_custom_call.1']
    #allocation21 [shape = 'u8[1024]{0}', space=vmem, size = 0x400, scoped, tag = 'input window, operand 16']
    #allocation22 [shape = 'u8[1024]{0}', space=vmem, size = 0x400, scoped, tag = 'input window, operand 17']
    #allocation23 [shape = 's32[2]{0}', space=sflag, size = 0x8, scoped, tag = 'scoped memory for tpu_custom_call.1']
    #allocation24 [shape = 'u8[32768]{0}', space=vmem, size = 0x8000, scoped, tag = 'input window, operand 18']
    #allocation25 [shape = 'u8[1024]{0}', space=vmem, size = 0x400, scoped, tag = 'input window, operand 21']
    #allocation26 [shape = 's32[2]{0}', space=sflag, size = 0x8, scoped, tag = 'scoped memory for tpu_custom_call.1']
    #allocation27 [shape = 'u8[8192]{0}', space=vmem, size = 0x2000, scoped, tag = 'output window, operand 0, single buffered']
    %32 = vsyncpa [#allocation5], 0
    %33 = vsyncpa [#allocation8], 0
    %s34 = scalar_lea.sflag [#allocation8], 1
    %35 = vsyncpa %s34, 0
    %36 = vsyncpa [#allocation11], 0
    %s37 = scalar_lea.sflag [#allocation11], 1
    %38 = vsyncpa %s37, 0
    %39 = vsyncpa [#allocation14], 0
    %s40 = scalar_lea.sflag [#allocation14], 1
    %41 = vsyncpa %s40, 0
    %42 = vsyncpa [#allocation17], 0
    %s43 = scalar_lea.sflag [#allocation17], 1
    %44 = vsyncpa %s43, 0
    %45 = vsyncpa [#allocation20], 0
    %s46 = scalar_lea.sflag [#allocation20], 1
    %47 = vsyncpa %s46, 0
    %48 = vsyncpa [#allocation23], 0
    %s49 = scalar_lea.sflag [#allocation23], 1
    %50 = vsyncpa %s49, 0
    %51 = vsyncpa [#allocation26], 0
    %s52 = scalar_lea.sflag [#allocation26], 1
    %53 = vsyncpa %s52, 0
    %54 = vsyncpa [#allocation6], 0
    loop: start=0, step=1, limit=6
    $region2: #{tpu_custom_call.1} parent=1 // loop_pre_header
      _
    $region3: #{tpu_custom_call.1} parent=1 // loop_header
      %s56 = sphi 0, %s60
      %p57 = scmp.ge.s32.totalorder %s56, 6
      %s63 = sphi 0, %s75
      %s64 = sphi 0, %s71
      %s65 = sphi 0, %s63
      %s66 = sphi 0, %s64
      %s67 = sphi 0, %s65
      %s68 = sphi 0, %s66
      %s78 = sphi 0, %s80
      %s81 = sphi 0, %s78
      %s82 = sphi 0, %s81
      %s98 = sphi 0, %s82
      %s104 = sphi 0, %s106
      %s107 = sphi 0, %s104
      %s108 = sphi 0, %s107
      %s124 = sphi 0, %s108
      %s130 = sphi 0, %s132
      %s133 = sphi 0, %s130
      %s134 = sphi 0, %s133
      %s150 = sphi 0, %s134
      %s156 = sphi 0, %s158
      %s159 = sphi 0, %s156
      %s160 = sphi 0, %s159
      %s176 = sphi 0, %s160
      %s182 = sphi 0, %s184
      %s185 = sphi 0, %s182
      %s186 = sphi 0, %s185
      %s202 = sphi 0, %s186
      %s208 = sphi 0, %s210
      %s211 = sphi 0, %s208
      %s212 = sphi 0, %s211
      %s228 = sphi 0, %s212
      %s234 = sphi 0, %s236
      %s237 = sphi 0, %s234
      %s238 = sphi 0, %s237
      %s254 = sphi 0, %s238
      %s260 = sphi 0, %s262
      %s263 = sphi 0, %s260
      %s264 = sphi 0, %s263
      %s280 = sphi 0, %s264
      %s286 = sphi 0, %s288
      %s289 = sphi 0, %s286
      %s290 = sphi 0, %s289
      %s306 = sphi 0, %s290
      %s312 = sphi 0, %s314
      %s315 = sphi 0, %s312
      %s316 = sphi 0, %s315
      %s332 = sphi 0, %s316
      %s338 = sphi 0, %s340
      %s341 = sphi 0, %s338
      %s342 = sphi 0, %s341
      %s358 = sphi 0, %s342
      %s364 = sphi 0, %s366
      %s367 = sphi 0, %s364
      %s368 = sphi 0, %s367
      %s384 = sphi 0, %s368
      %s390 = sphi 0, %s392
      %s393 = sphi 0, %s390
      %s394 = sphi 0, %s393
      %s410 = sphi 0, %s394
      %s416 = sphi 0, %s418
      %s419 = sphi 0, %s416
      %s420 = sphi 0, %s419
      %s436 = sphi 0, %s420
      %s442 = sphi 0, %s444
      %s445 = sphi 0, %s442
      %s446 = sphi 0, %s445
      %s462 = sphi 0, %s446
      %s468 = sphi 0, %s470
      %s471 = sphi 0, %s468
      %s472 = sphi 0, %s471
      %s488 = sphi 0, %s472
      %s494 = sphi 0, %s496
      %s497 = sphi 0, %s494
      %s498 = sphi 0, %s497
      %s514 = sphi 0, %s498
      %s520 = sphi 0, %s522
      %s523 = sphi 0, %s520
      %s524 = sphi 0, %s523
      %s540 = sphi 0, %s524
      %s546 = sphi 0, %s548
      %s549 = sphi 0, %s546
      %s550 = sphi 0, %s549
      %s566 = sphi 0, %s550
      %s572 = sphi 0, %s574
      %s575 = sphi 0, %s572
      %s576 = sphi 0, %s575
      %s592 = sphi 0, %s576
      %s598 = sphi 0, %s600
      %s601 = sphi 0, %s598
      %s602 = sphi 0, %s601
      %s618 = sphi 0, %s602
      %s624 = sphi 0, %s626
      %s627 = sphi 0, %s624
      %s628 = sphi 0, %s627
      %s644 = sphi 0, %s628
      %s648 = sphi 0, %s648
      %s650 = sphi 0, %s648
      %s651 = sphi 0, %s650
      %s665 = sphi 0, %s651
      %s669 = sphi 0, %s669
      %s671 = sphi 0, %s669
      %s672 = sphi 0, %s671
      %s686 = sphi 0, %s672
      %s690 = sphi 0, %s690
      %s692 = sphi 0, %s690
      %s693 = sphi 0, %s692
      %s707 = sphi 0, %s693
      %s713 = sphi 0, %s715
      %s716 = sphi 0, %s713
      %s717 = sphi 0, %s716
      %s733 = sphi 0, %s717
    $region4: #{tpu_custom_call.1} parent=1 // loop_header_branch
      %59 = sbr.rel (%p57) target = $region8
    $region5: #{tpu_custom_call.1} parent=1 // loop_body
      %s61 = ssub.s32 %s56, 1
      %s62 = ssub.s32 %s56, 2
      %s69 = sadd.s32 1, %s64
      %p70 = scmp.ge.s32.totalorder %s69, 4
      %s71 = scalar_select %p70, 0, %s69
      %s72 = sadd.s32 1, %s63
      %s73 = scalar_select %p70, %s72, %s63
      %p74 = scmp.ge.s32.totalorder %s73, 1
      %s75 = scalar_select %p74, 0, %s73
      %s76 = ssub.s32 %s63, %s75
      %p77 = scmp.eq.s32.totalorder %s76, 0
      %s79 = sadd.s32 %s78, 1
      %s80 = scalar_select %p77, %s78, %s79
      %p83 = pneg %p77
      %p84 = scmp.eq.s32.totalorder %s56, 3
      %p85 = por %p83, %p84
      %p86 = scmp.ne.s32.totalorder %s78, %s81
      %p87 = scmp.eq.s32.totalorder %s56, 0
      %p88 = por %p86, %p87
      %p89 = scmp.ne.s32.totalorder %s78, %s81
      %p90 = scmp.eq.s32.totalorder %s61, 3
      %p91 = por %p89, %p90
      %p92 = scmp.ne.s32.totalorder %s81, %s82
      %p93 = scmp.eq.s32.totalorder %s61, 0
      %p94 = por %p92, %p93
      %p95 = scmp.ne.s32.totalorder %s81, %s82
      %p96 = scmp.eq.s32.totalorder %s62, 3
      %p97 = por %p95, %p96
      %p99 = scmp.ne.s32.totalorder %s82, %s98
      %p100 = scmp.eq.s32.totalorder %s62, 0
      %p101 = por %p99, %p100
      %s102 = ssub.s32 %s64, %s71
      %p103 = scmp.eq.s32.totalorder %s102, 0
      %s105 = sadd.s32 %s104, 1
      %s106 = scalar_select %p103, %s104, %s105
      %p109 = pneg %p103
      %p110 = scmp.eq.s32.totalorder %s56, 3
      %p111 = por %p109, %p110
      %p112 = scmp.ne.s32.totalorder %s104, %s107
      %p113 = scmp.eq.s32.totalorder %s56, 0
      %p114 = por %p112, %p113
      %p115 = scmp.ne.s32.totalorder %s104, %s107
      %p116 = scmp.eq.s32.totalorder %s61, 3
      %p117 = por %p115, %p116
      %p118 = scmp.ne.s32.totalorder %s107, %s108
      %p119 = scmp.eq.s32.totalorder %s61, 0
      %p120 = por %p118, %p119
      %p121 = scmp.ne.s32.totalorder %s107, %s108
      %p122 = scmp.eq.s32.totalorder %s62, 3
      %p123 = por %p121, %p122
      %p125 = scmp.ne.s32.totalorder %s108, %s124
      %p126 = scmp.eq.s32.totalorder %s62, 0
      %p127 = por %p125, %p126
      %s128 = ssub.s32 %s64, %s71
      %p129 = scmp.eq.s32.totalorder %s128, 0
      %s131 = sadd.s32 %s130, 1
      %s132 = scalar_select %p129, %s130, %s131
      %p135 = pneg %p129
      %p136 = scmp.eq.s32.totalorder %s56, 3
      %p137 = por %p135, %p136
      %p138 = scmp.ne.s32.totalorder %s130, %s133
      %p139 = scmp.eq.s32.totalorder %s56, 0
      %p140 = por %p138, %p139
      %p141 = scmp.ne.s32.totalorder %s130, %s133
      %p142 = scmp.eq.s32.totalorder %s61, 3
      %p143 = por %p141, %p142
      %p144 = scmp.ne.s32.totalorder %s133, %s134
      %p145 = scmp.eq.s32.totalorder %s61, 0
      %p146 = por %p144, %p145
      %p147 = scmp.ne.s32.totalorder %s133, %s134
      %p148 = scmp.eq.s32.totalorder %s62, 3
      %p149 = por %p147, %p148
      %p151 = scmp.ne.s32.totalorder %s134, %s150
      %p152 = scmp.eq.s32.totalorder %s62, 0
      %p153 = por %p151, %p152
      %s154 = ssub.s32 %s64, %s71
      %p155 = scmp.eq.s32.totalorder %s154, 0
      %s157 = sadd.s32 %s156, 1
      %s158 = scalar_select %p155, %s156, %s157
      %p161 = pneg %p155
      %p162 = scmp.eq.s32.totalorder %s56, 3
      %p163 = por %p161, %p162
      %p164 = scmp.ne.s32.totalorder %s156, %s159
      %p165 = scmp.eq.s32.totalorder %s56, 0
      %p166 = por %p164, %p165
      %p167 = scmp.ne.s32.totalorder %s156, %s159
      %p168 = scmp.eq.s32.totalorder %s61, 3
      %p169 = por %p167, %p168
      %p170 = scmp.ne.s32.totalorder %s159, %s160
      %p171 = scmp.eq.s32.totalorder %s61, 0
      %p172 = por %p170, %p171
      %p173 = scmp.ne.s32.totalorder %s159, %s160
      %p174 = scmp.eq.s32.totalorder %s62, 3
      %p175 = por %p173, %p174
      %p177 = scmp.ne.s32.totalorder %s160, %s176
      %p178 = scmp.eq.s32.totalorder %s62, 0
      %p179 = por %p177, %p178
      %s180 = ssub.s32 %s64, %s71
      %p181 = scmp.eq.s32.totalorder %s180, 0
      %s183 = sadd.s32 %s182, 1
      %s184 = scalar_select %p181, %s182, %s183
      %p187 = pneg %p181
      %p188 = scmp.eq.s32.totalorder %s56, 3
      %p189 = por %p187, %p188
      %p190 = scmp.ne.s32.totalorder %s182, %s185
      %p191 = scmp.eq.s32.totalorder %s56, 0
      %p192 = por %p190, %p191
      %p193 = scmp.ne.s32.totalorder %s182, %s185
      %p194 = scmp.eq.s32.totalorder %s61, 3
      %p195 = por %p193, %p194
      %p196 = scmp.ne.s32.totalorder %s185, %s186
      %p197 = scmp.eq.s32.totalorder %s61, 0
      %p198 = por %p196, %p197
      %p199 = scmp.ne.s32.totalorder %s185, %s186
      %p200 = scmp.eq.s32.totalorder %s62, 3
      %p201 = por %p199, %p200
      %p203 = scmp.ne.s32.totalorder %s186, %s202
      %p204 = scmp.eq.s32.totalorder %s62, 0
      %p205 = por %p203, %p204
      %s206 = ssub.s32 %s64, %s71
      %p207 = scmp.eq.s32.totalorder %s206, 0
      %s209 = sadd.s32 %s208, 1
      %s210 = scalar_select %p207, %s208, %s209
      %p213 = pneg %p207
      %p214 = scmp.eq.s32.totalorder %s56, 3
      %p215 = por %p213, %p214
      %p216 = scmp.ne.s32.totalorder %s208, %s211
      %p217 = scmp.eq.s32.totalorder %s56, 0
      %p218 = por %p216, %p217
      %p219 = scmp.ne.s32.totalorder %s208, %s211
      %p220 = scmp.eq.s32.totalorder %s61, 3
      %p221 = por %p219, %p220
      %p222 = scmp.ne.s32.totalorder %s211, %s212
      %p223 = scmp.eq.s32.totalorder %s61, 0
      %p224 = por %p222, %p223
      %p225 = scmp.ne.s32.totalorder %s211, %s212
      %p226 = scmp.eq.s32.totalorder %s62, 3
      %p227 = por %p225, %p226
      %p229 = scmp.ne.s32.totalorder %s212, %s228
      %p230 = scmp.eq.s32.totalorder %s62, 0
      %p231 = por %p229, %p230
      %s232 = ssub.s32 %s64, %s71
      %p233 = scmp.eq.s32.totalorder %s232, 0
      %s235 = sadd.s32 %s234, 1
      %s236 = scalar_select %p233, %s234, %s235
      %p239 = pneg %p233
      %p240 = scmp.eq.s32.totalorder %s56, 3
      %p241 = por %p239, %p240
      %p242 = scmp.ne.s32.totalorder %s234, %s237
      %p243 = scmp.eq.s32.totalorder %s56, 0
      %p244 = por %p242, %p243
      %p245 = scmp.ne.s32.totalorder %s234, %s237
      %p246 = scmp.eq.s32.totalorder %s61, 3
      %p247 = por %p245, %p246
      %p248 = scmp.ne.s32.totalorder %s237, %s238
      %p249 = scmp.eq.s32.totalorder %s61, 0
      %p250 = por %p248, %p249
      %p251 = scmp.ne.s32.totalorder %s237, %s238
      %p252 = scmp.eq.s32.totalorder %s62, 3
      %p253 = por %p251, %p252
      %p255 = scmp.ne.s32.totalorder %s238, %s254
      %p256 = scmp.eq.s32.totalorder %s62, 0
      %p257 = por %p255, %p256
      %s258 = ssub.s32 %s64, %s71
      %p259 = scmp.eq.s32.totalorder %s258, 0
      %s261 = sadd.s32 %s260, 1
      %s262 = scalar_select %p259, %s260, %s261
      %p265 = pneg %p259
      %p266 = scmp.eq.s32.totalorder %s56, 3
      %p267 = por %p265, %p266
      %p268 = scmp.ne.s32.totalorder %s260, %s263
      %p269 = scmp.eq.s32.totalorder %s56, 0
      %p270 = por %p268, %p269
      %p271 = scmp.ne.s32.totalorder %s260, %s263
      %p272 = scmp.eq.s32.totalorder %s61, 3
      %p273 = por %p271, %p272
      %p274 = scmp.ne.s32.totalorder %s263, %s264
      %p275 = scmp.eq.s32.totalorder %s61, 0
      %p276 = por %p274, %p275
      %p277 = scmp.ne.s32.totalorder %s263, %s264
      %p278 = scmp.eq.s32.totalorder %s62, 3
      %p279 = por %p277, %p278
      %p281 = scmp.ne.s32.totalorder %s264, %s280
      %p282 = scmp.eq.s32.totalorder %s62, 0
      %p283 = por %p281, %p282
      %s284 = ssub.s32 %s64, %s71
      %p285 = scmp.eq.s32.totalorder %s284, 0
      %s287 = sadd.s32 %s286, 1
      %s288 = scalar_select %p285, %s286, %s287
      %p291 = pneg %p285
      %p292 = scmp.eq.s32.totalorder %s56, 3
      %p293 = por %p291, %p292
      %p294 = scmp.ne.s32.totalorder %s286, %s289
      %p295 = scmp.eq.s32.totalorder %s56, 0
      %p296 = por %p294, %p295
      %p297 = scmp.ne.s32.totalorder %s286, %s289
      %p298 = scmp.eq.s32.totalorder %s61, 3
      %p299 = por %p297, %p298
      %p300 = scmp.ne.s32.totalorder %s289, %s290
      %p301 = scmp.eq.s32.totalorder %s61, 0
      %p302 = por %p300, %p301
      %p303 = scmp.ne.s32.totalorder %s289, %s290
      %p304 = scmp.eq.s32.totalorder %s62, 3
      %p305 = por %p303, %p304
      %p307 = scmp.ne.s32.totalorder %s290, %s306
      %p308 = scmp.eq.s32.totalorder %s62, 0
      %p309 = por %p307, %p308
      %s310 = ssub.s32 %s64, %s71
      %p311 = scmp.eq.s32.totalorder %s310, 0
      %s313 = sadd.s32 %s312, 1
      %s314 = scalar_select %p311, %s312, %s313
      %p317 = pneg %p311
      %p318 = scmp.eq.s32.totalorder %s56, 3
      %p319 = por %p317, %p318
      %p320 = scmp.ne.s32.totalorder %s312, %s315
      %p321 = scmp.eq.s32.totalorder %s56, 0
      %p322 = por %p320, %p321
      %p323 = scmp.ne.s32.totalorder %s312, %s315
      %p324 = scmp.eq.s32.totalorder %s61, 3
      %p325 = por %p323, %p324
      %p326 = scmp.ne.s32.totalorder %s315, %s316
      %p327 = scmp.eq.s32.totalorder %s61, 0
      %p328 = por %p326, %p327
      %p329 = scmp.ne.s32.totalorder %s315, %s316
      %p330 = scmp.eq.s32.totalorder %s62, 3
      %p331 = por %p329, %p330
      %p333 = scmp.ne.s32.totalorder %s316, %s332
      %p334 = scmp.eq.s32.totalorder %s62, 0
      %p335 = por %p333, %p334
      %s336 = ssub.s32 %s64, %s71
      %p337 = scmp.eq.s32.totalorder %s336, 0
      %s339 = sadd.s32 %s338, 1
      %s340 = scalar_select %p337, %s338, %s339
      %p343 = pneg %p337
      %p344 = scmp.eq.s32.totalorder %s56, 3
      %p345 = por %p343, %p344
      %p346 = scmp.ne.s32.totalorder %s338, %s341
      %p347 = scmp.eq.s32.totalorder %s56, 0
      %p348 = por %p346, %p347
      %p349 = scmp.ne.s32.totalorder %s338, %s341
      %p350 = scmp.eq.s32.totalorder %s61, 3
      %p351 = por %p349, %p350
      %p352 = scmp.ne.s32.totalorder %s341, %s342
      %p353 = scmp.eq.s32.totalorder %s61, 0
      %p354 = por %p352, %p353
      %p355 = scmp.ne.s32.totalorder %s341, %s342
      %p356 = scmp.eq.s32.totalorder %s62, 3
      %p357 = por %p355, %p356
      %p359 = scmp.ne.s32.totalorder %s342, %s358
      %p360 = scmp.eq.s32.totalorder %s62, 0
      %p361 = por %p359, %p360
      %s362 = ssub.s32 %s64, %s71
      %p363 = scmp.eq.s32.totalorder %s362, 0
      %s365 = sadd.s32 %s364, 1
      %s366 = scalar_select %p363, %s364, %s365
      %p369 = pneg %p363
      %p370 = scmp.eq.s32.totalorder %s56, 3
      %p371 = por %p369, %p370
      %p372 = scmp.ne.s32.totalorder %s364, %s367
      %p373 = scmp.eq.s32.totalorder %s56, 0
      %p374 = por %p372, %p373
      %p375 = scmp.ne.s32.totalorder %s364, %s367
      %p376 = scmp.eq.s32.totalorder %s61, 3
      %p377 = por %p375, %p376
      %p378 = scmp.ne.s32.totalorder %s367, %s368
      %p379 = scmp.eq.s32.totalorder %s61, 0
      %p380 = por %p378, %p379
      %p381 = scmp.ne.s32.totalorder %s367, %s368
      %p382 = scmp.eq.s32.totalorder %s62, 3
      %p383 = por %p381, %p382
      %p385 = scmp.ne.s32.totalorder %s368, %s384
      %p386 = scmp.eq.s32.totalorder %s62, 0
      %p387 = por %p385, %p386
      %s388 = ssub.s32 %s64, %s71
      %p389 = scmp.eq.s32.totalorder %s388, 0
      %s391 = sadd.s32 %s390, 1
      %s392 = scalar_select %p389, %s390, %s391
      %p395 = pneg %p389
      %p396 = scmp.eq.s32.totalorder %s56, 3
      %p397 = por %p395, %p396
      %p398 = scmp.ne.s32.totalorder %s390, %s393
      %p399 = scmp.eq.s32.totalorder %s56, 0
      %p400 = por %p398, %p399
      %p401 = scmp.ne.s32.totalorder %s390, %s393
      %p402 = scmp.eq.s32.totalorder %s61, 3
      %p403 = por %p401, %p402
      %p404 = scmp.ne.s32.totalorder %s393, %s394
      %p405 = scmp.eq.s32.totalorder %s61, 0
      %p406 = por %p404, %p405
      %p407 = scmp.ne.s32.totalorder %s393, %s394
      %p408 = scmp.eq.s32.totalorder %s62, 3
      %p409 = por %p407, %p408
      %p411 = scmp.ne.s32.totalorder %s394, %s410
      %p412 = scmp.eq.s32.totalorder %s62, 0
      %p413 = por %p411, %p412
      %s414 = ssub.s32 %s64, %s71
      %p415 = scmp.eq.s32.totalorder %s414, 0
      %s417 = sadd.s32 %s416, 1
      %s418 = scalar_select %p415, %s416, %s417
      %p421 = pneg %p415
      %p422 = scmp.eq.s32.totalorder %s56, 3
      %p423 = por %p421, %p422
      %p424 = scmp.ne.s32.totalorder %s416, %s419
      %p425 = scmp.eq.s32.totalorder %s56, 0
      %p426 = por %p424, %p425
      %p427 = scmp.ne.s32.totalorder %s416, %s419
      %p428 = scmp.eq.s32.totalorder %s61, 3
      %p429 = por %p427, %p428
      %p430 = scmp.ne.s32.totalorder %s419, %s420
      %p431 = scmp.eq.s32.totalorder %s61, 0
      %p432 = por %p430, %p431
      %p433 = scmp.ne.s32.totalorder %s419, %s420
      %p434 = scmp.eq.s32.totalorder %s62, 3
      %p435 = por %p433, %p434
      %p437 = scmp.ne.s32.totalorder %s420, %s436
      %p438 = scmp.eq.s32.totalorder %s62, 0
      %p439 = por %p437, %p438
      %s440 = ssub.s32 %s64, %s71
      %p441 = scmp.eq.s32.totalorder %s440, 0
      %s443 = sadd.s32 %s442, 1
      %s444 = scalar_select %p441, %s442, %s443
      %p447 = pneg %p441
      %p448 = scmp.eq.s32.totalorder %s56, 3
      %p449 = por %p447, %p448
      %p450 = scmp.ne.s32.totalorder %s442, %s445
      %p451 = scmp.eq.s32.totalorder %s56, 0
      %p452 = por %p450, %p451
      %p453 = scmp.ne.s32.totalorder %s442, %s445
      %p454 = scmp.eq.s32.totalorder %s61, 3
      %p455 = por %p453, %p454
      %p456 = scmp.ne.s32.totalorder %s445, %s446
      %p457 = scmp.eq.s32.totalorder %s61, 0
      %p458 = por %p456, %p457
      %p459 = scmp.ne.s32.totalorder %s445, %s446
      %p460 = scmp.eq.s32.totalorder %s62, 3
      %p461 = por %p459, %p460
      %p463 = scmp.ne.s32.totalorder %s446, %s462
      %p464 = scmp.eq.s32.totalorder %s62, 0
      %p465 = por %p463, %p464
      %s466 = ssub.s32 %s64, %s71
      %p467 = scmp.eq.s32.totalorder %s466, 0
      %s469 = sadd.s32 %s468, 1
      %s470 = scalar_select %p467, %s468, %s469
      %p473 = pneg %p467
      %p474 = scmp.eq.s32.totalorder %s56, 3
      %p475 = por %p473, %p474
      %p476 = scmp.ne.s32.totalorder %s468, %s471
      %p477 = scmp.eq.s32.totalorder %s56, 0
      %p478 = por %p476, %p477
      %p479 = scmp.ne.s32.totalorder %s468, %s471
      %p480 = scmp.eq.s32.totalorder %s61, 3
      %p481 = por %p479, %p480
      %p482 = scmp.ne.s32.totalorder %s471, %s472
      %p483 = scmp.eq.s32.totalorder %s61, 0
      %p484 = por %p482, %p483
      %p485 = scmp.ne.s32.totalorder %s471, %s472
      %p486 = scmp.eq.s32.totalorder %s62, 3
      %p487 = por %p485, %p486
      %p489 = scmp.ne.s32.totalorder %s472, %s488
      %p490 = scmp.eq.s32.totalorder %s62, 0
      %p491 = por %p489, %p490
      %s492 = ssub.s32 %s64, %s71
      %p493 = scmp.eq.s32.totalorder %s492, 0
      %s495 = sadd.s32 %s494, 1
      %s496 = scalar_select %p493, %s494, %s495
      %p499 = pneg %p493
      %p500 = scmp.eq.s32.totalorder %s56, 3
      %p501 = por %p499, %p500
      %p502 = scmp.ne.s32.totalorder %s494, %s497
      %p503 = scmp.eq.s32.totalorder %s56, 0
      %p504 = por %p502, %p503
      %p505 = scmp.ne.s32.totalorder %s494, %s497
      %p506 = scmp.eq.s32.totalorder %s61, 3
      %p507 = por %p505, %p506
      %p508 = scmp.ne.s32.totalorder %s497, %s498
      %p509 = scmp.eq.s32.totalorder %s61, 0
      %p510 = por %p508, %p509
      %p511 = scmp.ne.s32.totalorder %s497, %s498
      %p512 = scmp.eq.s32.totalorder %s62, 3
      %p513 = por %p511, %p512
      %p515 = scmp.ne.s32.totalorder %s498, %s514
      %p516 = scmp.eq.s32.totalorder %s62, 0
      %p517 = por %p515, %p516
      %s518 = ssub.s32 %s64, %s71
      %p519 = scmp.eq.s32.totalorder %s518, 0
      %s521 = sadd.s32 %s520, 1
      %s522 = scalar_select %p519, %s520, %s521
      %p525 = pneg %p519
      %p526 = scmp.eq.s32.totalorder %s56, 3
      %p527 = por %p525, %p526
      %p528 = scmp.ne.s32.totalorder %s520, %s523
      %p529 = scmp.eq.s32.totalorder %s56, 0
      %p530 = por %p528, %p529
      %p531 = scmp.ne.s32.totalorder %s520, %s523
      %p532 = scmp.eq.s32.totalorder %s61, 3
      %p533 = por %p531, %p532
      %p534 = scmp.ne.s32.totalorder %s523, %s524
      %p535 = scmp.eq.s32.totalorder %s61, 0
      %p536 = por %p534, %p535
      %p537 = scmp.ne.s32.totalorder %s523, %s524
      %p538 = scmp.eq.s32.totalorder %s62, 3
      %p539 = por %p537, %p538
      %p541 = scmp.ne.s32.totalorder %s524, %s540
      %p542 = scmp.eq.s32.totalorder %s62, 0
      %p543 = por %p541, %p542
      %s544 = ssub.s32 %s64, %s71
      %p545 = scmp.eq.s32.totalorder %s544, 0
      %s547 = sadd.s32 %s546, 1
      %s548 = scalar_select %p545, %s546, %s547
      %p551 = pneg %p545
      %p552 = scmp.eq.s32.totalorder %s56, 3
      %p553 = por %p551, %p552
      %p554 = scmp.ne.s32.totalorder %s546, %s549
      %p555 = scmp.eq.s32.totalorder %s56, 0
      %p556 = por %p554, %p555
      %p557 = scmp.ne.s32.totalorder %s546, %s549
      %p558 = scmp.eq.s32.totalorder %s61, 3
      %p559 = por %p557, %p558
      %p560 = scmp.ne.s32.totalorder %s549, %s550
      %p561 = scmp.eq.s32.totalorder %s61, 0
      %p562 = por %p560, %p561
      %p563 = scmp.ne.s32.totalorder %s549, %s550
      %p564 = scmp.eq.s32.totalorder %s62, 3
      %p565 = por %p563, %p564
      %p567 = scmp.ne.s32.totalorder %s550, %s566
      %p568 = scmp.eq.s32.totalorder %s62, 0
      %p569 = por %p567, %p568
      %s570 = ssub.s32 %s64, %s71
      %p571 = scmp.eq.s32.totalorder %s570, 0
      %s573 = sadd.s32 %s572, 1
      %s574 = scalar_select %p571, %s572, %s573
      %p577 = pneg %p571
      %p578 = scmp.eq.s32.totalorder %s56, 3
      %p579 = por %p577, %p578
      %p580 = scmp.ne.s32.totalorder %s572, %s575
      %p581 = scmp.eq.s32.totalorder %s56, 0
      %p582 = por %p580, %p581
      %p583 = scmp.ne.s32.totalorder %s572, %s575
      %p584 = scmp.eq.s32.totalorder %s61, 3
      %p585 = por %p583, %p584
      %p586 = scmp.ne.s32.totalorder %s575, %s576
      %p587 = scmp.eq.s32.totalorder %s61, 0
      %p588 = por %p586, %p587
      %p589 = scmp.ne.s32.totalorder %s575, %s576
      %p590 = scmp.eq.s32.totalorder %s62, 3
      %p591 = por %p589, %p590
      %p593 = scmp.ne.s32.totalorder %s576, %s592
      %p594 = scmp.eq.s32.totalorder %s62, 0
      %p595 = por %p593, %p594
      %s596 = ssub.s32 %s64, %s71
      %p597 = scmp.eq.s32.totalorder %s596, 0
      %s599 = sadd.s32 %s598, 1
      %s600 = scalar_select %p597, %s598, %s599
      %p603 = pneg %p597
      %p604 = scmp.eq.s32.totalorder %s56, 3
      %p605 = por %p603, %p604
      %p606 = scmp.ne.s32.totalorder %s598, %s601
      %p607 = scmp.eq.s32.totalorder %s56, 0
      %p608 = por %p606, %p607
      %p609 = scmp.ne.s32.totalorder %s598, %s601
      %p610 = scmp.eq.s32.totalorder %s61, 3
      %p611 = por %p609, %p610
      %p612 = scmp.ne.s32.totalorder %s601, %s602
      %p613 = scmp.eq.s32.totalorder %s61, 0
      %p614 = por %p612, %p613
      %p615 = scmp.ne.s32.totalorder %s601, %s602
      %p616 = scmp.eq.s32.totalorder %s62, 3
      %p617 = por %p615, %p616
      %p619 = scmp.ne.s32.totalorder %s602, %s618
      %p620 = scmp.eq.s32.totalorder %s62, 0
      %p621 = por %p619, %p620
      %s622 = ssub.s32 %s64, %s71
      %p623 = scmp.eq.s32.totalorder %s622, 0
      %s625 = sadd.s32 %s624, 1
      %s626 = scalar_select %p623, %s624, %s625
      %p629 = pneg %p623
      %p630 = scmp.eq.s32.totalorder %s56, 3
      %p631 = por %p629, %p630
      %p632 = scmp.ne.s32.totalorder %s624, %s627
      %p633 = scmp.eq.s32.totalorder %s56, 0
      %p634 = por %p632, %p633
      %p635 = scmp.ne.s32.totalorder %s624, %s627
      %p636 = scmp.eq.s32.totalorder %s61, 3
      %p637 = por %p635, %p636
      %p638 = scmp.ne.s32.totalorder %s627, %s628
      %p639 = scmp.eq.s32.totalorder %s61, 0
      %p640 = por %p638, %p639
      %p641 = scmp.ne.s32.totalorder %s627, %s628
      %p642 = scmp.eq.s32.totalorder %s62, 3
      %p643 = por %p641, %p642
      %p645 = scmp.ne.s32.totalorder %s628, %s644
      %p646 = scmp.eq.s32.totalorder %s62, 0
      %p647 = por %p645, %p646
      %s649 = sadd.s32 %s648, 1
      %p652 = scmp.eq.s32.totalorder %s56, 3
      %p653 = scmp.ne.s32.totalorder %s648, %s650
      %p654 = scmp.eq.s32.totalorder %s56, 0
      %p655 = por %p653, %p654
      %p656 = scmp.ne.s32.totalorder %s648, %s650
      %p657 = scmp.eq.s32.totalorder %s61, 3
      %p658 = por %p656, %p657
      %p659 = scmp.ne.s32.totalorder %s650, %s651
      %p660 = scmp.eq.s32.totalorder %s61, 0
      %p661 = por %p659, %p660
      %p662 = scmp.ne.s32.totalorder %s650, %s651
      %p663 = scmp.eq.s32.totalorder %s62, 3
      %p664 = por %p662, %p663
      %p666 = scmp.ne.s32.totalorder %s651, %s665
      %p667 = scmp.eq.s32.totalorder %s62, 0
      %p668 = por %p666, %p667
      %s670 = sadd.s32 %s669, 1
      %p673 = scmp.eq.s32.totalorder %s56, 3
      %p674 = scmp.ne.s32.totalorder %s669, %s671
      %p675 = scmp.eq.s32.totalorder %s56, 0
      %p676 = por %p674, %p675
      %p677 = scmp.ne.s32.totalorder %s669, %s671
      %p678 = scmp.eq.s32.totalorder %s61, 3
      %p679 = por %p677, %p678
      %p680 = scmp.ne.s32.totalorder %s671, %s672
      %p681 = scmp.eq.s32.totalorder %s61, 0
      %p682 = por %p680, %p681
      %p683 = scmp.ne.s32.totalorder %s671, %s672
      %p684 = scmp.eq.s32.totalorder %s62, 3
      %p685 = por %p683, %p684
      %p687 = scmp.ne.s32.totalorder %s672, %s686
      %p688 = scmp.eq.s32.totalorder %s62, 0
      %p689 = por %p687, %p688
      %s691 = sadd.s32 %s690, 1
      %p694 = scmp.eq.s32.totalorder %s56, 3
      %p695 = scmp.ne.s32.totalorder %s690, %s692
      %p696 = scmp.eq.s32.totalorder %s56, 0
      %p697 = por %p695, %p696
      %p698 = scmp.ne.s32.totalorder %s690, %s692
      %p699 = scmp.eq.s32.totalorder %s61, 3
      %p700 = por %p698, %p699
      %p701 = scmp.ne.s32.totalorder %s692, %s693
      %p702 = scmp.eq.s32.totalorder %s61, 0
      %p703 = por %p701, %p702
      %p704 = scmp.ne.s32.totalorder %s692, %s693
      %p705 = scmp.eq.s32.totalorder %s62, 3
      %p706 = por %p704, %p705
      %p708 = scmp.ne.s32.totalorder %s693, %s707
      %p709 = scmp.eq.s32.totalorder %s62, 0
      %p710 = por %p708, %p709
      %s711 = ssub.s32 %s63, %s75
      %p712 = scmp.eq.s32.totalorder %s711, 0
      %s714 = sadd.s32 %s713, 1
      %s715 = scalar_select %p712, %s713, %s714
      %p718 = pneg %p712
      %p719 = scmp.eq.s32.totalorder %s56, 3
      %p720 = por %p718, %p719
      %p721 = scmp.ne.s32.totalorder %s713, %s716
      %p722 = scmp.eq.s32.totalorder %s56, 0
      %p723 = por %p721, %p722
      %p724 = scmp.ne.s32.totalorder %s713, %s716
      %p725 = scmp.eq.s32.totalorder %s61, 3
      %p726 = por %p724, %p725
      %p727 = scmp.ne.s32.totalorder %s716, %s717
      %p728 = scmp.eq.s32.totalorder %s61, 0
      %p729 = por %p727, %p728
      %p730 = scmp.ne.s32.totalorder %s716, %s717
      %p731 = scmp.eq.s32.totalorder %s62, 3
      %p732 = por %p730, %p731
      %p734 = scmp.ne.s32.totalorder %s717, %s733
      %p735 = scmp.eq.s32.totalorder %s62, 0
      %p736 = por %p734, %p735
      %p737 = scmp.le.s32.totalorder 1, %s56
      %p738 = scmp.lt.s32.totalorder %s56, 5
      %p739 = pnand %p737, %p738
      %p740 = pneg %p739
      // Predicated region
      $region9: #{tpu_custom_call.1} parent=5 // pred_check
        _
      $region10: #{tpu_custom_call.1} parent=5 // pred_check_branch
        %742 = sbr.rel (%p739) target = $region12
      $region11: #{tpu_custom_call.1} parent=5 // pred_region
        %s743 = ssub.s32 %s56, 1
        // Predicated region
        $region13: #{tpu_custom_call.1} parent=11 // pred_check
          %p744 = pneg %p94
        $region14: #{tpu_custom_call.1} parent=11 // pred_check_branch
          %746 = sbr.rel (%p744) target = $region16
        $region15: #{tpu_custom_call.1} parent=11 // pred_region
          %s747 = smul.u32 2, %s65
          %749 = vsyncadd [#allocation5], 0
          %s750 = smul.addr %s747, 8
          %s751 = scalar_lea.hbm %s0, %s750
          %s752 = sshll.u32 %s751, 4
          %s753 = int_to_ptr.hbm [resolvable:$true] %s752
          %s754 = sshll.u32 [#allocation4], 4
          %s755 = int_to_ptr.vmem [resolvable:$true] %s754
          %760 = dma.hbm_to_vmem [thread:$0]  %s753, 256, %s755, [#allocation5], 128, 128, 8
        $region16: #{tpu_custom_call.1} parent=11 // pred_fallthru
          _
        // Predicated region
        $region17: #{tpu_custom_call.1} parent=11 // pred_check
          %p761 = pneg %p661
        $region18: #{tpu_custom_call.1} parent=11 // pred_check_branch
          %763 = sbr.rel (%p761) target = $region20
        $region19: #{tpu_custom_call.1} parent=11 // pred_region
          _
        $region20: #{tpu_custom_call.1} parent=11 // pred_fallthru
          _
        // Predicated region
        $region21: #{tpu_custom_call.1} parent=11 // pred_check
          %p764 = pneg %p682
        $region22: #{tpu_custom_call.1} parent=11 // pred_check_branch
          %766 = sbr.rel (%p764) target = $region24
        $region23: #{tpu_custom_call.1} parent=11 // pred_region
          _
        $region24: #{tpu_custom_call.1} parent=11 // pred_fallthru
          _
        // Predicated region
        $region25: #{tpu_custom_call.1} parent=11 // pred_check
          %p767 = pneg %p703
        $region26: #{tpu_custom_call.1} parent=11 // pred_check_branch
          %769 = sbr.rel (%p767) target = $region28
        $region27: #{tpu_custom_call.1} parent=11 // pred_region
          _
        $region28: #{tpu_custom_call.1} parent=11 // pred_fallthru
          _
      $region12: #{tpu_custom_call.1} parent=5 // pred_fallthru
        _
      %p770 = scmp.lt.s32.totalorder %s56, 4
      // Predicated region
      $region29: #{tpu_custom_call.1} parent=5 // pred_check
        %p771 = pneg %p770
      $region30: #{tpu_custom_call.1} parent=5 // pred_check_branch
        %773 = sbr.rel (%p771) target = $region32
      $region31: #{tpu_custom_call.1} parent=5 // pred_region
        // Predicated region
        $region33: #{tpu_custom_call.1} parent=31 // pred_check
          %p774 = pneg %p114
        $region34: #{tpu_custom_call.1} parent=31 // pred_check_branch
          %776 = sbr.rel (%p774) target = $region36
        $region35: #{tpu_custom_call.1} parent=31 // pred_region
          %s777 = sand.u32 %s56, 1
          %s778 = scalar_lea.sflag [#allocation8], %s777
          %s779 = sand.u32 %s104, 1
          %s780 = scalar_lea.vmem [#allocation7], %s779
          %782 = vsyncadd %s778, 0
          %s783 = scalar_lea.hbm %s1, %s64
          %s785 = sshll.u32 %s783, 4
          %s786 = int_to_ptr.hbm [resolvable:$true] %s785
          %s787 = sshll.u32 %s780, 4
          %s788 = int_to_ptr.vmem [resolvable:$true] %s787
          %790 = dma.hbm_to_vmem [thread:$0]  %s786, 16, %s788, %s778
        $region36: #{tpu_custom_call.1} parent=31 // pred_fallthru
          _
        // Predicated region
        $region37: #{tpu_custom_call.1} parent=31 // pred_check
          %p791 = pneg %p140
        $region38: #{tpu_custom_call.1} parent=31 // pred_check_branch
          %793 = sbr.rel (%p791) target = $region40
        $region39: #{tpu_custom_call.1} parent=31 // pred_region
          %s794 = sand.u32 %s56, 1
          %s795 = scalar_lea.sflag [#allocation8], %s794
          %s796 = sand.u32 %s130, 1
          %s797 = scalar_lea.vmem [#allocation9], %s796
          %799 = vsyncadd %s795, 0
          %s800 = scalar_lea.hbm %s2, %s64
          %s802 = sshll.u32 %s800, 4
          %s803 = int_to_ptr.hbm [resolvable:$true] %s802
          %s804 = sshll.u32 %s797, 4
          %s805 = int_to_ptr.vmem [resolvable:$true] %s804
          %807 = dma.hbm_to_vmem [thread:$0]  %s803, 16, %s805, %s795
        $region40: #{tpu_custom_call.1} parent=31 // pred_fallthru
          _
        // Predicated region
        $region41: #{tpu_custom_call.1} parent=31 // pred_check
          %p808 = pneg %p166
        $region42: #{tpu_custom_call.1} parent=31 // pred_check_branch
          %810 = sbr.rel (%p808) target = $region44
        $region43: #{tpu_custom_call.1} parent=31 // pred_region
          %p811 = scmp.lt.s32.totalorder %s64, 3
          %s812 = scalar_select %p811, %s64, 3
          %s813 = smul.addr %s812, 4
          %s814 = smul.addr %s813, 8
          %s815 = scalar_lea.vmem %s3, %s814
        $region44: #{tpu_custom_call.1} parent=31 // pred_fallthru
          _
        // Predicated region
        $region45: #{tpu_custom_call.1} parent=31 // pred_check
          %p816 = pneg %p192
        $region46: #{tpu_custom_call.1} parent=31 // pred_check_branch
          %818 = sbr.rel (%p816) target = $region48
        $region47: #{tpu_custom_call.1} parent=31 // pred_region
          %s819 = sand.u32 %s56, 1
          %s820 = scalar_lea.sflag [#allocation11], %s819
          %s821 = sand.u32 %s182, 1
          %s822 = scalar_lea.vmem [#allocation10], %s821
          %824 = vsyncadd %s820, 0
          %s825 = scalar_lea.hbm %s4, %s64
          %s827 = sshll.u32 %s825, 4
          %s828 = int_to_ptr.hbm [resolvable:$true] %s827
          %s829 = sshll.u32 %s822, 4
          %s830 = int_to_ptr.vmem [resolvable:$true] %s829
          %832 = dma.hbm_to_vmem [thread:$0]  %s828, 16, %s830, %s820
        $region48: #{tpu_custom_call.1} parent=31 // pred_fallthru
          _
        // Predicated region
        $region49: #{tpu_custom_call.1} parent=31 // pred_check
          %p833 = pneg %p218
        $region50: #{tpu_custom_call.1} parent=31 // pred_check_branch
          %835 = sbr.rel (%p833) target = $region52
        $region51: #{tpu_custom_call.1} parent=31 // pred_region
          %p836 = scmp.lt.s32.totalorder %s64, 3
          %s837 = scalar_select %p836, %s64, 3
          %s838 = smul.addr %s837, 4
          %s839 = smul.addr %s838, 8
          %s840 = scalar_lea.vmem %s5, %s839
        $region52: #{tpu_custom_call.1} parent=31 // pred_fallthru
          _
        // Predicated region
        $region53: #{tpu_custom_call.1} parent=31 // pred_check
          %p841 = pneg %p244
        $region54: #{tpu_custom_call.1} parent=31 // pred_check_branch
          %843 = sbr.rel (%p841) target = $region56
        $region55: #{tpu_custom_call.1} parent=31 // pred_region
          %s844 = sand.u32 %s56, 1
          %s845 = scalar_lea.sflag [#allocation11], %s844
          %s846 = sand.u32 %s234, 1
          %s847 = scalar_lea.vmem [#allocation12], %s846
          %849 = vsyncadd %s845, 0
          %s850 = scalar_lea.hbm %s6, %s64
          %s852 = sshll.u32 %s850, 4
          %s853 = int_to_ptr.hbm [resolvable:$true] %s852
          %s854 = sshll.u32 %s847, 4
          %s855 = int_to_ptr.vmem [resolvable:$true] %s854
          %857 = dma.hbm_to_vmem [thread:$0]  %s853, 16, %s855, %s845
        $region56: #{tpu_custom_call.1} parent=31 // pred_fallthru
          _
        // Predicated region
        $region57: #{tpu_custom_call.1} parent=31 // pred_check
          %p858 = pneg %p270
        $region58: #{tpu_custom_call.1} parent=31 // pred_check_branch
          %860 = sbr.rel (%p858) target = $region60
        $region59: #{tpu_custom_call.1} parent=31 // pred_region
          %p861 = scmp.lt.s32.totalorder %s64, 3
          %s862 = scalar_select %p861, %s64, 3
          %s863 = smul.addr %s862, 4
          %s864 = smul.addr %s863, 8
          %s865 = scalar_lea.vmem %s7, %s864
        $region60: #{tpu_custom_call.1} parent=31 // pred_fallthru
          _
        // Predicated region
        $region61: #{tpu_custom_call.1} parent=31 // pred_check
          %p866 = pneg %p296
        $region62: #{tpu_custom_call.1} parent=31 // pred_check_branch
          %868 = sbr.rel (%p866) target = $region64
        $region63: #{tpu_custom_call.1} parent=31 // pred_region
          %p869 = scmp.lt.s32.totalorder %s64, 3
          %s870 = scalar_select %p869, %s64, 3
          %s871 = scalar_lea.vmem %s8, %s870
        $region64: #{tpu_custom_call.1} parent=31 // pred_fallthru
          _
        // Predicated region
        $region65: #{tpu_custom_call.1} parent=31 // pred_check
          %p872 = pneg %p322
        $region66: #{tpu_custom_call.1} parent=31 // pred_check_branch
          %874 = sbr.rel (%p872) target = $region68
        $region67: #{tpu_custom_call.1} parent=31 // pred_region
          %s875 = sand.u32 %s56, 1
          %s876 = scalar_lea.sflag [#allocation14], %s875
          %s877 = sand.u32 %s312, 1
          %s878 = smul.addr %s877, 32
          %s879 = scalar_lea.vmem [#allocation13], %s878
          %881 = vsyncadd %s876, 0
          %s882 = smul.addr %s64, 4
          %s883 = smul.addr %s882, 8
          %s884 = scalar_lea.hbm %s9, %s883
          %s885 = sshll.u32 %s884, 4
          %s886 = int_to_ptr.hbm [resolvable:$true] %s885
          %s887 = sshll.u32 %s879, 4
          %s888 = int_to_ptr.vmem [resolvable:$true] %s887
          %893 = dma.hbm_to_vmem [thread:$0]  %s886, 512, %s888, %s876, 128, 128, 8
        $region68: #{tpu_custom_call.1} parent=31 // pred_fallthru
          _
        // Predicated region
        $region69: #{tpu_custom_call.1} parent=31 // pred_check
          %p894 = pneg %p348
        $region70: #{tpu_custom_call.1} parent=31 // pred_check_branch
          %896 = sbr.rel (%p894) target = $region72
        $region71: #{tpu_custom_call.1} parent=31 // pred_region
          %p897 = scmp.lt.s32.totalorder %s64, 3
          %s898 = scalar_select %p897, %s64, 3
          %s899 = scalar_lea.vmem %s10, %s898
        $region72: #{tpu_custom_call.1} parent=31 // pred_fallthru
          _
        // Predicated region
        $region73: #{tpu_custom_call.1} parent=31 // pred_check
          %p900 = pneg %p374
        $region74: #{tpu_custom_call.1} parent=31 // pred_check_branch
          %902 = sbr.rel (%p900) target = $region76
        $region75: #{tpu_custom_call.1} parent=31 // pred_region
          %s903 = sand.u32 %s56, 1
          %s904 = scalar_lea.sflag [#allocation14], %s903
          %s905 = sand.u32 %s364, 1
          %s906 = smul.addr %s905, 32
          %s907 = scalar_lea.vmem [#allocation15], %s906
          %909 = vsyncadd %s904, 0
          %s910 = smul.addr %s64, 4
          %s911 = smul.addr %s910, 8
          %s912 = scalar_lea.hbm %s11, %s911
          %s913 = sshll.u32 %s912, 4
          %s914 = int_to_ptr.hbm [resolvable:$true] %s913
          %s915 = sshll.u32 %s907, 4
          %s916 = int_to_ptr.vmem [resolvable:$true] %s915
          %921 = dma.hbm_to_vmem [thread:$0]  %s914, 512, %s916, %s904, 128, 128, 8
        $region76: #{tpu_custom_call.1} parent=31 // pred_fallthru
          _
        // Predicated region
        $region77: #{tpu_custom_call.1} parent=31 // pred_check
          %p922 = pneg %p400
        $region78: #{tpu_custom_call.1} parent=31 // pred_check_branch
          %924 = sbr.rel (%p922) target = $region80
        $region79: #{tpu_custom_call.1} parent=31 // pred_region
          %s925 = sand.u32 %s56, 1
          %s926 = scalar_lea.sflag [#allocation17], %s925
          %s927 = sand.u32 %s390, 1
          %s928 = smul.addr %s927, 32
          %s929 = scalar_lea.vmem [#allocation16], %s928
          %931 = vsyncadd %s926, 0
          %s932 = smul.addr %s64, 4
          %s933 = smul.addr %s932, 8
          %s934 = scalar_lea.hbm %s12, %s933
          %s935 = sshll.u32 %s934, 4
          %s936 = int_to_ptr.hbm [resolvable:$true] %s935
          %s937 = sshll.u32 %s929, 4
          %s938 = int_to_ptr.vmem [resolvable:$true] %s937
          %943 = dma.hbm_to_vmem [thread:$0]  %s936, 512, %s938, %s926, 128, 128, 8
        $region80: #{tpu_custom_call.1} parent=31 // pred_fallthru
          _
        // Predicated region
        $region81: #{tpu_custom_call.1} parent=31 // pred_check
          %p944 = pneg %p426
        $region82: #{tpu_custom_call.1} parent=31 // pred_check_branch
          %946 = sbr.rel (%p944) target = $region84
        $region83: #{tpu_custom_call.1} parent=31 // pred_region
          %p947 = scmp.lt.s32.totalorder %s64, 3
          %s948 = scalar_select %p947, %s64, 3
          %s949 = scalar_lea.vmem %s13, %s948
        $region84: #{tpu_custom_call.1} parent=31 // pred_fallthru
          _
        // Predicated region
        $region85: #{tpu_custom_call.1} parent=31 // pred_check
          %p950 = pneg %p452
        $region86: #{tpu_custom_call.1} parent=31 // pred_check_branch
          %952 = sbr.rel (%p950) target = $region88
        $region87: #{tpu_custom_call.1} parent=31 // pred_region
          %s953 = sand.u32 %s56, 1
          %s954 = scalar_lea.sflag [#allocation17], %s953
          %s955 = sand.u32 %s442, 1
          %s956 = scalar_lea.vmem [#allocation18], %s955
          %958 = vsyncadd %s954, 0
          %s959 = scalar_lea.hbm %s14, %s64
          %s961 = sshll.u32 %s959, 4
          %s962 = int_to_ptr.hbm [resolvable:$true] %s961
          %s963 = sshll.u32 %s956, 4
          %s964 = int_to_ptr.vmem [resolvable:$true] %s963
          %966 = dma.hbm_to_vmem [thread:$0]  %s962, 16, %s964, %s954
        $region88: #{tpu_custom_call.1} parent=31 // pred_fallthru
          _
        // Predicated region
        $region89: #{tpu_custom_call.1} parent=31 // pred_check
          %p967 = pneg %p478
        $region90: #{tpu_custom_call.1} parent=31 // pred_check_branch
          %969 = sbr.rel (%p967) target = $region92
        $region91: #{tpu_custom_call.1} parent=31 // pred_region
          %s970 = sand.u32 %s56, 1
          %s971 = scalar_lea.sflag [#allocation20], %s970
          %s972 = sand.u32 %s468, 1
          %s973 = scalar_lea.vmem [#allocation19], %s972
          %975 = vsyncadd %s971, 0
          %s976 = scalar_lea.hbm %s15, %s64
          %s978 = sshll.u32 %s976, 4
          %s979 = int_to_ptr.hbm [resolvable:$true] %s978
          %s980 = sshll.u32 %s973, 4
          %s981 = int_to_ptr.vmem [resolvable:$true] %s980
          %983 = dma.hbm_to_vmem [thread:$0]  %s979, 16, %s981, %s971
        $region92: #{tpu_custom_call.1} parent=31 // pred_fallthru
          _
        // Predicated region
        $region93: #{tpu_custom_call.1} parent=31 // pred_check
          %p984 = pneg %p504
        $region94: #{tpu_custom_call.1} parent=31 // pred_check_branch
          %986 = sbr.rel (%p984) target = $region96
        $region95: #{tpu_custom_call.1} parent=31 // pred_region
          %s987 = sand.u32 %s56, 1
          %s988 = scalar_lea.sflag [#allocation20], %s987
          %s989 = sand.u32 %s494, 1
          %s990 = scalar_lea.vmem [#allocation21], %s989
          %992 = vsyncadd %s988, 0
          %s993 = scalar_lea.hbm %s16, %s64
          %s995 = sshll.u32 %s993, 4
          %s996 = int_to_ptr.hbm [resolvable:$true] %s995
          %s997 = sshll.u32 %s990, 4
          %s998 = int_to_ptr.vmem [resolvable:$true] %s997
          %1000 = dma.hbm_to_vmem [thread:$0]  %s996, 16, %s998, %s988
        $region96: #{tpu_custom_call.1} parent=31 // pred_fallthru
          _
        // Predicated region
        $region97: #{tpu_custom_call.1} parent=31 // pred_check
          %p1001 = pneg %p530
        $region98: #{tpu_custom_call.1} parent=31 // pred_check_branch
          %1003 = sbr.rel (%p1001) target = $region100
        $region99: #{tpu_custom_call.1} parent=31 // pred_region
          %s1004 = sand.u32 %s56, 1
          %s1005 = scalar_lea.sflag [#allocation23], %s1004
          %s1006 = sand.u32 %s520, 1
          %s1007 = scalar_lea.vmem [#allocation22], %s1006
          %1009 = vsyncadd %s1005, 0
          %s1010 = scalar_lea.hbm %s17, %s64
          %s1012 = sshll.u32 %s1010, 4
          %s1013 = int_to_ptr.hbm [resolvable:$true] %s1012
          %s1014 = sshll.u32 %s1007, 4
          %s1015 = int_to_ptr.vmem [resolvable:$true] %s1014
          %1017 = dma.hbm_to_vmem [thread:$0]  %s1013, 16, %s1015, %s1005
        $region100: #{tpu_custom_call.1} parent=31 // pred_fallthru
          _
        // Predicated region
        $region101: #{tpu_custom_call.1} parent=31 // pred_check
          %p1018 = pneg %p556
        $region102: #{tpu_custom_call.1} parent=31 // pred_check_branch
          %1020 = sbr.rel (%p1018) target = $region104
        $region103: #{tpu_custom_call.1} parent=31 // pred_region
          %s1021 = sand.u32 %s56, 1
          %s1022 = scalar_lea.sflag [#allocation23], %s1021
          %s1023 = sand.u32 %s546, 1
          %s1024 = smul.addr %s1023, 32
          %s1025 = scalar_lea.vmem [#allocation24], %s1024
          %1027 = vsyncadd %s1022, 0
          %s1028 = smul.addr %s64, 4
          %s1029 = smul.addr %s1028, 8
          %s1030 = scalar_lea.hbm %s18, %s1029
          %s1031 = sshll.u32 %s1030, 4
          %s1032 = int_to_ptr.hbm [resolvable:$true] %s1031
          %s1033 = sshll.u32 %s1025, 4
          %s1034 = int_to_ptr.vmem [resolvable:$true] %s1033
          %1039 = dma.hbm_to_vmem [thread:$0]  %s1032, 512, %s1034, %s1022, 128, 128, 8
        $region104: #{tpu_custom_call.1} parent=31 // pred_fallthru
          _
        // Predicated region
        $region105: #{tpu_custom_call.1} parent=31 // pred_check
          %p1040 = pneg %p582
        $region106: #{tpu_custom_call.1} parent=31 // pred_check_branch
          %1042 = sbr.rel (%p1040) target = $region108
        $region107: #{tpu_custom_call.1} parent=31 // pred_region
          %p1043 = scmp.lt.s32.totalorder %s64, 3
          %s1044 = scalar_select %p1043, %s64, 3
          %s1045 = scalar_lea.vmem %s19, %s1044
        $region108: #{tpu_custom_call.1} parent=31 // pred_fallthru
          _
        // Predicated region
        $region109: #{tpu_custom_call.1} parent=31 // pred_check
          %p1046 = pneg %p608
        $region110: #{tpu_custom_call.1} parent=31 // pred_check_branch
          %1048 = sbr.rel (%p1046) target = $region112
        $region111: #{tpu_custom_call.1} parent=31 // pred_region
          %p1049 = scmp.lt.s32.totalorder %s64, 3
          %s1050 = scalar_select %p1049, %s64, 3
          %s1051 = smul.addr %s1050, 8
          %s1052 = smul.addr %s1051, 8
          %s1053 = scalar_lea.vmem %s20, %s1052
        $region112: #{tpu_custom_call.1} parent=31 // pred_fallthru
          _
        // Predicated region
        $region113: #{tpu_custom_call.1} parent=31 // pred_check
          %p1054 = pneg %p634
        $region114: #{tpu_custom_call.1} parent=31 // pred_check_branch
          %1056 = sbr.rel (%p1054) target = $region116
        $region115: #{tpu_custom_call.1} parent=31 // pred_region
          %s1057 = sand.u32 %s624, 1
          %s1058 = scalar_lea.sflag [#allocation26], %s1057
          %s1059 = sand.u32 %s624, 1
          %s1060 = scalar_lea.vmem [#allocation25], %s1059
          %1062 = vsyncadd %s1058, 0
          %s1063 = scalar_lea.hbm %s21, %s64
          %s1065 = sshll.u32 %s1063, 4
          %s1066 = int_to_ptr.hbm [resolvable:$true] %s1065
          %s1067 = sshll.u32 %s1060, 4
          %s1068 = int_to_ptr.vmem [resolvable:$true] %s1067
          %1070 = dma.hbm_to_vmem [thread:$0]  %s1066, 16, %s1068, %s1058
        $region116: #{tpu_custom_call.1} parent=31 // pred_fallthru
          _
      $region32: #{tpu_custom_call.1} parent=5 // pred_fallthru
        _
      %p1071 = scmp.le.s32.totalorder 1, %s56
      %p1072 = scmp.lt.s32.totalorder %s56, 5
      %p1073 = pnand %p1071, %p1072
      %p1074 = pneg %p1073
      // Predicated region
      $region117: #{tpu_custom_call.1} parent=5 // pred_check
        _
      $region118: #{tpu_custom_call.1} parent=5 // pred_check_branch
        %1076 = sbr.rel (%p1073) target = $region120
      $region119: #{tpu_custom_call.1} parent=5 // pred_region
        %s1077 = ssub.s32 %s56, 1
        // Predicated region
        $region121: #{tpu_custom_call.1} parent=119 // pred_check
          %p1078 = pneg %p94
        $region122: #{tpu_custom_call.1} parent=119 // pred_check_branch
          %1080 = sbr.rel (%p1078) target = $region124
        $region123: #{tpu_custom_call.1} parent=119 // pred_region
          %1082 = dma.done [#allocation5], 256
        $region124: #{tpu_custom_call.1} parent=119 // pred_fallthru
          _
        %s1083 = sand.u32 %s61, 1
        %s1084 = scalar_lea.sflag [#allocation8], %s1083
        %s1085 = sand.u32 %s107, 1
        %s1086 = scalar_lea.vmem [#allocation7], %s1085
        // Predicated region
        $region125: #{tpu_custom_call.1} parent=119 // pred_check
          %p1087 = pneg %p120
        $region126: #{tpu_custom_call.1} parent=119 // pred_check_branch
          %1089 = sbr.rel (%p1087) target = $region128
        $region127: #{tpu_custom_call.1} parent=119 // pred_region
          %1091 = dma.done %s1084, 16
        $region128: #{tpu_custom_call.1} parent=119 // pred_fallthru
          _
        %s1092 = sand.u32 %s61, 1
        %s1093 = scalar_lea.sflag [#allocation8], %s1092
        %s1094 = sand.u32 %s133, 1
        %s1095 = scalar_lea.vmem [#allocation9], %s1094
        // Predicated region
        $region129: #{tpu_custom_call.1} parent=119 // pred_check
          %p1096 = pneg %p146
        $region130: #{tpu_custom_call.1} parent=119 // pred_check_branch
          %1098 = sbr.rel (%p1096) target = $region132
        $region131: #{tpu_custom_call.1} parent=119 // pred_region
          %1100 = dma.done %s1093, 16
        $region132: #{tpu_custom_call.1} parent=119 // pred_fallthru
          _
        %s1101 = sand.u32 %s61, 1
        %s1102 = scalar_lea.sflag [#allocation11], %s1101
        %s1103 = sand.u32 %s185, 1
        %s1104 = scalar_lea.vmem [#allocation10], %s1103
        // Predicated region
        $region133: #{tpu_custom_call.1} parent=119 // pred_check
          %p1105 = pneg %p198
        $region134: #{tpu_custom_call.1} parent=119 // pred_check_branch
          %1107 = sbr.rel (%p1105) target = $region136
        $region135: #{tpu_custom_call.1} parent=119 // pred_region
          %1109 = dma.done %s1102, 16
        $region136: #{tpu_custom_call.1} parent=119 // pred_fallthru
          _
        %s1110 = sand.u32 %s61, 1
        %s1111 = scalar_lea.sflag [#allocation11], %s1110
        %s1112 = sand.u32 %s237, 1
        %s1113 = scalar_lea.vmem [#allocation12], %s1112
        // Predicated region
        $region137: #{tpu_custom_call.1} parent=119 // pred_check
          %p1114 = pneg %p250
        $region138: #{tpu_custom_call.1} parent=119 // pred_check_branch
          %1116 = sbr.rel (%p1114) target = $region140
        $region139: #{tpu_custom_call.1} parent=119 // pred_region
          %1118 = dma.done %s1111, 16
        $region140: #{tpu_custom_call.1} parent=119 // pred_fallthru
          _
        %s1119 = sand.u32 %s61, 1
        %s1120 = scalar_lea.sflag [#allocation14], %s1119
        %s1121 = sand.u32 %s315, 1
        %s1122 = smul.addr %s1121, 32
        %s1123 = scalar_lea.vmem [#allocation13], %s1122
        // Predicated region
        $region141: #{tpu_custom_call.1} parent=119 // pred_check
          %p1124 = pneg %p328
        $region142: #{tpu_custom_call.1} parent=119 // pred_check_branch
          %1126 = sbr.rel (%p1124) target = $region144
        $region143: #{tpu_custom_call.1} parent=119 // pred_region
          %1128 = dma.done %s1120, 512
        $region144: #{tpu_custom_call.1} parent=119 // pred_fallthru
          _
        %s1129 = sand.u32 %s61, 1
        %s1130 = scalar_lea.sflag [#allocation14], %s1129
        %s1131 = sand.u32 %s367, 1
        %s1132 = smul.addr %s1131, 32
        %s1133 = scalar_lea.vmem [#allocation15], %s1132
        // Predicated region
        $region145: #{tpu_custom_call.1} parent=119 // pred_check
          %p1134 = pneg %p380
        $region146: #{tpu_custom_call.1} parent=119 // pred_check_branch
          %1136 = sbr.rel (%p1134) target = $region148
        $region147: #{tpu_custom_call.1} parent=119 // pred_region
          %1138 = dma.done %s1130, 512
        $region148: #{tpu_custom_call.1} parent=119 // pred_fallthru
          _
        %s1139 = sand.u32 %s61, 1
        %s1140 = scalar_lea.sflag [#allocation17], %s1139
        %s1141 = sand.u32 %s393, 1
        %s1142 = smul.addr %s1141, 32
        %s1143 = scalar_lea.vmem [#allocation16], %s1142
        // Predicated region
        $region149: #{tpu_custom_call.1} parent=119 // pred_check
          %p1144 = pneg %p406
        $region150: #{tpu_custom_call.1} parent=119 // pred_check_branch
          %1146 = sbr.rel (%p1144) target = $region152
        $region151: #{tpu_custom_call.1} parent=119 // pred_region
          %1148 = dma.done %s1140, 512
        $region152: #{tpu_custom_call.1} parent=119 // pred_fallthru
          _
        %s1149 = sand.u32 %s61, 1
        %s1150 = scalar_lea.sflag [#allocation17], %s1149
        %s1151 = sand.u32 %s445, 1
        %s1152 = scalar_lea.vmem [#allocation18], %s1151
        // Predicated region
        $region153: #{tpu_custom_call.1} parent=119 // pred_check
          %p1153 = pneg %p458
        $region154: #{tpu_custom_call.1} parent=119 // pred_check_branch
          %1155 = sbr.rel (%p1153) target = $region156
        $region155: #{tpu_custom_call.1} parent=119 // pred_region
          %1157 = dma.done %s1150, 16
        $region156: #{tpu_custom_call.1} parent=119 // pred_fallthru
          _
        %s1158 = sand.u32 %s61, 1
        %s1159 = scalar_lea.sflag [#allocation20], %s1158
        %s1160 = sand.u32 %s471, 1
        %s1161 = scalar_lea.vmem [#allocation19], %s1160
        // Predicated region
        $region157: #{tpu_custom_call.1} parent=119 // pred_check
          %p1162 = pneg %p484
        $region158: #{tpu_custom_call.1} parent=119 // pred_check_branch
          %1164 = sbr.rel (%p1162) target = $region160
        $region159: #{tpu_custom_call.1} parent=119 // pred_region
          %1166 = dma.done %s1159, 16
        $region160: #{tpu_custom_call.1} parent=119 // pred_fallthru
          _
        %s1167 = sand.u32 %s61, 1
        %s1168 = scalar_lea.sflag [#allocation20], %s1167
        %s1169 = sand.u32 %s497, 1
        %s1170 = scalar_lea.vmem [#allocation21], %s1169
        // Predicated region
        $region161: #{tpu_custom_call.1} parent=119 // pred_check
          %p1171 = pneg %p510
        $region162: #{tpu_custom_call.1} parent=119 // pred_check_branch
          %1173 = sbr.rel (%p1171) target = $region164
        $region163: #{tpu_custom_call.1} parent=119 // pred_region
          %1175 = dma.done %s1168, 16
        $region164: #{tpu_custom_call.1} parent=119 // pred_fallthru
          _
        %s1176 = sand.u32 %s61, 1
        %s1177 = scalar_lea.sflag [#allocation23], %s1176
        %s1178 = sand.u32 %s523, 1
        %s1179 = scalar_lea.vmem [#allocation22], %s1178
        // Predicated region
        $region165: #{tpu_custom_call.1} parent=119 // pred_check
          %p1180 = pneg %p536
        $region166: #{tpu_custom_call.1} parent=119 // pred_check_branch
          %1182 = sbr.rel (%p1180) target = $region168
        $region167: #{tpu_custom_call.1} parent=119 // pred_region
          %1184 = dma.done %s1177, 16
        $region168: #{tpu_custom_call.1} parent=119 // pred_fallthru
          _
        %s1185 = sand.u32 %s61, 1
        %s1186 = scalar_lea.sflag [#allocation23], %s1185
        %s1187 = sand.u32 %s549, 1
        %s1188 = smul.addr %s1187, 32
        %s1189 = scalar_lea.vmem [#allocation24], %s1188
        // Predicated region
        $region169: #{tpu_custom_call.1} parent=119 // pred_check
          %p1190 = pneg %p562
        $region170: #{tpu_custom_call.1} parent=119 // pred_check_branch
          %1192 = sbr.rel (%p1190) target = $region172
        $region171: #{tpu_custom_call.1} parent=119 // pred_region
          %1194 = dma.done %s1186, 512
        $region172: #{tpu_custom_call.1} parent=119 // pred_fallthru
          _
        %s1195 = sand.u32 %s627, 1
        %s1196 = scalar_lea.sflag [#allocation26], %s1195
        %s1197 = sand.u32 %s627, 1
        %s1198 = scalar_lea.vmem [#allocation25], %s1197
        // Predicated region
        $region173: #{tpu_custom_call.1} parent=119 // pred_check
          %p1199 = pneg %p640
        $region174: #{tpu_custom_call.1} parent=119 // pred_check_branch
          %1201 = sbr.rel (%p1199) target = $region176
        $region175: #{tpu_custom_call.1} parent=119 // pred_region
          %1203 = dma.done %s1196, 16
        $region176: #{tpu_custom_call.1} parent=119 // pred_fallthru
          _
        %p1204 = pneg %p94
        %p1205 = pneg %p91
        %s1206 = sand.u32 %s61, 1
        %s1207 = scalar_lea.sflag [#allocation8], %s1206
        %s1208 = sand.u32 %s107, 1
        %s1209 = scalar_lea.vmem [#allocation7], %s1208
        %p1210 = pneg %p120
        %p1211 = pneg %p117
        %s1212 = sand.u32 %s61, 1
        %s1213 = scalar_lea.sflag [#allocation8], %s1212
        %s1214 = sand.u32 %s133, 1
        %s1215 = scalar_lea.vmem [#allocation9], %s1214
        %p1216 = pneg %p146
        %p1217 = pneg %p143
        %p1218 = scmp.lt.s32.totalorder %s66, 3
        %s1219 = scalar_select %p1218, %s66, 3
        %s1220 = smul.addr %s1219, 4
        %s1221 = smul.addr %s1220, 8
        %s1222 = scalar_lea.vmem %s3, %s1221
        %p1223 = pneg %p172
        %p1224 = pneg %p169
        %s1225 = sand.u32 %s61, 1
        %s1226 = scalar_lea.sflag [#allocation11], %s1225
        %s1227 = sand.u32 %s185, 1
        %s1228 = scalar_lea.vmem [#allocation10], %s1227
        %p1229 = pneg %p198
        %p1230 = pneg %p195
        %p1231 = scmp.lt.s32.totalorder %s66, 3
        %s1232 = scalar_select %p1231, %s66, 3
        %s1233 = smul.addr %s1232, 4
        %s1234 = smul.addr %s1233, 8
        %s1235 = scalar_lea.vmem %s5, %s1234
        %p1236 = pneg %p224
        %p1237 = pneg %p221
        %s1238 = sand.u32 %s61, 1
        %s1239 = scalar_lea.sflag [#allocation11], %s1238
        %s1240 = sand.u32 %s237, 1
        %s1241 = scalar_lea.vmem [#allocation12], %s1240
        %p1242 = pneg %p250
        %p1243 = pneg %p247
        %p1244 = scmp.lt.s32.totalorder %s66, 3
        %s1245 = scalar_select %p1244, %s66, 3
        %s1246 = smul.addr %s1245, 4
        %s1247 = smul.addr %s1246, 8
        %s1248 = scalar_lea.vmem %s7, %s1247
        %p1249 = pneg %p276
        %p1250 = pneg %p273
        %p1251 = scmp.lt.s32.totalorder %s66, 3
        %s1252 = scalar_select %p1251, %s66, 3
        %s1253 = scalar_lea.vmem %s8, %s1252
        %p1254 = pneg %p302
        %p1255 = pneg %p299
        %s1256 = sand.u32 %s61, 1
        %s1257 = scalar_lea.sflag [#allocation14], %s1256
        %s1258 = sand.u32 %s315, 1
        %s1259 = smul.addr %s1258, 32
        %s1260 = scalar_lea.vmem [#allocation13], %s1259
        %p1261 = pneg %p328
        %p1262 = pneg %p325
        %p1263 = scmp.lt.s32.totalorder %s66, 3
        %s1264 = scalar_select %p1263, %s66, 3
        %s1265 = scalar_lea.vmem %s10, %s1264
        %p1266 = pneg %p354
        %p1267 = pneg %p351
        %s1268 = sand.u32 %s61, 1
        %s1269 = scalar_lea.sflag [#allocation14], %s1268
        %s1270 = sand.u32 %s367, 1
        %s1271 = smul.addr %s1270, 32
        %s1272 = scalar_lea.vmem [#allocation15], %s1271
        %p1273 = pneg %p380
        %p1274 = pneg %p377
        %s1275 = sand.u32 %s61, 1
        %s1276 = scalar_lea.sflag [#allocation17], %s1275
        %s1277 = sand.u32 %s393, 1
        %s1278 = smul.addr %s1277, 32
        %s1279 = scalar_lea.vmem [#allocation16], %s1278
        %p1280 = pneg %p406
        %p1281 = pneg %p403
        %p1282 = scmp.lt.s32.totalorder %s66, 3
        %s1283 = scalar_select %p1282, %s66, 3
        %s1284 = scalar_lea.vmem %s13, %s1283
        %p1285 = pneg %p432
        %p1286 = pneg %p429
        %s1287 = sand.u32 %s61, 1
        %s1288 = scalar_lea.sflag [#allocation17], %s1287
        %s1289 = sand.u32 %s445, 1
        %s1290 = scalar_lea.vmem [#allocation18], %s1289
        %p1291 = pneg %p458
        %p1292 = pneg %p455
        %s1293 = sand.u32 %s61, 1
        %s1294 = scalar_lea.sflag [#allocation20], %s1293
        %s1295 = sand.u32 %s471, 1
        %s1296 = scalar_lea.vmem [#allocation19], %s1295
        %p1297 = pneg %p484
        %p1298 = pneg %p481
        %s1299 = sand.u32 %s61, 1
        %s1300 = scalar_lea.sflag [#allocation20], %s1299
        %s1301 = sand.u32 %s497, 1
        %s1302 = scalar_lea.vmem [#allocation21], %s1301
        %p1303 = pneg %p510
        %p1304 = pneg %p507
        %s1305 = sand.u32 %s61, 1
        %s1306 = scalar_lea.sflag [#allocation23], %s1305
        %s1307 = sand.u32 %s523, 1
        %s1308 = scalar_lea.vmem [#allocation22], %s1307
        %p1309 = pneg %p536
        %p1310 = pneg %p533
        %s1311 = sand.u32 %s61, 1
        %s1312 = scalar_lea.sflag [#allocation23], %s1311
        %s1313 = sand.u32 %s549, 1
        %s1314 = smul.addr %s1313, 32
        %s1315 = scalar_lea.vmem [#allocation24], %s1314
        %p1316 = pneg %p562
        %p1317 = pneg %p559
        %p1318 = scmp.lt.s32.totalorder %s66, 3
        %s1319 = scalar_select %p1318, %s66, 3
        %s1320 = scalar_lea.vmem %s19, %s1319
        %p1321 = pneg %p588
        %p1322 = pneg %p585
        %p1323 = scmp.lt.s32.totalorder %s66, 3
        %s1324 = scalar_select %p1323, %s66, 3
        %s1325 = smul.addr %s1324, 8
        %s1326 = smul.addr %s1325, 8
        %s1327 = scalar_lea.vmem %s20, %s1326
        %p1328 = pneg %p614
        %p1329 = pneg %p611
        %s1330 = sand.u32 %s627, 1
        %s1331 = scalar_lea.sflag [#allocation26], %s1330
        %s1332 = sand.u32 %s627, 1
        %s1333 = scalar_lea.vmem [#allocation25], %s1332
        %p1334 = pneg %p640
        %p1335 = pneg %p637
        %p1336 = pneg %p661
        %p1337 = pneg %p658
        %p1338 = pneg %p682
        %p1339 = pneg %p679
        %p1340 = pneg %p703
        %p1341 = pneg %p700
        %p1342 = pneg %p729
        %p1343 = pneg %p726
        %s1344 = smul.u32 2, %s65
        %p1345 = scmp.lt.s32.totalorder %s66, 3
        %s1346 = scalar_select %p1345, %s66, 3
        %s1347 = smul.addr %s1346, 4
        %s1348 = smul.addr %s1347, 8
        %s1349 = scalar_lea.vmem %s3, %s1348
        %p1350 = scmp.lt.s32.totalorder %s66, 3
        %s1351 = scalar_select %p1350, %s66, 3
        %s1352 = smul.addr %s1351, 4
        %s1353 = smul.addr %s1352, 8
        %s1354 = scalar_lea.vmem %s5, %s1353
        %p1355 = scmp.lt.s32.totalorder %s66, 3
        %s1356 = scalar_select %p1355, %s66, 3
        %s1357 = smul.addr %s1356, 4
        %s1358 = smul.addr %s1357, 8
        %s1359 = scalar_lea.vmem %s7, %s1358
        %p1360 = scmp.lt.s32.totalorder %s66, 3
        %s1361 = scalar_select %p1360, %s66, 3
        %s1362 = scalar_lea.vmem %s8, %s1361
        %p1363 = scmp.lt.s32.totalorder %s66, 3
        %s1364 = scalar_select %p1363, %s66, 3
        %s1365 = scalar_lea.vmem %s10, %s1364
        %p1366 = scmp.lt.s32.totalorder %s66, 3
        %s1367 = scalar_select %p1366, %s66, 3
        %s1368 = scalar_lea.vmem %s13, %s1367
        %p1369 = scmp.lt.s32.totalorder %s66, 3
        %s1370 = scalar_select %p1369, %s66, 3
        %s1371 = scalar_lea.vmem %s19, %s1370
        %p1372 = scmp.lt.s32.totalorder %s66, 3
        %s1373 = scalar_select %p1372, %s66, 3
        %s1374 = smul.addr %s1373, 8
        %s1375 = smul.addr %s1374, 8
        %s1376 = scalar_lea.vmem %s20, %s1375
        %s1377 = smul.u32 2, %s65
        %p1378 = scmp.eq.s32.totalorder %s66, 0
        // Predicated region
        $region177: #{tpu_custom_call.1} parent=119 // pred_check
          %p1379 = pneg %p1378
        $region178: #{tpu_custom_call.1} parent=119 // pred_check_branch
          %1381 = sbr.rel (%p1379) target = $region180
        $region179: #{tpu_custom_call.1} parent=119 // pred_region
          %v1382 = vld [vmem:[#allocation4] sm:$0xff]
          %v1383 = vld [vmem:[#allocation4 + $0x8] sm:$0xff]
          %vm1384 = vcmask 261120
          %1385 = vst.msk [vmem:[#allocation2] sm:$0xff] %vm1384, %v1382
          %1386 = vst.msk [vmem:[#allocation2 + $0x8] sm:$0xff] %vm1384, %v1383
        $region180: #{tpu_custom_call.1} parent=119 // pred_fallthru
          _
        %v1387 = vld [vmem:[#allocation2] sm:$0xff]
        %v1388 = vld [vmem:[#allocation2 + $0x8] sm:$0xff]
        %v1389 = vld [vmem:[%s1086] sm:$0x1]
        %v1390 = vld [vmem:[%s1095] sm:$0x1]
        %vm1391 = vcmask 261120
        %v1392 = vsel %vm1391, %v1387, 0.0
        %1393 = vadd.xlane.f32.xlu0 %v1392
        %v1394 = vpop.xlane.xlu0 %1393
        %v1395 = vsel %vm1391, %v1388, 0.0
        %1396 = vadd.xlane.f32.xlu0 %v1395
        %v1397 = vpop.xlane.xlu0 %1396
        %v1398 = vrcp.pop 32.0
        %v1399 = vmul.f32 32.0, %v1398
        %v1400 = vsub.f32 1.0, %v1399
        %v1401 = vmul.f32 %v1398, %v1400
        %v1402 = vadd.f32 %v1398, %v1401
        %vm1403 = vweird.f32 %v1398
        %v1404 = vsel %vm1403, %v1398, %v1402
        %v1405 = vmul.f32 %v1394, %v1404
        %v1406 = vmul.f32 %v1397, %v1404
        %v1407 = vsub.f32 %v1387, %v1405
        %v1408 = vsub.f32 %v1388, %v1406
        %v1409 = vmul.f32 %v1407, %v1407
        %v1410 = vmul.f32 %v1408, %v1408
        %v1411 = vsel %vm1391, %v1409, 0.0
        %1412 = vadd.xlane.f32.xlu0 %v1411
        %v1413 = vpop.xlane.xlu0 %1412
        %v1414 = vsel %vm1391, %v1410, 0.0
        %1415 = vadd.xlane.f32.xlu0 %v1414
        %v1416 = vpop.xlane.xlu0 %1415
        %v1417 = vmul.f32 %v1413, %v1404
        %v1418 = vmul.f32 %v1416, %v1404
        %v1419 = vadd.f32 %v1417, 1e-05
        %v1420 = vadd.f32 %v1418, 1e-05
        %v1421 = vrsqrt.pop %v1419
        %v1422 = vmul.f32 %v1421, %v1419
        %v1423 = vmul.f32 %v1422, %v1421
        %v1424 = vmul.f32 0.5, %v1423
        %v1425 = vsub.f32 1.5, %v1424
        %v1426 = vmul.f32 %v1421, %v1425
        %vm1427 = vweird.f32 %v1419
        %vm1428 = vweird.f32 %v1421
        %vm1429 = vmor %vm1427, %vm1428
        %v1430 = vsel %vm1429, %v1421, %v1426
        %v1431 = vrsqrt.pop %v1420
        %v1432 = vmul.f32 %v1431, %v1420
        %v1433 = vmul.f32 %v1432, %v1431
        %v1434 = vmul.f32 0.5, %v1433
        %v1435 = vsub.f32 1.5, %v1434
        %v1436 = vmul.f32 %v1431, %v1435
        %vm1437 = vweird.f32 %v1420
        %vm1438 = vweird.f32 %v1431
        %vm1439 = vmor %vm1437, %vm1438
        %v1440 = vsel %vm1439, %v1431, %v1436
        %v1441 = vmul.f32 %v1407, %v1430
        %v1442 = vmul.f32 %v1408, %v1440
        %v1444 = vperm.slane %v1389, 0
        %v1446 = vmul.f32 %v1441, %v1444
        %v1447 = vmul.f32 %v1442, %v1444
        %v1449 = vperm.slane %v1390, 0
        %v1451 = vadd.f32 %v1446, %v1449
        %v1452 = vadd.f32 %v1447, %v1449
        %v1453 = vld [vmem:[%s1349] sm:$0xff]
        %v1454 = vld [vmem:[%s1349 + $0x8] sm:$0xff]
        %v1455 = vld [vmem:[%s1349 + $0x10] sm:$0xff]
        %v1456 = vld [vmem:[%s1349 + $0x18] sm:$0xff]
        %v1457 = vld [vmem:[%s1104] sm:$0x1]
        %v1459 = vperm.slane %v1457, 0
        %v1462 = vsel %vm1391, %v1451, 0
        %v1465 = vsel %vm1391, %v1452, 0
        %1467 = vmatpush.msra.mxu0 0.0
        %1468 = vmatpush.msra.mxu0 0.0
        %1469 = vmatpush.msra.mxu0 0.0
        %1470 = vmatpush.msra.mxu0 0.0
        %1471 = vmatpush.msra.mxu0 0.0
        %1472 = vmatpush.msra.mxu0 0.0
        %1473 = vmatpush.msra.mxu0 0.0
        %1474 = vmatpush.msra.mxu0 0.0
        %1475 = vmatpush.msra.mxu0 0.0
        %1476 = vmatpush.msra.mxu0 0.0
        %1477 = vmatpush.msra.mxu0 0.0
        %1478 = vmatpush.msra.mxu0 0.0
        %1479 = vmatpush.msra.mxu0 %v1456
        %1480 = vmatpush.msra.mxu0 %v1455
        %1481 = vmatpush.msra.mxu0 %v1454
        %1482 = vmatpush.msra.mxu0 %v1453
        %1483 = vmatmul.f32.gmra.mxu0 %v1462
        %v1484 = vpop.f32.mrf.mxu0
        %v1485 = vadd.f32 %v1459, %v1484
        %1486 = vmatmul.f32.gmra.mxu0 %v1465
        %v1487 = vpop.f32.mrf.mxu0
        %v1488 = vadd.f32 %v1459, %v1487
        %1489 = vdwg.mxu0
        %v1490 = vld [vmem:[%s1354] sm:$0xff]
        %v1491 = vld [vmem:[%s1354 + $0x8] sm:$0xff]
        %v1492 = vld [vmem:[%s1354 + $0x10] sm:$0xff]
        %v1493 = vld [vmem:[%s1354 + $0x18] sm:$0xff]
        %v1494 = vld [vmem:[%s1113] sm:$0x1]
        %v1496 = vperm.slane %v1494, 0
        %1498 = vmatpush.msra.mxu0 0.0
        %1499 = vmatpush.msra.mxu0 0.0
        %1500 = vmatpush.msra.mxu0 0.0
        %1501 = vmatpush.msra.mxu0 0.0
        %1502 = vmatpush.msra.mxu0 0.0
        %1503 = vmatpush.msra.mxu0 0.0
        %1504 = vmatpush.msra.mxu0 0.0
        %1505 = vmatpush.msra.mxu0 0.0
        %1506 = vmatpush.msra.mxu0 0.0
        %1507 = vmatpush.msra.mxu0 0.0
        %1508 = vmatpush.msra.mxu0 0.0
        %1509 = vmatpush.msra.mxu0 0.0
        %1510 = vmatpush.msra.mxu0 %v1493
        %1511 = vmatpush.msra.mxu0 %v1492
        %1512 = vmatpush.msra.mxu0 %v1491
        %1513 = vmatpush.msra.mxu0 %v1490
        %1514 = vmatmul.f32.gmra.mxu0 %v1462
        %v1515 = vpop.f32.mrf.mxu0
        %v1516 = vadd.f32 %v1496, %v1515
        %1517 = vmatmul.f32.gmra.mxu0 %v1465
        %v1518 = vpop.f32.mrf.mxu0
        %v1519 = vadd.f32 %v1496, %v1518
        %1520 = vdwg.mxu0
        %v1521 = vld [vmem:[%s1359] sm:$0xff]
        %v1522 = vld [vmem:[%s1359 + $0x8] sm:$0xff]
        %v1523 = vld [vmem:[%s1359 + $0x10] sm:$0xff]
        %v1524 = vld [vmem:[%s1359 + $0x18] sm:$0xff]
        %v1525 = vld [vmem:[%s1362] sm:$0x1]
        %v1527 = vperm.slane %v1525, 0
        %1529 = vmatpush.msra.mxu0 0.0
        %1530 = vmatpush.msra.mxu0 0.0
        %1531 = vmatpush.msra.mxu0 0.0
        %1532 = vmatpush.msra.mxu0 0.0
        %1533 = vmatpush.msra.mxu0 0.0
        %1534 = vmatpush.msra.mxu0 0.0
        %1535 = vmatpush.msra.mxu0 0.0
        %1536 = vmatpush.msra.mxu0 0.0
        %1537 = vmatpush.msra.mxu0 0.0
        %1538 = vmatpush.msra.mxu0 0.0
        %1539 = vmatpush.msra.mxu0 0.0
        %1540 = vmatpush.msra.mxu0 0.0
        %1541 = vmatpush.msra.mxu0 %v1524
        %1542 = vmatpush.msra.mxu0 %v1523
        %1543 = vmatpush.msra.mxu0 %v1522
        %1544 = vmatpush.msra.mxu0 %v1521
        %1545 = vmatmul.f32.gmra.mxu0 %v1462
        %v1546 = vpop.f32.mrf.mxu0
        %v1547 = vadd.f32 %v1527, %v1546
        %1548 = vmatmul.f32.gmra.mxu0 %v1465
        %v1549 = vpop.f32.mrf.mxu0
        %v1550 = vadd.f32 %v1527, %v1549
        %1551 = vdwg.mxu0
        %v1552 = vmul.f32 %v1485, 0.35355338
        %v1553 = vmul.f32 %v1488, 0.35355338
        %vm1554 = vcmask 64512
        %v1556 = vsel %vm1554, %v1552, 0
        %v1559 = vsel %vm1554, %v1516, 0
        %1561 = vmatpush.xpose.msra.mxu0 0.0
        %1562 = vmatpush.xpose.msra.mxu0 0.0
        %1563 = vmatpush.xpose.msra.mxu0 0.0
        %1564 = vmatpush.xpose.msra.mxu0 0.0
        %1565 = vmatpush.xpose.msra.mxu0 0.0
        %1566 = vmatpush.xpose.msra.mxu0 0.0
        %1567 = vmatpush.xpose.msra.mxu0 0.0
        %1568 = vmatpush.xpose.msra.mxu0 0.0
        %1569 = vmatpush.xpose.msra.mxu0 0.0
        %1570 = vmatpush.xpose.msra.mxu0 0.0
        %1571 = vmatpush.xpose.msra.mxu0 0.0
        %1572 = vmatpush.xpose.msra.mxu0 0.0
        %1573 = vmatpush.xpose.msra.mxu0 0.0
        %1574 = vmatpush.xpose.msra.mxu0 0.0
        %1575 = vmatpush.xpose.msra.mxu0 0.0
        %1576 = vmatpush.xpose.msra.mxu0 %v1559
        %1577 = vmatmul.f32.gmra.mxu0 %v1556
        %v1578 = vpop.f32.mrf.mxu0
        %v1579 = vadd.f32 0.0, %v1578
        %1580 = vdwg.mxu0
        %v1582 = vsel %vm1554, %v1553, 0
        %v1585 = vsel %vm1554, %v1519, 0
        %1587 = vmatpush.xpose.msra.mxu0 0.0
        %1588 = vmatpush.xpose.msra.mxu0 0.0
        %1589 = vmatpush.xpose.msra.mxu0 0.0
        %1590 = vmatpush.xpose.msra.mxu0 0.0
        %1591 = vmatpush.xpose.msra.mxu0 0.0
        %1592 = vmatpush.xpose.msra.mxu0 0.0
        %1593 = vmatpush.xpose.msra.mxu0 0.0
        %1594 = vmatpush.xpose.msra.mxu0 0.0
        %1595 = vmatpush.xpose.msra.mxu0 0.0
        %1596 = vmatpush.xpose.msra.mxu0 0.0
        %1597 = vmatpush.xpose.msra.mxu0 0.0
        %1598 = vmatpush.xpose.msra.mxu0 0.0
        %1599 = vmatpush.xpose.msra.mxu0 0.0
        %1600 = vmatpush.xpose.msra.mxu0 0.0
        %1601 = vmatpush.xpose.msra.mxu0 0.0
        %1602 = vmatpush.xpose.msra.mxu0 %v1585
        %1603 = vmatmul.f32.gmra.mxu0 %v1582
        %v1604 = vpop.f32.mrf.mxu0
        %v1605 = vadd.f32 0.0, %v1604
        %1606 = vdwg.mxu0
        %v1607 = vsel %vm1554, %v1579, -inf
        %1608 = vmax.xlane.f32.xlu0 %v1607
        %v1609 = vpop.xlane.xlu0 %1608
        %v1610 = vsel %vm1554, %v1605, -inf
        %1611 = vmax.xlane.f32.xlu0 %v1610
        %v1612 = vpop.xlane.xlu0 %1611
        %v1613 = vsub.f32 %v1579, %v1609
        %v1614 = vsub.f32 %v1605, %v1612
        %v1615 = vmul.f32 %v1613, 1.442695
        %v1616 = vpow.pop %v1615
        %v1617 = vmul.f32 %v1614, 1.442695
        %v1618 = vpow.pop %v1617
        %v1619 = vsel %vm1554, %v1616, 0.0
        %1620 = vadd.xlane.f32.xlu0 %v1619
        %v1621 = vpop.xlane.xlu0 %1620
        %v1622 = vsel %vm1554, %v1618, 0.0
        %1623 = vadd.xlane.f32.xlu0 %v1622
        %v1624 = vpop.xlane.xlu0 %1623
        %v1625 = vrcp.pop %v1621
        %v1626 = vrcp.pop %v1624
        %v1627 = vmul.f32 %v1616, %v1625
        %v1628 = vmul.f32 %v1618, %v1626
        %v1630 = vsel %vm1554, %v1627, 0
        %1632 = vmatpush.msra.mxu0 0.0
        %1633 = vmatpush.msra.mxu0 0.0
        %1634 = vmatpush.msra.mxu0 0.0
        %1635 = vmatpush.msra.mxu0 0.0
        %1636 = vmatpush.msra.mxu0 0.0
        %1637 = vmatpush.msra.mxu0 0.0
        %1638 = vmatpush.msra.mxu0 0.0
        %1639 = vmatpush.msra.mxu0 0.0
        %1640 = vmatpush.msra.mxu0 0.0
        %1641 = vmatpush.msra.mxu0 0.0
        %1642 = vmatpush.msra.mxu0 0.0
        %1643 = vmatpush.msra.mxu0 0.0
        %1644 = vmatpush.msra.mxu0 0.0
        %1645 = vmatpush.msra.mxu0 0.0
        %1646 = vmatpush.msra.mxu0 0.0
        %1647 = vmatpush.msra.mxu0 %v1547
        %1648 = vmatmul.f32.gmra.mxu0 %v1630
        %v1649 = vpop.f32.mrf.mxu0
        %v1650 = vadd.f32 0.0, %v1649
        %1651 = vdwg.mxu0
        %v1653 = vsel %vm1554, %v1628, 0
        %1655 = vmatpush.msra.mxu0 0.0
        %1656 = vmatpush.msra.mxu0 0.0
        %1657 = vmatpush.msra.mxu0 0.0
        %1658 = vmatpush.msra.mxu0 0.0
        %1659 = vmatpush.msra.mxu0 0.0
        %1660 = vmatpush.msra.mxu0 0.0
        %1661 = vmatpush.msra.mxu0 0.0
        %1662 = vmatpush.msra.mxu0 0.0
        %1663 = vmatpush.msra.mxu0 0.0
        %1664 = vmatpush.msra.mxu0 0.0
        %1665 = vmatpush.msra.mxu0 0.0
        %1666 = vmatpush.msra.mxu0 0.0
        %1667 = vmatpush.msra.mxu0 0.0
        %1668 = vmatpush.msra.mxu0 0.0
        %1669 = vmatpush.msra.mxu0 0.0
        %1670 = vmatpush.msra.mxu0 %v1550
        %1671 = vmatmul.f32.gmra.mxu0 %v1653
        %v1672 = vpop.f32.mrf.mxu0
        %v1673 = vadd.f32 0.0, %v1672
        %1674 = vdwg.mxu0
        %1675 = vrot.lane.b32.xlu0 %v1552, 120
        %v1676 = vpop.permute.xlu0 %1675
        %1677 = vrot.lane.b32.xlu0 %v1516, 120
        %v1678 = vpop.permute.xlu0 %1677
        %v1679 = vsel %vm1554, %v1676, 0
        %v1681 = vsel %vm1554, %v1678, 0
        %1683 = vmatpush.xpose.msra.mxu0 0.0
        %1684 = vmatpush.xpose.msra.mxu0 0.0
        %1685 = vmatpush.xpose.msra.mxu0 0.0
        %1686 = vmatpush.xpose.msra.mxu0 0.0
        %1687 = vmatpush.xpose.msra.mxu0 0.0
        %1688 = vmatpush.xpose.msra.mxu0 0.0
        %1689 = vmatpush.xpose.msra.mxu0 0.0
        %1690 = vmatpush.xpose.msra.mxu0 0.0
        %1691 = vmatpush.xpose.msra.mxu0 0.0
        %1692 = vmatpush.xpose.msra.mxu0 0.0
        %1693 = vmatpush.xpose.msra.mxu0 0.0
        %1694 = vmatpush.xpose.msra.mxu0 0.0
        %1695 = vmatpush.xpose.msra.mxu0 0.0
        %1696 = vmatpush.xpose.msra.mxu0 0.0
        %1697 = vmatpush.xpose.msra.mxu0 0.0
        %1698 = vmatpush.xpose.msra.mxu0 %v1681
        %1699 = vmatmul.f32.gmra.mxu0 %v1679
        %v1700 = vpop.f32.mrf.mxu0
        %v1701 = vadd.f32 0.0, %v1700
        %1702 = vdwg.mxu0
        %1703 = vrot.lane.b32.xlu0 %v1553, 120
        %v1704 = vpop.permute.xlu0 %1703
        %1705 = vrot.lane.b32.xlu0 %v1519, 120
        %v1706 = vpop.permute.xlu0 %1705
        %v1707 = vsel %vm1554, %v1704, 0
        %v1709 = vsel %vm1554, %v1706, 0
        %1711 = vmatpush.xpose.msra.mxu0 0.0
        %1712 = vmatpush.xpose.msra.mxu0 0.0
        %1713 = vmatpush.xpose.msra.mxu0 0.0
        %1714 = vmatpush.xpose.msra.mxu0 0.0
        %1715 = vmatpush.xpose.msra.mxu0 0.0
        %1716 = vmatpush.xpose.msra.mxu0 0.0
        %1717 = vmatpush.xpose.msra.mxu0 0.0
        %1718 = vmatpush.xpose.msra.mxu0 0.0
        %1719 = vmatpush.xpose.msra.mxu0 0.0
        %1720 = vmatpush.xpose.msra.mxu0 0.0
        %1721 = vmatpush.xpose.msra.mxu0 0.0
        %1722 = vmatpush.xpose.msra.mxu0 0.0
        %1723 = vmatpush.xpose.msra.mxu0 0.0
        %1724 = vmatpush.xpose.msra.mxu0 0.0
        %1725 = vmatpush.xpose.msra.mxu0 0.0
        %1726 = vmatpush.xpose.msra.mxu0 %v1709
        %1727 = vmatmul.f32.gmra.mxu0 %v1707
        %v1728 = vpop.f32.mrf.mxu0
        %v1729 = vadd.f32 0.0, %v1728
        %1730 = vdwg.mxu0
        %v1731 = vsel %vm1554, %v1701, -inf
        %1732 = vmax.xlane.f32.xlu0 %v1731
        %v1733 = vpop.xlane.xlu0 %1732
        %v1734 = vsel %vm1554, %v1729, -inf
        %1735 = vmax.xlane.f32.xlu0 %v1734
        %v1736 = vpop.xlane.xlu0 %1735
        %v1737 = vsub.f32 %v1701, %v1733
        %v1738 = vsub.f32 %v1729, %v1736
        %v1739 = vmul.f32 %v1737, 1.442695
        %v1740 = vpow.pop %v1739
        %v1741 = vmul.f32 %v1738, 1.442695
        %v1742 = vpow.pop %v1741
        %v1743 = vsel %vm1554, %v1740, 0.0
        %1744 = vadd.xlane.f32.xlu0 %v1743
        %v1745 = vpop.xlane.xlu0 %1744
        %v1746 = vsel %vm1554, %v1742, 0.0
        %1747 = vadd.xlane.f32.xlu0 %v1746
        %v1748 = vpop.xlane.xlu0 %1747
        %v1749 = vrcp.pop %v1745
        %v1750 = vrcp.pop %v1748
        %v1751 = vmul.f32 %v1740, %v1749
        %v1752 = vmul.f32 %v1742, %v1750
        %1754 = vrot.lane.b32.xlu0 %v1547, 120
        %v1755 = vpop.permute.xlu0 %1754
        %v1758 = vsel %vm1554, %v1751, 0
        %1760 = vmatpush.msra.mxu0 0.0
        %1761 = vmatpush.msra.mxu0 0.0
        %1762 = vmatpush.msra.mxu0 0.0
        %1763 = vmatpush.msra.mxu0 0.0
        %1764 = vmatpush.msra.mxu0 0.0
        %1765 = vmatpush.msra.mxu0 0.0
        %1766 = vmatpush.msra.mxu0 0.0
        %1767 = vmatpush.msra.mxu0 0.0
        %1768 = vmatpush.msra.mxu0 0.0
        %1769 = vmatpush.msra.mxu0 0.0
        %1770 = vmatpush.msra.mxu0 0.0
        %1771 = vmatpush.msra.mxu0 0.0
        %1772 = vmatpush.msra.mxu0 0.0
        %1773 = vmatpush.msra.mxu0 0.0
        %1774 = vmatpush.msra.mxu0 0.0
        %1775 = vmatpush.msra.mxu0 %v1755
        %1776 = vmatmul.f32.gmra.mxu0 %v1758
        %v1777 = vpop.f32.mrf.mxu0
        %v1778 = vadd.f32 0.0, %v1777
        %1779 = vdwg.mxu0
        %1781 = vrot.lane.b32.xlu0 %v1550, 120
        %v1782 = vpop.permute.xlu0 %1781
        %v1785 = vsel %vm1554, %v1752, 0
        %1787 = vmatpush.msra.mxu0 0.0
        %1788 = vmatpush.msra.mxu0 0.0
        %1789 = vmatpush.msra.mxu0 0.0
        %1790 = vmatpush.msra.mxu0 0.0
        %1791 = vmatpush.msra.mxu0 0.0
        %1792 = vmatpush.msra.mxu0 0.0
        %1793 = vmatpush.msra.mxu0 0.0
        %1794 = vmatpush.msra.mxu0 0.0
        %1795 = vmatpush.msra.mxu0 0.0
        %1796 = vmatpush.msra.mxu0 0.0
        %1797 = vmatpush.msra.mxu0 0.0
        %1798 = vmatpush.msra.mxu0 0.0
        %1799 = vmatpush.msra.mxu0 0.0
        %1800 = vmatpush.msra.mxu0 0.0
        %1801 = vmatpush.msra.mxu0 0.0
        %1802 = vmatpush.msra.mxu0 %v1782
        %1803 = vmatmul.f32.gmra.mxu0 %v1785
        %v1804 = vpop.f32.mrf.mxu0
        %v1805 = vadd.f32 0.0, %v1804
        %1806 = vdwg.mxu0
        %1807 = vrot.lane.b32.xlu0 %v1552, 112
        %v1808 = vpop.permute.xlu0 %1807
        %1809 = vrot.lane.b32.xlu0 %v1516, 112
        %v1810 = vpop.permute.xlu0 %1809
        %v1811 = vsel %vm1554, %v1808, 0
        %v1813 = vsel %vm1554, %v1810, 0
        %1815 = vmatpush.xpose.msra.mxu0 0.0
        %1816 = vmatpush.xpose.msra.mxu0 0.0
        %1817 = vmatpush.xpose.msra.mxu0 0.0
        %1818 = vmatpush.xpose.msra.mxu0 0.0
        %1819 = vmatpush.xpose.msra.mxu0 0.0
        %1820 = vmatpush.xpose.msra.mxu0 0.0
        %1821 = vmatpush.xpose.msra.mxu0 0.0
        %1822 = vmatpush.xpose.msra.mxu0 0.0
        %1823 = vmatpush.xpose.msra.mxu0 0.0
        %1824 = vmatpush.xpose.msra.mxu0 0.0
        %1825 = vmatpush.xpose.msra.mxu0 0.0
        %1826 = vmatpush.xpose.msra.mxu0 0.0
        %1827 = vmatpush.xpose.msra.mxu0 0.0
        %1828 = vmatpush.xpose.msra.mxu0 0.0
        %1829 = vmatpush.xpose.msra.mxu0 0.0
        %1830 = vmatpush.xpose.msra.mxu0 %v1813
        %1831 = vmatmul.f32.gmra.mxu0 %v1811
        %v1832 = vpop.f32.mrf.mxu0
        %v1833 = vadd.f32 0.0, %v1832
        %1834 = vdwg.mxu0
        %1835 = vrot.lane.b32.xlu0 %v1553, 112
        %v1836 = vpop.permute.xlu0 %1835
        %1837 = vrot.lane.b32.xlu0 %v1519, 112
        %v1838 = vpop.permute.xlu0 %1837
        %v1839 = vsel %vm1554, %v1836, 0
        %v1841 = vsel %vm1554, %v1838, 0
        %1843 = vmatpush.xpose.msra.mxu0 0.0
        %1844 = vmatpush.xpose.msra.mxu0 0.0
        %1845 = vmatpush.xpose.msra.mxu0 0.0
        %1846 = vmatpush.xpose.msra.mxu0 0.0
        %1847 = vmatpush.xpose.msra.mxu0 0.0
        %1848 = vmatpush.xpose.msra.mxu0 0.0
        %1849 = vmatpush.xpose.msra.mxu0 0.0
        %1850 = vmatpush.xpose.msra.mxu0 0.0
        %1851 = vmatpush.xpose.msra.mxu0 0.0
        %1852 = vmatpush.xpose.msra.mxu0 0.0
        %1853 = vmatpush.xpose.msra.mxu0 0.0
        %1854 = vmatpush.xpose.msra.mxu0 0.0
        %1855 = vmatpush.xpose.msra.mxu0 0.0
        %1856 = vmatpush.xpose.msra.mxu0 0.0
        %1857 = vmatpush.xpose.msra.mxu0 0.0
        %1858 = vmatpush.xpose.msra.mxu0 %v1841
        %1859 = vmatmul.f32.gmra.mxu0 %v1839
        %v1860 = vpop.f32.mrf.mxu0
        %v1861 = vadd.f32 0.0, %v1860
        %1862 = vdwg.mxu0
        %v1863 = vsel %vm1554, %v1833, -inf
        %1864 = vmax.xlane.f32.xlu0 %v1863
        %v1865 = vpop.xlane.xlu0 %1864
        %v1866 = vsel %vm1554, %v1861, -inf
        %1867 = vmax.xlane.f32.xlu0 %v1866
        %v1868 = vpop.xlane.xlu0 %1867
        %v1869 = vsub.f32 %v1833, %v1865
        %v1870 = vsub.f32 %v1861, %v1868
        %v1871 = vmul.f32 %v1869, 1.442695
        %v1872 = vpow.pop %v1871
        %v1873 = vmul.f32 %v1870, 1.442695
        %v1874 = vpow.pop %v1873
        %v1875 = vsel %vm1554, %v1872, 0.0
        %1876 = vadd.xlane.f32.xlu0 %v1875
        %v1877 = vpop.xlane.xlu0 %1876
        %v1878 = vsel %vm1554, %v1874, 0.0
        %1879 = vadd.xlane.f32.xlu0 %v1878
        %v1880 = vpop.xlane.xlu0 %1879
        %v1881 = vrcp.pop %v1877
        %v1882 = vrcp.pop %v1880
        %v1883 = vmul.f32 %v1872, %v1881
        %v1884 = vmul.f32 %v1874, %v1882
        %1885 = vrot.lane.b32.xlu0 %v1547, 112
        %v1886 = vpop.permute.xlu0 %1885
        %v1889 = vsel %vm1554, %v1883, 0
        %1891 = vmatpush.msra.mxu0 0.0
        %1892 = vmatpush.msra.mxu0 0.0
        %1893 = vmatpush.msra.mxu0 0.0
        %1894 = vmatpush.msra.mxu0 0.0
        %1895 = vmatpush.msra.mxu0 0.0
        %1896 = vmatpush.msra.mxu0 0.0
        %1897 = vmatpush.msra.mxu0 0.0
        %1898 = vmatpush.msra.mxu0 0.0
        %1899 = vmatpush.msra.mxu0 0.0
        %1900 = vmatpush.msra.mxu0 0.0
        %1901 = vmatpush.msra.mxu0 0.0
        %1902 = vmatpush.msra.mxu0 0.0
        %1903 = vmatpush.msra.mxu0 0.0
        %1904 = vmatpush.msra.mxu0 0.0
        %1905 = vmatpush.msra.mxu0 0.0
        %1906 = vmatpush.msra.mxu0 %v1886
        %1907 = vmatmul.f32.gmra.mxu0 %v1889
        %v1908 = vpop.f32.mrf.mxu0
        %v1909 = vadd.f32 0.0, %v1908
        %1910 = vdwg.mxu0
        %1911 = vrot.lane.b32.xlu0 %v1550, 112
        %v1912 = vpop.permute.xlu0 %1911
        %v1915 = vsel %vm1554, %v1884, 0
        %1917 = vmatpush.msra.mxu0 0.0
        %1918 = vmatpush.msra.mxu0 0.0
        %1919 = vmatpush.msra.mxu0 0.0
        %1920 = vmatpush.msra.mxu0 0.0
        %1921 = vmatpush.msra.mxu0 0.0
        %1922 = vmatpush.msra.mxu0 0.0
        %1923 = vmatpush.msra.mxu0 0.0
        %1924 = vmatpush.msra.mxu0 0.0
        %1925 = vmatpush.msra.mxu0 0.0
        %1926 = vmatpush.msra.mxu0 0.0
        %1927 = vmatpush.msra.mxu0 0.0
        %1928 = vmatpush.msra.mxu0 0.0
        %1929 = vmatpush.msra.mxu0 0.0
        %1930 = vmatpush.msra.mxu0 0.0
        %1931 = vmatpush.msra.mxu0 0.0
        %1932 = vmatpush.msra.mxu0 %v1912
        %1933 = vmatmul.f32.gmra.mxu0 %v1915
        %v1934 = vpop.f32.mrf.mxu0
        %v1935 = vadd.f32 0.0, %v1934
        %1936 = vdwg.mxu0
        %1937 = vrot.lane.b32.xlu0 %v1552, 104
        %v1938 = vpop.permute.xlu0 %1937
        %1939 = vrot.lane.b32.xlu0 %v1516, 104
        %v1940 = vpop.permute.xlu0 %1939
        %v1941 = vsel %vm1554, %v1938, 0
        %v1943 = vsel %vm1554, %v1940, 0
        %1945 = vmatpush.xpose.msra.mxu0 0.0
        %1946 = vmatpush.xpose.msra.mxu0 0.0
        %1947 = vmatpush.xpose.msra.mxu0 0.0
        %1948 = vmatpush.xpose.msra.mxu0 0.0
        %1949 = vmatpush.xpose.msra.mxu0 0.0
        %1950 = vmatpush.xpose.msra.mxu0 0.0
        %1951 = vmatpush.xpose.msra.mxu0 0.0
        %1952 = vmatpush.xpose.msra.mxu0 0.0
        %1953 = vmatpush.xpose.msra.mxu0 0.0
        %1954 = vmatpush.xpose.msra.mxu0 0.0
        %1955 = vmatpush.xpose.msra.mxu0 0.0
        %1956 = vmatpush.xpose.msra.mxu0 0.0
        %1957 = vmatpush.xpose.msra.mxu0 0.0
        %1958 = vmatpush.xpose.msra.mxu0 0.0
        %1959 = vmatpush.xpose.msra.mxu0 0.0
        %1960 = vmatpush.xpose.msra.mxu0 %v1943
        %1961 = vmatmul.f32.gmra.mxu0 %v1941
        %v1962 = vpop.f32.mrf.mxu0
        %v1963 = vadd.f32 0.0, %v1962
        %1964 = vdwg.mxu0
        %1965 = vrot.lane.b32.xlu0 %v1553, 104
        %v1966 = vpop.permute.xlu0 %1965
        %1967 = vrot.lane.b32.xlu0 %v1519, 104
        %v1968 = vpop.permute.xlu0 %1967
        %v1969 = vsel %vm1554, %v1966, 0
        %v1971 = vsel %vm1554, %v1968, 0
        %1973 = vmatpush.xpose.msra.mxu0 0.0
        %1974 = vmatpush.xpose.msra.mxu0 0.0
        %1975 = vmatpush.xpose.msra.mxu0 0.0
        %1976 = vmatpush.xpose.msra.mxu0 0.0
        %1977 = vmatpush.xpose.msra.mxu0 0.0
        %1978 = vmatpush.xpose.msra.mxu0 0.0
        %1979 = vmatpush.xpose.msra.mxu0 0.0
        %1980 = vmatpush.xpose.msra.mxu0 0.0
        %1981 = vmatpush.xpose.msra.mxu0 0.0
        %1982 = vmatpush.xpose.msra.mxu0 0.0
        %1983 = vmatpush.xpose.msra.mxu0 0.0
        %1984 = vmatpush.xpose.msra.mxu0 0.0
        %1985 = vmatpush.xpose.msra.mxu0 0.0
        %1986 = vmatpush.xpose.msra.mxu0 0.0
        %1987 = vmatpush.xpose.msra.mxu0 0.0
        %1988 = vmatpush.xpose.msra.mxu0 %v1971
        %1989 = vmatmul.f32.gmra.mxu0 %v1969
        %v1990 = vpop.f32.mrf.mxu0
        %v1991 = vadd.f32 0.0, %v1990
        %1992 = vdwg.mxu0
        %v1993 = vsel %vm1554, %v1963, -inf
        %1994 = vmax.xlane.f32.xlu0 %v1993
        %v1995 = vpop.xlane.xlu0 %1994
        %v1996 = vsel %vm1554, %v1991, -inf
        %1997 = vmax.xlane.f32.xlu0 %v1996
        %v1998 = vpop.xlane.xlu0 %1997
        %v1999 = vsub.f32 %v1963, %v1995
        %v2000 = vsub.f32 %v1991, %v1998
        %v2001 = vmul.f32 %v1999, 1.442695
        %v2002 = vpow.pop %v2001
        %v2003 = vmul.f32 %v2000, 1.442695
        %v2004 = vpow.pop %v2003
        %v2005 = vsel %vm1554, %v2002, 0.0
        %2006 = vadd.xlane.f32.xlu0 %v2005
        %v2007 = vpop.xlane.xlu0 %2006
        %v2008 = vsel %vm1554, %v2004, 0.0
        %2009 = vadd.xlane.f32.xlu0 %v2008
        %v2010 = vpop.xlane.xlu0 %2009
        %v2011 = vrcp.pop %v2007
        %v2012 = vrcp.pop %v2010
        %v2013 = vmul.f32 %v2002, %v2011
        %v2014 = vmul.f32 %v2004, %v2012
        %2015 = vrot.lane.b32.xlu0 %v1547, 104
        %v2016 = vpop.permute.xlu0 %2015
        %v2019 = vsel %vm1554, %v2013, 0
        %2021 = vmatpush.msra.mxu0 0.0
        %2022 = vmatpush.msra.mxu0 0.0
        %2023 = vmatpush.msra.mxu0 0.0
        %2024 = vmatpush.msra.mxu0 0.0
        %2025 = vmatpush.msra.mxu0 0.0
        %2026 = vmatpush.msra.mxu0 0.0
        %2027 = vmatpush.msra.mxu0 0.0
        %2028 = vmatpush.msra.mxu0 0.0
        %2029 = vmatpush.msra.mxu0 0.0
        %2030 = vmatpush.msra.mxu0 0.0
        %2031 = vmatpush.msra.mxu0 0.0
        %2032 = vmatpush.msra.mxu0 0.0
        %2033 = vmatpush.msra.mxu0 0.0
        %2034 = vmatpush.msra.mxu0 0.0
        %2035 = vmatpush.msra.mxu0 0.0
        %2036 = vmatpush.msra.mxu0 %v2016
        %2037 = vmatmul.f32.gmra.mxu0 %v2019
        %v2038 = vpop.f32.mrf.mxu0
        %v2039 = vadd.f32 0.0, %v2038
        %2040 = vdwg.mxu0
        %2041 = vrot.lane.b32.xlu0 %v1550, 104
        %v2042 = vpop.permute.xlu0 %2041
        %v2045 = vsel %vm1554, %v2014, 0
        %2047 = vmatpush.msra.mxu0 0.0
        %2048 = vmatpush.msra.mxu0 0.0
        %2049 = vmatpush.msra.mxu0 0.0
        %2050 = vmatpush.msra.mxu0 0.0
        %2051 = vmatpush.msra.mxu0 0.0
        %2052 = vmatpush.msra.mxu0 0.0
        %2053 = vmatpush.msra.mxu0 0.0
        %2054 = vmatpush.msra.mxu0 0.0
        %2055 = vmatpush.msra.mxu0 0.0
        %2056 = vmatpush.msra.mxu0 0.0
        %2057 = vmatpush.msra.mxu0 0.0
        %2058 = vmatpush.msra.mxu0 0.0
        %2059 = vmatpush.msra.mxu0 0.0
        %2060 = vmatpush.msra.mxu0 0.0
        %2061 = vmatpush.msra.mxu0 0.0
        %2062 = vmatpush.msra.mxu0 %v2042
        %2063 = vmatmul.f32.gmra.mxu0 %v2045
        %v2064 = vpop.f32.mrf.mxu0
        %v2065 = vadd.f32 0.0, %v2064
        %2066 = vdwg.mxu0
        %2069 = vrot.lane.b32.xlu0 %v1778, 8
        %v2070 = vpop.permute.xlu0 %2069
        %2071 = vrot.lane.b32.xlu0 %v1805, 8
        %v2072 = vpop.permute.xlu0 %2071
        %2077 = vrot.lane.b32.xlu0 %v1909, 16
        %v2078 = vpop.permute.xlu0 %2077
        %2079 = vrot.lane.b32.xlu0 %v1935, 16
        %v2080 = vpop.permute.xlu0 %2079
        %2085 = vrot.lane.b32.xlu0 %v2039, 24
        %v2086 = vpop.permute.xlu0 %2085
        %2087 = vrot.lane.b32.xlu0 %v2065, 24
        %v2088 = vpop.permute.xlu0 %2087
        %v2091 = vsel %vm1554, %v1650, %v2070
        %v2092 = vsel %vm1554, %v1673, %v2072
        %vm2093 = vcmask 130048
        %v2094 = vsel %vm2093, %v2091, %v2078
        %v2095 = vsel %vm2093, %v2092, %v2080
        %vm2096 = vcmask 195584
        %v2097 = vsel %vm2096, %v2094, %v2086
        %v2098 = vsel %vm2096, %v2095, %v2088
        %v2099 = vld [vmem:[%s1123] sm:$0xff]
        %v2100 = vld [vmem:[%s1123 + $0x8] sm:$0xff]
        %v2101 = vld [vmem:[%s1123 + $0x10] sm:$0xff]
        %v2102 = vld [vmem:[%s1123 + $0x18] sm:$0xff]
        %v2103 = vld [vmem:[%s1365] sm:$0x1]
        %v2105 = vperm.slane %v2103, 0
        %v2108 = vsel %vm1391, %v2097, 0
        %v2111 = vsel %vm1391, %v2098, 0
        %2113 = vmatpush.msra.mxu0 0.0
        %2114 = vmatpush.msra.mxu0 0.0
        %2115 = vmatpush.msra.mxu0 0.0
        %2116 = vmatpush.msra.mxu0 0.0
        %2117 = vmatpush.msra.mxu0 0.0
        %2118 = vmatpush.msra.mxu0 0.0
        %2119 = vmatpush.msra.mxu0 0.0
        %2120 = vmatpush.msra.mxu0 0.0
        %2121 = vmatpush.msra.mxu0 0.0
        %2122 = vmatpush.msra.mxu0 0.0
        %2123 = vmatpush.msra.mxu0 0.0
        %2124 = vmatpush.msra.mxu0 0.0
        %2125 = vmatpush.msra.mxu0 %v2102
        %2126 = vmatpush.msra.mxu0 %v2101
        %2127 = vmatpush.msra.mxu0 %v2100
        %2128 = vmatpush.msra.mxu0 %v2099
        %2129 = vmatmul.f32.gmra.mxu0 %v2108
        %v2130 = vpop.f32.mrf.mxu0
        %v2131 = vadd.f32 %v2105, %v2130
        %2132 = vmatmul.f32.gmra.mxu0 %v2111
        %v2133 = vpop.f32.mrf.mxu0
        %v2134 = vadd.f32 %v2105, %v2133
        %2135 = vdwg.mxu0
        %v2136 = vld [vmem:[%s1133] sm:$0xff]
        %v2137 = vld [vmem:[%s1133 + $0x8] sm:$0xff]
        %v2138 = vld [vmem:[%s1133 + $0x10] sm:$0xff]
        %v2139 = vld [vmem:[%s1133 + $0x18] sm:$0xff]
        %v2140 = vld [vmem:[%s1143] sm:$0xff]
        %v2141 = vld [vmem:[%s1143 + $0x8] sm:$0xff]
        %v2142 = vld [vmem:[%s1143 + $0x10] sm:$0xff]
        %v2143 = vld [vmem:[%s1143 + $0x18] sm:$0xff]
        %v2145 = vsel %vm1391, %v2131, 0
        %v2148 = vsel %vm1391, %v2134, 0
        %2150 = vmatpush.msra.mxu0 0.0
        %2151 = vmatpush.msra.mxu0 0.0
        %2152 = vmatpush.msra.mxu0 0.0
        %2153 = vmatpush.msra.mxu0 0.0
        %2154 = vmatpush.msra.mxu0 0.0
        %2155 = vmatpush.msra.mxu0 0.0
        %2156 = vmatpush.msra.mxu0 0.0
        %2157 = vmatpush.msra.mxu0 0.0
        %2158 = vmatpush.msra.mxu0 0.0
        %2159 = vmatpush.msra.mxu0 0.0
        %2160 = vmatpush.msra.mxu0 0.0
        %2161 = vmatpush.msra.mxu0 0.0
        %2162 = vmatpush.msra.mxu0 %v2143
        %2163 = vmatpush.msra.mxu0 %v2142
        %2164 = vmatpush.msra.mxu0 %v2141
        %2165 = vmatpush.msra.mxu0 %v2140
        %2166 = vmatmul.f32.gmra.mxu0 %v2145
        %v2167 = vpop.f32.mrf.mxu0
        %v2168 = vadd.f32 0.0, %v2167
        %2169 = vmatmul.f32.gmra.mxu0 %v2148
        %v2170 = vpop.f32.mrf.mxu0
        %v2171 = vadd.f32 0.0, %v2170
        %2172 = vdwg.mxu0
        %2173 = vmatpush.msra.mxu0 0.0
        %2174 = vmatpush.msra.mxu0 0.0
        %2175 = vmatpush.msra.mxu0 0.0
        %2176 = vmatpush.msra.mxu0 0.0
        %2177 = vmatpush.msra.mxu0 0.0
        %2178 = vmatpush.msra.mxu0 0.0
        %2179 = vmatpush.msra.mxu0 0.0
        %2180 = vmatpush.msra.mxu0 0.0
        %2181 = vmatpush.msra.mxu0 0.0
        %2182 = vmatpush.msra.mxu0 0.0
        %2183 = vmatpush.msra.mxu0 0.0
        %2184 = vmatpush.msra.mxu0 0.0
        %2185 = vmatpush.msra.mxu0 %v2139
        %2186 = vmatpush.msra.mxu0 %v2138
        %2187 = vmatpush.msra.mxu0 %v2137
        %2188 = vmatpush.msra.mxu0 %v2136
        %2189 = vmatmul.f32.gmra.mxu0 %v1462
        %v2190 = vpop.f32.mrf.mxu0
        %v2191 = vadd.f32 %v2168, %v2190
        %2192 = vmatmul.f32.gmra.mxu0 %v1465
        %v2193 = vpop.f32.mrf.mxu0
        %v2194 = vadd.f32 %v2171, %v2193
        %2195 = vdwg.mxu0
        %v2196 = vld [vmem:[%s1368] sm:$0x1]
        %v2198 = vperm.slane %v2196, 0
        %v2200 = vadd.f32 %v2191, %v2198
        %v2201 = vadd.f32 %v2194, %v2198
        %v2202 = vxor.u32 %v2200, 2147483648
        %v2203 = vxor.u32 %v2201, 2147483648
        %v2204 = vmul.f32 %v2202, 1.442695
        %v2205 = vpow.pop %v2204
        %v2206 = vmul.f32 %v2203, 1.442695
        %v2207 = vpow.pop %v2206
        %v2208 = vadd.f32 %v2205, 1.0
        %v2209 = vadd.f32 %v2207, 1.0
        %v2210 = vrcp.pop %v2208
        %v2211 = vmul.f32 %v2208, %v2210
        %v2212 = vsub.f32 1.0, %v2211
        %v2213 = vmul.f32 %v2210, %v2212
        %v2214 = vadd.f32 %v2210, %v2213
        %vm2215 = vweird.f32 %v2208
        %vm2216 = vweird.f32 %v2210
        %vm2217 = vmor %vm2215, %vm2216
        %v2218 = vsel %vm2217, %v2210, %v2214
        %v2219 = vand.u32 2147483647, %v2208
        %vm2220 = vcmp.eq.f32.partialorder %v2219, 8.507059e+37
        %v2221 = vand.u32 %v2208, 2147483648
        %v2222 = vor.u32 1.1754944e-38, %v2221
        %v2223 = vsel %vm2220, %v2222, %v2218
        %v2224 = vmul.f32 1.0, %v2223
        %v2225 = vrcp.pop %v2209
        %v2226 = vmul.f32 %v2209, %v2225
        %v2227 = vsub.f32 1.0, %v2226
        %v2228 = vmul.f32 %v2225, %v2227
        %v2229 = vadd.f32 %v2225, %v2228
        %vm2230 = vweird.f32 %v2209
        %vm2231 = vweird.f32 %v2225
        %vm2232 = vmor %vm2230, %vm2231
        %v2233 = vsel %vm2232, %v2225, %v2229
        %v2234 = vand.u32 2147483647, %v2209
        %vm2235 = vcmp.eq.f32.partialorder %v2234, 8.507059e+37
        %v2236 = vand.u32 %v2209, 2147483648
        %v2237 = vor.u32 1.1754944e-38, %v2236
        %v2238 = vsel %vm2235, %v2237, %v2233
        %v2239 = vmul.f32 1.0, %v2238
        %v2240 = vmul.f32 %v2224, %v2131
        %v2241 = vmul.f32 %v2239, %v2134
        %v2242 = vadd.f32 %v1451, %v2240
        %v2243 = vadd.f32 %v1452, %v2241
        %v2244 = vld [vmem:[%s1152] sm:$0x1]
        %v2245 = vld [vmem:[%s1161] sm:$0x1]
        %v2246 = vsel %vm1391, %v2242, 0.0
        %2247 = vadd.xlane.f32.xlu0 %v2246
        %v2248 = vpop.xlane.xlu0 %2247
        %v2249 = vsel %vm1391, %v2243, 0.0
        %2250 = vadd.xlane.f32.xlu0 %v2249
        %v2251 = vpop.xlane.xlu0 %2250
        %v2252 = vmul.f32 %v2248, %v1404
        %v2253 = vmul.f32 %v2251, %v1404
        %v2254 = vsub.f32 %v2242, %v2252
        %v2255 = vsub.f32 %v2243, %v2253
        %v2256 = vmul.f32 %v2254, %v2254
        %v2257 = vmul.f32 %v2255, %v2255
        %v2258 = vsel %vm1391, %v2256, 0.0
        %2259 = vadd.xlane.f32.xlu0 %v2258
        %v2260 = vpop.xlane.xlu0 %2259
        %v2261 = vsel %vm1391, %v2257, 0.0
        %2262 = vadd.xlane.f32.xlu0 %v2261
        %v2263 = vpop.xlane.xlu0 %2262
        %v2264 = vmul.f32 %v2260, %v1404
        %v2265 = vmul.f32 %v2263, %v1404
        %v2266 = vadd.f32 %v2264, 1e-05
        %v2267 = vadd.f32 %v2265, 1e-05
        %v2268 = vrsqrt.pop %v2266
        %v2269 = vmul.f32 %v2268, %v2266
        %v2270 = vmul.f32 %v2269, %v2268
        %v2271 = vmul.f32 0.5, %v2270
        %v2272 = vsub.f32 1.5, %v2271
        %v2273 = vmul.f32 %v2268, %v2272
        %vm2274 = vweird.f32 %v2266
        %vm2275 = vweird.f32 %v2268
        %vm2276 = vmor %vm2274, %vm2275
        %v2277 = vsel %vm2276, %v2268, %v2273
        %v2278 = vrsqrt.pop %v2267
        %v2279 = vmul.f32 %v2278, %v2267
        %v2280 = vmul.f32 %v2279, %v2278
        %v2281 = vmul.f32 0.5, %v2280
        %v2282 = vsub.f32 1.5, %v2281
        %v2283 = vmul.f32 %v2278, %v2282
        %vm2284 = vweird.f32 %v2267
        %vm2285 = vweird.f32 %v2278
        %vm2286 = vmor %vm2284, %vm2285
        %v2287 = vsel %vm2286, %v2278, %v2283
        %v2288 = vmul.f32 %v2254, %v2277
        %v2289 = vmul.f32 %v2255, %v2287
        %v2291 = vperm.slane %v2244, 0
        %v2293 = vmul.f32 %v2288, %v2291
        %v2294 = vmul.f32 %v2289, %v2291
        %v2296 = vperm.slane %v2245, 0
        %v2298 = vadd.f32 %v2293, %v2296
        %v2299 = vadd.f32 %v2294, %v2296
        %v2300 = vadd.f32 %v1387, %v2298
        %v2301 = vadd.f32 %v1388, %v2299
        %v2302 = vld [vmem:[%s1170] sm:$0x1]
        %v2303 = vld [vmem:[%s1179] sm:$0x1]
        %v2304 = vsel %vm1391, %v2300, 0.0
        %2305 = vadd.xlane.f32.xlu0 %v2304
        %v2306 = vpop.xlane.xlu0 %2305
        %v2307 = vsel %vm1391, %v2301, 0.0
        %2308 = vadd.xlane.f32.xlu0 %v2307
        %v2309 = vpop.xlane.xlu0 %2308
        %v2310 = vmul.f32 %v2306, %v1404
        %v2311 = vmul.f32 %v2309, %v1404
        %v2312 = vsub.f32 %v2300, %v2310
        %v2313 = vsub.f32 %v2301, %v2311
        %v2314 = vmul.f32 %v2312, %v2312
        %v2315 = vmul.f32 %v2313, %v2313
        %v2316 = vsel %vm1391, %v2314, 0.0
        %2317 = vadd.xlane.f32.xlu0 %v2316
        %v2318 = vpop.xlane.xlu0 %2317
        %v2319 = vsel %vm1391, %v2315, 0.0
        %2320 = vadd.xlane.f32.xlu0 %v2319
        %v2321 = vpop.xlane.xlu0 %2320
        %v2322 = vmul.f32 %v2318, %v1404
        %v2323 = vmul.f32 %v2321, %v1404
        %v2324 = vadd.f32 %v2322, 1e-05
        %v2325 = vadd.f32 %v2323, 1e-05
        %v2326 = vrsqrt.pop %v2324
        %v2327 = vmul.f32 %v2326, %v2324
        %v2328 = vmul.f32 %v2327, %v2326
        %v2329 = vmul.f32 0.5, %v2328
        %v2330 = vsub.f32 1.5, %v2329
        %v2331 = vmul.f32 %v2326, %v2330
        %vm2332 = vweird.f32 %v2324
        %vm2333 = vweird.f32 %v2326
        %vm2334 = vmor %vm2332, %vm2333
        %v2335 = vsel %vm2334, %v2326, %v2331
        %v2336 = vrsqrt.pop %v2325
        %v2337 = vmul.f32 %v2336, %v2325
        %v2338 = vmul.f32 %v2337, %v2336
        %v2339 = vmul.f32 0.5, %v2338
        %v2340 = vsub.f32 1.5, %v2339
        %v2341 = vmul.f32 %v2336, %v2340
        %vm2342 = vweird.f32 %v2325
        %vm2343 = vweird.f32 %v2336
        %vm2344 = vmor %vm2342, %vm2343
        %v2345 = vsel %vm2344, %v2336, %v2341
        %v2346 = vmul.f32 %v2312, %v2335
        %v2347 = vmul.f32 %v2313, %v2345
        %v2349 = vperm.slane %v2302, 0
        %v2351 = vmul.f32 %v2346, %v2349
        %v2352 = vmul.f32 %v2347, %v2349
        %v2354 = vperm.slane %v2303, 0
        %v2356 = vadd.f32 %v2351, %v2354
        %v2357 = vadd.f32 %v2352, %v2354
        %v2358 = vld [vmem:[%s1189] sm:$0xff]
        %v2359 = vld [vmem:[%s1189 + $0x8] sm:$0xff]
        %v2360 = vld [vmem:[%s1189 + $0x10] sm:$0xff]
        %v2361 = vld [vmem:[%s1189 + $0x18] sm:$0xff]
        %v2362 = vld [vmem:[%s1371] sm:$0x1]
        %v2364 = vperm.slane %v2362, 0
        %v2367 = vsel %vm1391, %v2356, 0
        %v2370 = vsel %vm1391, %v2357, 0
        %2372 = vmatpush.msra.mxu0 0.0
        %2373 = vmatpush.msra.mxu0 0.0
        %2374 = vmatpush.msra.mxu0 0.0
        %2375 = vmatpush.msra.mxu0 0.0
        %2376 = vmatpush.msra.mxu0 0.0
        %2377 = vmatpush.msra.mxu0 0.0
        %2378 = vmatpush.msra.mxu0 0.0
        %2379 = vmatpush.msra.mxu0 0.0
        %2380 = vmatpush.msra.mxu0 0.0
        %2381 = vmatpush.msra.mxu0 0.0
        %2382 = vmatpush.msra.mxu0 0.0
        %2383 = vmatpush.msra.mxu0 0.0
        %2384 = vmatpush.msra.mxu0 %v2361
        %2385 = vmatpush.msra.mxu0 %v2360
        %2386 = vmatpush.msra.mxu0 %v2359
        %2387 = vmatpush.msra.mxu0 %v2358
        %2388 = vmatmul.f32.gmra.mxu0 %v2367
        %v2389 = vpop.f32.mrf.mxu0
        %v2390 = vadd.f32 %v2364, %v2389
        %2391 = vmatmul.f32.gmra.mxu0 %v2370
        %v2392 = vpop.f32.mrf.mxu0
        %v2393 = vadd.f32 %v2364, %v2392
        %2394 = vdwg.mxu0
        %v2395 = vmul.f32 %v2390, %v2390
        %v2396 = vmul.f32 %v2393, %v2393
        %v2397 = vmul.f32 %v2390, %v2395
        %v2398 = vmul.f32 %v2393, %v2396
        %v2399 = vmul.f32 %v2397, 0.044715
        %v2400 = vmul.f32 %v2398, 0.044715
        %v2401 = vadd.f32 %v2390, %v2399
        %v2402 = vadd.f32 %v2393, %v2400
        %v2403 = vmul.f32 %v2401, 0.7978846
        %v2404 = vmul.f32 %v2402, 0.7978846
        %v2405 = vtanh.pop %v2403
        %v2406 = vtanh.pop %v2404
        %v2407 = vadd.f32 %v2405, 1.0
        %v2408 = vadd.f32 %v2406, 1.0
        %v2409 = vmul.f32 %v2407, 0.5
        %v2410 = vmul.f32 %v2408, 0.5
        %v2411 = vmul.f32 %v2390, %v2409
        %v2412 = vmul.f32 %v2393, %v2410
        %v2413 = vld [vmem:[%s1376] sm:$0xff]
        %v2414 = vld [vmem:[%s1376 + $0x8] sm:$0xff]
        %v2415 = vld [vmem:[%s1376 + $0x10] sm:$0xff]
        %v2416 = vld [vmem:[%s1376 + $0x18] sm:$0xff]
        %v2417 = vld [vmem:[%s1376 + $0x20] sm:$0xff]
        %v2418 = vld [vmem:[%s1376 + $0x28] sm:$0xff]
        %v2419 = vld [vmem:[%s1376 + $0x30] sm:$0xff]
        %v2420 = vld [vmem:[%s1376 + $0x38] sm:$0xff]
        %v2421 = vld [vmem:[%s1198] sm:$0x1]
        %v2423 = vperm.slane %v2421, 0
        %vm2425 = vcmask 523264
        %v2427 = vsel %vm2425, %v2411, 0
        %v2430 = vsel %vm2425, %v2412, 0
        %2432 = vmatpush.msra.mxu0 0.0
        %2433 = vmatpush.msra.mxu0 0.0
        %2434 = vmatpush.msra.mxu0 0.0
        %2435 = vmatpush.msra.mxu0 0.0
        %2436 = vmatpush.msra.mxu0 0.0
        %2437 = vmatpush.msra.mxu0 0.0
        %2438 = vmatpush.msra.mxu0 0.0
        %2439 = vmatpush.msra.mxu0 0.0
        %2440 = vmatpush.msra.mxu0 %v2420
        %2441 = vmatpush.msra.mxu0 %v2419
        %2442 = vmatpush.msra.mxu0 %v2418
        %2443 = vmatpush.msra.mxu0 %v2417
        %2444 = vmatpush.msra.mxu0 %v2416
        %2445 = vmatpush.msra.mxu0 %v2415
        %2446 = vmatpush.msra.mxu0 %v2414
        %2447 = vmatpush.msra.mxu0 %v2413
        %2448 = vmatmul.f32.gmra.mxu0 %v2427
        %v2449 = vpop.f32.mrf.mxu0
        %v2450 = vadd.f32 %v2423, %v2449
        %2451 = vmatmul.f32.gmra.mxu0 %v2430
        %v2452 = vpop.f32.mrf.mxu0
        %v2453 = vadd.f32 %v2423, %v2452
        %2454 = vdwg.mxu0
        %v2455 = vadd.f32 %v2300, %v2450
        %v2456 = vadd.f32 %v2301, %v2453
        %2457 = vst.msk [vmem:[#allocation2] sm:$0xff] %vm1391, %v2455
        %2458 = vst.msk [vmem:[#allocation2 + $0x8] sm:$0xff] %vm1391, %v2456
        %p2459 = scmp.eq.s32.totalorder %s66, 3
        // Predicated region
        $region181: #{tpu_custom_call.1} parent=119 // pred_check
          %p2460 = pneg %p2459
        $region182: #{tpu_custom_call.1} parent=119 // pred_check_branch
          %2462 = sbr.rel (%p2460) target = $region184
        $region183: #{tpu_custom_call.1} parent=119 // pred_region
          %v2463 = vld [vmem:[#allocation2] sm:$0xff]
          %v2464 = vld [vmem:[#allocation2 + $0x8] sm:$0xff]
          %v2465 = vsel %vm1391, %v2463, 0.0
          %v2466 = vrot.slane %v2465, 4
          %v2467 = vadd.f32 %v2465, %v2466
          %v2468 = vrot.slane %v2467, 2
          %v2469 = vadd.f32 %v2467, %v2468
          %v2470 = vrot.slane %v2469, 1
          %v2471 = vadd.f32 %v2469, %v2470
          %v2472 = vsel %vm1391, %v2464, 0.0
          %v2473 = vrot.slane %v2472, 4
          %v2474 = vadd.f32 %v2472, %v2473
          %v2475 = vrot.slane %v2474, 2
          %v2476 = vadd.f32 %v2474, %v2475
          %v2477 = vrot.slane %v2476, 1
          %v2478 = vadd.f32 %v2476, %v2477
          %v2479 = vrcp.pop 8.0
          %v2480 = vmul.f32 8.0, %v2479
          %v2481 = vsub.f32 1.0, %v2480
          %v2482 = vmul.f32 %v2479, %v2481
          %v2483 = vadd.f32 %v2479, %v2482
          %vm2484 = vweird.f32 %v2479
          %v2485 = vsel %vm2484, %v2479, %v2483
          %v2486 = vmul.f32 %v2471, %v2485
          %v2487 = vmul.f32 %v2478, %v2485
          %v2488 = vld [vmem:[%s22] sm:$0x1]
          %v2489 = vmul.f32 %v2486, %v2488
          %v2490 = vmul.f32 %v2487, %v2488
          %vm2491 = vcmask 253952
          %v2492 = vsel %vm2491, %v2489, 0.0
          %2493 = vadd.xlane.f32.xlu0 %v2492
          %v2494 = vpop.xlane.xlu0 %2493
          %v2495 = vsel %vm2491, %v2490, 0.0
          %2496 = vadd.xlane.f32.xlu0 %v2495
          %v2497 = vpop.xlane.xlu0 %2496
          %v2498 = vld [vmem:[#allocation3] sm:$0x1]
          %v2499 = vadd.f32 %v2494, %v2498
          %v2500 = vadd.f32 %v2497, %v2498
          %v2501 = vxor.u32 %v2499, 2147483648
          %v2502 = vxor.u32 %v2500, 2147483648
          %v2503 = vmul.f32 %v2501, 1.442695
          %v2504 = vpow.pop %v2503
          %v2505 = vmul.f32 %v2502, 1.442695
          %v2506 = vpow.pop %v2505
          %v2507 = vadd.f32 %v2504, 1.0
          %v2508 = vadd.f32 %v2506, 1.0
          %v2509 = vrcp.pop %v2507
          %v2510 = vmul.f32 %v2507, %v2509
          %v2511 = vsub.f32 1.0, %v2510
          %v2512 = vmul.f32 %v2509, %v2511
          %v2513 = vadd.f32 %v2509, %v2512
          %vm2514 = vweird.f32 %v2507
          %vm2515 = vweird.f32 %v2509
          %vm2516 = vmor %vm2514, %vm2515
          %v2517 = vsel %vm2516, %v2509, %v2513
          %v2518 = vand.u32 2147483647, %v2507
          %vm2519 = vcmp.eq.f32.partialorder %v2518, 8.507059e+37
          %v2520 = vand.u32 %v2507, 2147483648
          %v2521 = vor.u32 1.1754944e-38, %v2520
          %v2522 = vsel %vm2519, %v2521, %v2517
          %v2523 = vmul.f32 1.0, %v2522
          %v2524 = vrcp.pop %v2508
          %v2525 = vmul.f32 %v2508, %v2524
          %v2526 = vsub.f32 1.0, %v2525
          %v2527 = vmul.f32 %v2524, %v2526
          %v2528 = vadd.f32 %v2524, %v2527
          %vm2529 = vweird.f32 %v2508
          %vm2530 = vweird.f32 %v2524
          %vm2531 = vmor %vm2529, %vm2530
          %v2532 = vsel %vm2531, %v2524, %v2528
          %v2533 = vand.u32 2147483647, %v2508
          %vm2534 = vcmp.eq.f32.partialorder %v2533, 8.507059e+37
          %v2535 = vand.u32 %v2508, 2147483648
          %v2536 = vor.u32 1.1754944e-38, %v2535
          %v2537 = vsel %vm2534, %v2536, %v2532
          %v2538 = vmul.f32 1.0, %v2537
          %s2540 = vtos %v2523
          %v2541 = vstv %s2540
          %s2544 = vtos %v2538
          %v2545 = vstv %s2544
          %v2547 = vmul.f32 %v2541, %v2463
          %v2548 = vmul.f32 %v2545, %v2464
          %v2549 = vsub.f32 1.0, %v2523
          %v2550 = vsub.f32 1.0, %v2538
          %v2551 = vld [vmem:[#allocation4] sm:$0xff]
          %v2552 = vld [vmem:[#allocation4 + $0x8] sm:$0xff]
          %s2554 = vtos %v2549
          %v2555 = vstv %s2554
          %s2558 = vtos %v2550
          %v2559 = vstv %s2558
          %v2561 = vmul.f32 %v2555, %v2551
          %v2562 = vmul.f32 %v2559, %v2552
          %v2563 = vadd.f32 %v2547, %v2561
          %v2564 = vadd.f32 %v2548, %v2562
          %v2565 = vld [vmem:[%s24] sm:$0x1]
          %v2567 = vperm.slane %v2565, 0
          %v2569 = vadd.f32 %v2563, %v2567
          %v2570 = vadd.f32 %v2564, %v2567
          %2571 = vst.msk [vmem:[#allocation27] sm:$0xff] %vm1391, %v2569
          %2572 = vst.msk [vmem:[#allocation27 + $0x8] sm:$0xff] %vm1391, %v2570
        $region184: #{tpu_custom_call.1} parent=119 // pred_fallthru
          _
        // Predicated region
        $region185: #{tpu_custom_call.1} parent=119 // pred_check
          %p2573 = pneg %p726
        $region186: #{tpu_custom_call.1} parent=119 // pred_check_branch
          %2575 = sbr.rel (%p2573) target = $region188
        $region187: #{tpu_custom_call.1} parent=119 // pred_region
          %s2576 = smul.u32 2, %s65
          %2578 = vsyncadd [#allocation6], 0
          %s2579 = smul.addr %s2576, 8
          %s2580 = scalar_lea.hbm %s25, %s2579
          %s2581 = sshll.u32 [#allocation27], 4
          %s2582 = int_to_ptr.vmem [resolvable:$true] %s2581
          %s2583 = sshll.u32 %s2580, 4
          %s2584 = int_to_ptr.hbm [resolvable:$true] %s2583
          %2589 = dma.vmem_to_hbm [thread:$0]  %s2582, 256, %s2584, [#allocation6], 128, 128, 8
        $region188: #{tpu_custom_call.1} parent=119 // pred_fallthru
          _
        // Predicated region
        $region189: #{tpu_custom_call.1} parent=119 // pred_check
          %p2590 = pneg %p726
        $region190: #{tpu_custom_call.1} parent=119 // pred_check_branch
          %2592 = sbr.rel (%p2590) target = $region192
        $region191: #{tpu_custom_call.1} parent=119 // pred_region
          %2594 = dma.done [#allocation6], 256
        $region192: #{tpu_custom_call.1} parent=119 // pred_fallthru
          _
      $region120: #{tpu_custom_call.1} parent=5 // pred_fallthru
        _
      %p2595 = scmp.le.s32.totalorder 2, %s56
      // Predicated region
      $region193: #{tpu_custom_call.1} parent=5 // pred_check
        %p2596 = pneg %p2595
      $region194: #{tpu_custom_call.1} parent=5 // pred_check_branch
        %2598 = sbr.rel (%p2596) target = $region196
      $region195: #{tpu_custom_call.1} parent=5 // pred_region
        %s2599 = ssub.s32 %s56, 2
      $region196: #{tpu_custom_call.1} parent=5 // pred_fallthru
        _
    $region6: #{tpu_custom_call.1} parent=1 // loop_footer
      %s60 = sadd.s32 1, %s56
    $region7: #{tpu_custom_call.1} parent=1 // loop_footer_branch
      %55 = sbr.rel target = $region3
    $region8: #{tpu_custom_call.1} parent=1 // loop_exit
      _
    %2600 = vsyncpa [#allocation5], 1
    %s2601 = scalar_lea.sflag [#allocation5], 1
    %2602 = vsyncpa %s2601, 1
    %2603 = vsyncpa [#allocation8], 1
    %s2604 = scalar_lea.sflag [#allocation8], 1
    %2605 = vsyncpa %s2604, 1
    %2606 = vsyncpa [#allocation11], 1
    %s2607 = scalar_lea.sflag [#allocation11], 1
    %2608 = vsyncpa %s2607, 1
    %2609 = vsyncpa [#allocation14], 1
    %s2610 = scalar_lea.sflag [#allocation14], 1
    %2611 = vsyncpa %s2610, 1
    %2612 = vsyncpa [#allocation17], 1
    %s2613 = scalar_lea.sflag [#allocation17], 1
    %2614 = vsyncpa %s2613, 1
    %2615 = vsyncpa [#allocation20], 1
    %s2616 = scalar_lea.sflag [#allocation20], 1
    %2617 = vsyncpa %s2616, 1
    %2618 = vsyncpa [#allocation23], 1
    %s2619 = scalar_lea.sflag [#allocation23], 1
    %2620 = vsyncpa %s2619, 1
    %2621 = vsyncpa [#allocation26], 1
    %s2622 = scalar_lea.sflag [#allocation26], 1
    %2623 = vsyncpa %s2622, 1
    %2624 = vsyncpa [#allocation6], 1
    %s2625 = scalar_lea.sflag [#allocation6], 1
    %2626 = vsyncpa %s2625, 1

</llo_original>
